<compile_context>
chip_gen: v7x
topology: tpu7x:2x2x1
jax: 0.10.0
libtpu: 0.0.40
codegen_flags: <defaults>
</compile_context>

<pallas_src>
import functools

import jax
import jax.numpy as jnp
from jax.experimental import pallas as pl
from jax.experimental.pallas import tpu as pltpu


def _pick_band_rows(h_out, requested=32):
    """Largest multiple-of-8 divisor of h_out that is <= requested (keeps the
    output block sublane-aligned); falls back to a single band per image."""
    for th in range(min(requested, h_out), 7, -1):
        if th % 8 == 0 and h_out % th == 0:
            return th
    return h_out


def _pick_batch_block(n, per_image_bytes, budget=4 << 20):
    """How many images to fold into one grid step (keeps M large at small
    shapes while bounding the per-step working set)."""
    nb = max(1, min(n, int(budget) // max(int(per_image_bytes), 1)))
    while n % nb:
        nb -= 1
    return nb


def _make_kernel(TH, Wo, Cin, Cm, stride, nbands, nblk, cdtype, lane_pack):
    s = stride
    HB = (TH + 1) * s + 3          # padded-input rows needed per band (with halo)

    def im2col(src, nrows, st):
        # Lay the 9 (dy,dx)-shifted windows along the channel axis so a whole
        # 3x3 conv is ONE MXU matmul with K = 9*C; vectorized over the nblk
        # leading batch dim.
        cols = []
        for dy in range(3):
            for dx in range(3):
                cols.append(src[:, dy:dy + st * (nrows - 1) + 1:st,
                                dx:dx + st * (Wo - 1) + 1:st, :])
        patch = jnp.concatenate(cols, axis=-1)            # (nblk, nrows, Wo, 9*C)
        return patch.reshape(nblk * nrows * Wo, patch.shape[-1])

    def mm(a, b):
        return jax.lax.dot_general(a, b, (((1,), (0,)), ((), ())),
                                   preferred_element_type=jnp.float32)

    def kernel(x_ref, wf_ref, bf_ref, w2_ref, b2_ref, out_ref):
        j = pl.program_id(1)
        start = pl.multiple_of(j * (TH * s), TH * s)
        # input band for this output row-band (includes the conv halo rows)
        xb = x_ref[:, pl.ds(start, HB), :, :]             # (nblk, HB, Wp, Cin) bf16

        # ---- fused: conv3x3(stride) | 1x1-shortcut(stride), one matmul -------
        # The 1x1 shortcut weights occupy the center-tap (dy=1,dx=1) rows of
        # columns [Cm:2Cm]; all other rows there are exact zeros.
        acc1 = mm(im2col(xb, TH + 2, s), wf_ref[...])     # (nblk*(TH+2)*Wo, 2Cm) f32
        act1 = jnp.maximum(acc1 + bf_ref[0], 0.0)         # folded-BN bias + ReLU
        act1 = act1.reshape(nblk, TH + 2, Wo, 2 * Cm)

        # shortcut branch: interior (non-halo) rows, right half of the channels
        right = act1[:, 1:TH + 1, :, Cm:]                 # (nblk, TH, Wo, Cm) f32

        # left-branch mid activation incl. 1-row halos; halo rows outside the
        # image are conv2's zero padding -> mask them to zero.
        t = jax.lax.broadcasted_iota(jnp.int32, (1, TH + 2, 1, 1), 1)
        keep = jnp.logical_and(jnp.logical_or(j > 0, t > 0),
                               jnp.logical_or(j < nbands - 1, t < TH + 1))
        mid = jnp.where(keep, act1[..., :Cm], 0.0).astype(cdtype)

        # column zero-padding for conv2 done as a value: no VMEM scratch.
        # TODO(synk): replace with pltpu.roll + edge mask to drop the
        # materialized (Wo+2)-wide copy and the sublane-offset im2col slices.
        zcol = jnp.zeros((nblk, TH + 2, 1, Cm), cdtype)
        mp = jnp.concatenate([zcol, mid, zcol], axis=2)   # (nblk, TH+2, Wo+2, Cm)

        # ---- left branch: conv3x3(stride=1) -> folded-BN bias -> ReLU --------
        acc2 = mm(im2col(mp, TH, 1), w2_ref[...])         # (nblk*TH*Wo, Cm) f32
        left = jnp.maximum(acc2 + b2_ref[0], 0.0).reshape(nblk, TH, Wo, Cm)

        # ReLU(concat(a,b)) == concat(ReLU(a),ReLU(b)).
        fused = jnp.concatenate([left, right], axis=-1)   # (nblk, TH, Wo, 2Cm) f32
        if lane_pack:
            # tiny channel count: pack W into lanes so stores are lane-dense
            out_ref[...] = fused.reshape(nblk, TH, Wo * 2 * Cm).astype(out_ref.dtype)
        else:
            # channels already >=128 lanes: store naturally, skip the relayout
            out_ref[...] = fused.reshape(nblk, TH * Wo, 2 * Cm).astype(out_ref.dtype)

    return kernel


def _fold_params(params, cdtype):
    """Fold the inference-BN scale into the conv weights (one-time transform),
    reshape to im2col matmul layout and cast to the MXU dtype; biases stay f32."""
    cin = params["w1"].shape[2]
    cm = params["w1"].shape[3]
    w1 = (params["w1"] * params["s1"][0]).reshape(9 * cin, cm).astype(cdtype)
    w2 = (params["w2"] * params["s2"][0]).reshape(9 * cm, cm).astype(cdtype)
    ws = (params["ws"] * params["ss"][0]).astype(cdtype)
    return w1, params["b1"], w2, params["b2"], ws, params["bs"]


def residual_block_concat(x_nhwc, params, *, stride=1, band_rows=32,
                          compute_dtype=jnp.bfloat16, out_dtype=jnp.bfloat16):
    """Pallas implementation of ResidualBlockConcat.forward (NHWC layout)."""
    N, H, W, Cin = x_nhwc.shape
    Cm = params["w1"].shape[-1]                  # c_out // 2
    s = stride
    Ho = (H - 1) // s + 1                        # k=3, pad=1 (== k=1, pad=0)
    Wo = (W - 1) // s + 1
    TH = _pick_band_rows(Ho, band_rows)
    NB = Ho // TH

    # Spatial zero-pad: 1 (conv pad) + s extra rows top/bottom so every band's
    # halo window stays in bounds (out-of-range halo rows are masked inside).
    pr = s + 1
    xpad = jnp.pad(x_nhwc, ((0, 0), (pr, pr), (1, 1), (0, 0))).astype(compute_dtype)
    Hpx, Wp = H + 2 * pr, W + 2

    # fold batch into the matmul M dim for small images
    per_img = (Hpx * Wp * Cin * 2
               + Ho * Wo * 2 * Cm * jnp.dtype(out_dtype).itemsize)
    NBLK = _pick_batch_block(N, per_img)

    # Fused conv1|shortcut weights: (9*Cin, 2*Cm); shortcut = center tap rows.
    w1, b1, w2, b2, ws, bs = _fold_params(params, compute_dtype)
    wf = jnp.zeros((9 * Cin, 2 * Cm), compute_dtype)
    wf = wf.at[:, :Cm].set(w1)
    wf = wf.at[4 * Cin:5 * Cin, Cm:].set(ws)
    bf = jnp.concatenate([b1, bs], axis=-1)      # (1, 2*Cm) f32

    lane_pack = (2 * Cm) < 128
    kernel = _make_kernel(TH, Wo, Cin, Cm, s, NB, NBLK, compute_dtype, lane_pack)

    if lane_pack:
        out_shape = jax.ShapeDtypeStruct((N, Ho, Wo * 2 * Cm), out_dtype)
        out_spec = pl.BlockSpec((NBLK, TH, Wo * 2 * Cm), lambda n, j: (n, j, 0))
    else:
        out_shape = jax.ShapeDtypeStruct((N, Ho * Wo, 2 * Cm), out_dtype)
        out_spec = pl.BlockSpec((NBLK, TH * Wo, 2 * Cm), lambda n, j: (n, j, 0))

    def wspec(shape):
        return pl.BlockSpec(shape, lambda n, j: (0,) * len(shape))

    # TODO(synk): for large H*W (real ResNet layers, esp. v5e/v7x VMEM budgets)
    # band the *input* as well (memory_space=pl.ANY + manual halo-band DMA)
    # instead of keeping the whole padded image VMEM-resident per grid step.
    out_flat = pl.pallas_call(
        kernel,
        out_shape=out_shape,
        grid=(N // NBLK, NB),
        in_specs=[
            pl.BlockSpec((NBLK, Hpx, Wp, Cin), lambda n, j: (n, 0, 0, 0)),  # x
            wspec((9 * Cin, 2 * Cm)), wspec((1, 2 * Cm)),   # fused conv1|shortcut
            wspec((9 * Cm, Cm)), wspec((1, Cm)),            # conv2 (BN-folded)
        ],
        out_specs=out_spec,
        compiler_params=pltpu.CompilerParams(
            # band axis stays off the megacore split: x's index_map ignores j,
            # so a j-split would duplicate the whole-image input DMA per core.
            dimension_semantics=("parallel", "arbitrary"),
            vmem_limit_bytes=48 * 1024 * 1024),
    )(xpad, wf, bf, w2, b2)

    return out_flat.reshape(N, Ho, Wo, 2 * Cm)


def reference(x, params, *, stride=1, compute_dtype=jnp.bfloat16):
    """Pure-JAX reference (XLA convs) with the same BN folding and the same
    bf16-input / f32-accumulate precision choices as the kernel."""
    Cin, Cm = params["w1"].shape[2], params["w1"].shape[3]
    w1, b1, w2, b2, ws, bs = _fold_params(params, compute_dtype)
    f32 = lambda a: a.astype(jnp.float32)
    xq = f32(x.astype(compute_dtype))
    w1 = f32(w1).reshape(3, 3, Cin, Cm)
    w2 = f32(w2).reshape(3, 3, Cm, Cm)
    ws = f32(ws).reshape(1, 1, Cin, Cm)

    def conv(a, w, s, p):
        return jax.lax.conv_general_dilated(
            a, w, (s, s), [(p, p), (p, p)],
            dimension_numbers=("NHWC", "HWIO", "NHWC"))

    mid = jax.nn.relu(conv(xq, w1, stride, 1) + b1[0])
    left = conv(f32(mid.astype(compute_dtype)), w2, 1, 1) + b2[0]
    right = conv(xq, ws, stride, 0) + bs[0]
    return jax.nn.relu(jnp.concatenate([left, right], axis=-1))


def make_params(key, c_in, c_out):
    """Deterministic synthetic parameters (conv weights + folded inference BN)."""
    cm = c_out // 2
    ks = jax.random.split(key, 16)
    eps = 1e-5

    def bn(kg, kb, km, kv):
        gamma = 0.5 + jax.random.uniform(kg, (cm,), jnp.float32)
        beta = 0.1 * jax.random.normal(kb, (cm,), jnp.float32)
        mean = 0.1 * jax.random.normal(km, (cm,), jnp.float32)
        var = 0.5 + jax.random.uniform(kv, (cm,), jnp.float32)
        scale = gamma / jnp.sqrt(var + eps)
        shift = beta - mean * scale
        return scale.reshape(1, cm), shift.reshape(1, cm)

    w1 = 0.1 * jax.random.normal(ks[0], (3, 3, c_in, cm), jnp.float32)
    w2 = 0.1 * jax.random.normal(ks[1], (3, 3, cm, cm), jnp.float32)
    ws = 0.1 * jax.random.normal(ks[2], (c_in, cm), jnp.float32)
    s1, b1 = bn(ks[3], ks[4], ks[5], ks[6])
    s2, b2 = bn(ks[7], ks[8], ks[9], ks[10])
    ss, bs = bn(ks[11], ks[12], ks[13], ks[14])
    return dict(w1=w1, s1=s1, b1=b1, w2=w2, s2=s2, b2=b2, ws=ws, ss=ss, bs=bs)


if __name__ == "__main__":
    key = jax.random.PRNGKey(0)
    kx, kp = jax.random.split(key)

    N, C_IN, C_OUT, H, W, STRIDE = 2, 8, 16, 16, 16, 1
    x = jax.random.normal(kx, (N, H, W, C_IN), jnp.float32)     # NHWC
    params = make_params(kp, C_IN, C_OUT)

    fn = jax.jit(functools.partial(residual_block_concat, stride=STRIDE))
    out = jax.block_until_ready(fn(x, params))
    assert out.shape == (N, H // STRIDE, W // STRIDE, C_OUT), out.shape

    ref = reference(x, params, stride=STRIDE)
    out32 = out.astype(jnp.float32)
    ref32 = ref.astype(jnp.bfloat16).astype(jnp.float32)   # match bf16 output quant
    err = float(jnp.abs(out32 - ref32).max())
    assert jnp.allclose(out32, ref32, atol=1e-2, rtol=1e-2), err

    print("KERNEL_OK")
</pallas_src>

<mosaic_0001>
module attributes {stable_mosaic.version = 11 : i64} {
  func.func @kernel(%arg0: i32, %arg1: i32, %arg2: memref<2x20x18x8xbf16, #tpu.memory_space<vmem>>, %arg3: memref<72x16xbf16, #tpu.memory_space<vmem>>, %arg4: memref<1x16xf32, #tpu.memory_space<vmem>>, %arg5: memref<72x8xbf16, #tpu.memory_space<vmem>>, %arg6: memref<1x8xf32, #tpu.memory_space<vmem>>, %arg7: memref<2x16x256xbf16, #tpu.memory_space<vmem>>) attributes {dimension_semantics = [#tpu.dimension_semantics<parallel>, #tpu.dimension_semantics<arbitrary>], iteration_bounds = array<i64: 1, 1>, scalar_prefetch = 0 : i64, scratch_operands = 0 : i64, tpu.core_type = #tpu.core_type<tc>, window_params = [{transform_indices = @transform_0, window_bounds = array<i64: 2, 20, 18, 8>}, {pipeline_mode = #tpu.pipeline_mode<synchronous>, transform_indices = @transform_1, window_bounds = array<i64: 72, 16>}, {pipeline_mode = #tpu.pipeline_mode<synchronous>, transform_indices = @transform_2, window_bounds = array<i64: 1, 16>}, {pipeline_mode = #tpu.pipeline_mode<synchronous>, transform_indices = @transform_3, window_bounds = array<i64: 72, 8>}, {pipeline_mode = #tpu.pipeline_mode<synchronous>, transform_indices = @transform_4, window_bounds = array<i64: 1, 8>}, {transform_indices = @transform_5, window_bounds = array<i64: 2, 16, 256>}]} {
    %c16_i32 = arith.constant 16 : i32
    %0 = arith.muli %arg1, %c16_i32 : i32
    %1 = tpu.assume_multiple %0, 16 : i32
    %c0 = arith.constant 0 : index
    %2 = arith.index_cast %1 : i32 to index
    %c0_0 = arith.constant 0 : index
    %c0_1 = arith.constant 0 : index
    %3 = vector.load %arg2[%c0, %2, %c0_0, %c0_1] : memref<2x20x18x8xbf16, #tpu.memory_space<vmem>>, vector<2x20x18x8xbf16>
    %4 = vector.extract_strided_slice %3 {offsets = [0, 0, 0, 0], sizes = [2, 18, 16, 8], strides = [1, 1, 1, 1]} : vector<2x20x18x8xbf16> to vector<2x18x16x8xbf16>
    %5 = vector.extract_strided_slice %3 {offsets = [0, 0, 1, 0], sizes = [2, 18, 16, 8], strides = [1, 1, 1, 1]} : vector<2x20x18x8xbf16> to vector<2x18x16x8xbf16>
    %6 = vector.extract_strided_slice %3 {offsets = [0, 0, 2, 0], sizes = [2, 18, 16, 8], strides = [1, 1, 1, 1]} : vector<2x20x18x8xbf16> to vector<2x18x16x8xbf16>
    %7 = vector.extract_strided_slice %3 {offsets = [0, 1, 0, 0], sizes = [2, 18, 16, 8], strides = [1, 1, 1, 1]} : vector<2x20x18x8xbf16> to vector<2x18x16x8xbf16>
    %8 = vector.extract_strided_slice %3 {offsets = [0, 1, 1, 0], sizes = [2, 18, 16, 8], strides = [1, 1, 1, 1]} : vector<2x20x18x8xbf16> to vector<2x18x16x8xbf16>
    %9 = vector.extract_strided_slice %3 {offsets = [0, 1, 2, 0], sizes = [2, 18, 16, 8], strides = [1, 1, 1, 1]} : vector<2x20x18x8xbf16> to vector<2x18x16x8xbf16>
    %10 = vector.extract_strided_slice %3 {offsets = [0, 2, 0, 0], sizes = [2, 18, 16, 8], strides = [1, 1, 1, 1]} : vector<2x20x18x8xbf16> to vector<2x18x16x8xbf16>
    %11 = vector.extract_strided_slice %3 {offsets = [0, 2, 1, 0], sizes = [2, 18, 16, 8], strides = [1, 1, 1, 1]} : vector<2x20x18x8xbf16> to vector<2x18x16x8xbf16>
    %12 = vector.extract_strided_slice %3 {offsets = [0, 2, 2, 0], sizes = [2, 18, 16, 8], strides = [1, 1, 1, 1]} : vector<2x20x18x8xbf16> to vector<2x18x16x8xbf16>
    %13 = tpu.concatenate %4, %5, %6, %7, %8, %9, %10, %11, %12 in 3 : vector<2x18x16x8xbf16>, vector<2x18x16x8xbf16>, vector<2x18x16x8xbf16>, vector<2x18x16x8xbf16>, vector<2x18x16x8xbf16>, vector<2x18x16x8xbf16>, vector<2x18x16x8xbf16>, vector<2x18x16x8xbf16>, vector<2x18x16x8xbf16> -> vector<2x18x16x72xbf16>
    %14 = vector.shape_cast %13 : vector<2x18x16x72xbf16> to vector<576x72xbf16>
    %c0_2 = arith.constant 0 : index
    %c0_3 = arith.constant 0 : index
    %15 = vector.load %arg3[%c0_2, %c0_3] : memref<72x16xbf16, #tpu.memory_space<vmem>>, vector<72x16xbf16>
    %cst = arith.constant dense<0.000000e+00> : vector<576x16xf32>
    %16 = tpu.matmul %14, %15, %cst {dimension_numbers = #tpu.dot_dimension_numbers<[1], [0], [0], [1], [0, 0, 1, 1], [], []>} : vector<576x72xbf16>, vector<72x16xbf16>, vector<576x16xf32> -> vector<576x16xf32>
    %c0_4 = arith.constant 0 : index
    %c0_5 = arith.constant 0 : index
    %17 = vector.load %arg4[%c0_4, %c0_5] : memref<1x16xf32, #tpu.memory_space<vmem>>, vector<1x16xf32>
    %18 = vector.shape_cast %17 : vector<1x16xf32> to vector<16xf32>
    %19 = vector.shape_cast %18 : vector<16xf32> to vector<1x16xf32>
    %20 = vector.broadcast %19 : vector<1x16xf32> to vector<576x16xf32>
    %21 = arith.addf %16, %20 : vector<576x16xf32>
    %cst_6 = arith.constant 0.000000e+00 : f32
    %22 = vector.broadcast %cst_6 : f32 to vector<576x16xf32>
    %23 = arith.maximumf %21, %22 : vector<576x16xf32>
    %24 = vector.shape_cast %23 : vector<576x16xf32> to vector<2x18x16x16xf32>
    %25 = vector.extract_strided_slice %24 {offsets = [0, 1, 0, 8], sizes = [2, 16, 16, 8], strides = [1, 1, 1, 1]} : vector<2x18x16x16xf32> to vector<2x16x16x8xf32>
    %26 = tpu.iota {dimensions = array<i32: 1>} : vector<1x18x1x1xi32>
    %c0_i32 = arith.constant 0 : i32
    %27 = arith.cmpi sgt, %arg1, %c0_i32 : i32
    %c0_i32_7 = arith.constant 0 : i32
    %28 = vector.broadcast %c0_i32_7 : i32 to vector<1x18x1x1xi32>
    %29 = arith.cmpi sgt, %26, %28 : vector<1x18x1x1xi32>
    %30 = vector.broadcast %27 : i1 to vector<1x18x1x1xi1>
    %31 = arith.ori %30, %29 : vector<1x18x1x1xi1>
    %c0_i32_8 = arith.constant 0 : i32
    %32 = arith.cmpi slt, %arg1, %c0_i32_8 : i32
    %c17_i32 = arith.constant 17 : i32
    %33 = vector.broadcast %c17_i32 : i32 to vector<1x18x1x1xi32>
    %34 = arith.cmpi slt, %26, %33 : vector<1x18x1x1xi32>
    %35 = vector.broadcast %32 : i1 to vector<1x18x1x1xi1>
    %36 = arith.ori %35, %34 : vector<1x18x1x1xi1>
    %37 = arith.andi %31, %36 : vector<1x18x1x1xi1>
    %38 = vector.extract_strided_slice %24 {offsets = [0, 0, 0, 0], sizes = [2, 18, 16, 8], strides = [1, 1, 1, 1]} : vector<2x18x16x16xf32> to vector<2x18x16x8xf32>
    %cst_9 = arith.constant 0.000000e+00 : f32
    %39 = vector.shape_cast %37 : vector<1x18x1x1xi1> to vector<1x18x1x1xi1>
    %40 = vector.broadcast %39 : vector<1x18x1x1xi1> to vector<2x18x16x8xi1>
    %41 = vector.broadcast %cst_9 : f32 to vector<2x18x16x8xf32>
    %42 = arith.select %40, %38, %41 : vector<2x18x16x8xi1>, vector<2x18x16x8xf32>
    %43 = arith.truncf %42 : vector<2x18x16x8xf32> to vector<2x18x16x8xbf16>
    %cst_10 = arith.constant 0.000000e+00 : bf16
    %44 = vector.broadcast %cst_10 : bf16 to vector<2x18x1x8xbf16>
    %45 = tpu.concatenate %44, %43, %44 in 2 : vector<2x18x1x8xbf16>, vector<2x18x16x8xbf16>, vector<2x18x1x8xbf16> -> vector<2x18x18x8xbf16>
    %46 = vector.extract_strided_slice %45 {offsets = [0, 0, 0, 0], sizes = [2, 16, 16, 8], strides = [1, 1, 1, 1]} : vector<2x18x18x8xbf16> to vector<2x16x16x8xbf16>
    %47 = vector.extract_strided_slice %45 {offsets = [0, 0, 1, 0], sizes = [2, 16, 16, 8], strides = [1, 1, 1, 1]} : vector<2x18x18x8xbf16> to vector<2x16x16x8xbf16>
    %48 = vector.extract_strided_slice %45 {offsets = [0, 0, 2, 0], sizes = [2, 16, 16, 8], strides = [1, 1, 1, 1]} : vector<2x18x18x8xbf16> to vector<2x16x16x8xbf16>
    %49 = vector.extract_strided_slice %45 {offsets = [0, 1, 0, 0], sizes = [2, 16, 16, 8], strides = [1, 1, 1, 1]} : vector<2x18x18x8xbf16> to vector<2x16x16x8xbf16>
    %50 = vector.extract_strided_slice %45 {offsets = [0, 1, 1, 0], sizes = [2, 16, 16, 8], strides = [1, 1, 1, 1]} : vector<2x18x18x8xbf16> to vector<2x16x16x8xbf16>
    %51 = vector.extract_strided_slice %45 {offsets = [0, 1, 2, 0], sizes = [2, 16, 16, 8], strides = [1, 1, 1, 1]} : vector<2x18x18x8xbf16> to vector<2x16x16x8xbf16>
    %52 = vector.extract_strided_slice %45 {offsets = [0, 2, 0, 0], sizes = [2, 16, 16, 8], strides = [1, 1, 1, 1]} : vector<2x18x18x8xbf16> to vector<2x16x16x8xbf16>
    %53 = vector.extract_strided_slice %45 {offsets = [0, 2, 1, 0], sizes = [2, 16, 16, 8], strides = [1, 1, 1, 1]} : vector<2x18x18x8xbf16> to vector<2x16x16x8xbf16>
    %54 = vector.extract_strided_slice %45 {offsets = [0, 2, 2, 0], sizes = [2, 16, 16, 8], strides = [1, 1, 1, 1]} : vector<2x18x18x8xbf16> to vector<2x16x16x8xbf16>
    %55 = tpu.concatenate %46, %47, %48, %49, %50, %51, %52, %53, %54 in 3 : vector<2x16x16x8xbf16>, vector<2x16x16x8xbf16>, vector<2x16x16x8xbf16>, vector<2x16x16x8xbf16>, vector<2x16x16x8xbf16>, vector<2x16x16x8xbf16>, vector<2x16x16x8xbf16>, vector<2x16x16x8xbf16>, vector<2x16x16x8xbf16> -> vector<2x16x16x72xbf16>
    %56 = vector.shape_cast %55 : vector<2x16x16x72xbf16> to vector<512x72xbf16>
    %c0_11 = arith.constant 0 : index
    %c0_12 = arith.constant 0 : index
    %57 = vector.load %arg5[%c0_11, %c0_12] : memref<72x8xbf16, #tpu.memory_space<vmem>>, vector<72x8xbf16>
    %cst_13 = arith.constant dense<0.000000e+00> : vector<512x8xf32>
    %58 = tpu.matmul %56, %57, %cst_13 {dimension_numbers = #tpu.dot_dimension_numbers<[1], [0], [0], [1], [0, 0, 1, 1], [], []>} : vector<512x72xbf16>, vector<72x8xbf16>, vector<512x8xf32> -> vector<512x8xf32>
    %c0_14 = arith.constant 0 : index
    %c0_15 = arith.constant 0 : index
    %59 = vector.load %arg6[%c0_14, %c0_15] : memref<1x8xf32, #tpu.memory_space<vmem>>, vector<1x8xf32>
    %60 = vector.shape_cast %59 : vector<1x8xf32> to vector<8xf32>
    %61 = vector.shape_cast %60 : vector<8xf32> to vector<1x8xf32>
    %62 = vector.broadcast %61 : vector<1x8xf32> to vector<512x8xf32>
    %63 = arith.addf %58, %62 : vector<512x8xf32>
    %cst_16 = arith.constant 0.000000e+00 : f32
    %64 = vector.broadcast %cst_16 : f32 to vector<512x8xf32>
    %65 = arith.maximumf %63, %64 : vector<512x8xf32>
    %66 = vector.shape_cast %65 : vector<512x8xf32> to vector<2x16x16x8xf32>
    %67 = tpu.concatenate %66, %25 in 3 : vector<2x16x16x8xf32>, vector<2x16x16x8xf32> -> vector<2x16x16x16xf32>
    %68 = vector.shape_cast %67 : vector<2x16x16x16xf32> to vector<2x16x256xf32>
    %69 = arith.truncf %68 : vector<2x16x256xf32> to vector<2x16x256xbf16>
    %c0_17 = arith.constant 0 : index
    %c0_18 = arith.constant 0 : index
    %c0_19 = arith.constant 0 : index
    %70 = vector.load %arg7[%c0_17, %c0_18, %c0_19] : memref<2x16x256xbf16, #tpu.memory_space<vmem>>, vector<2x16x256xbf16>
    tpu.vector_store %arg7[%c0_17, %c0_18, %c0_19], %69 {strides = array<i32>} : memref<2x16x256xbf16, #tpu.memory_space<vmem>>, vector<2x16x256xbf16>,
    return
  }
  func.func @transform_0(%arg0: i32, %arg1: i32) -> (i32, i32, i32, i32) {
    %c0_i32 = arith.constant 0 : i32
    %c0_i32_0 = arith.constant 0 : i32
    %c0_i32_1 = arith.constant 0 : i32
    %c0_i32_2 = arith.constant 0 : i32
    return %arg0, %c0_i32, %c0_i32_0, %c0_i32_1 : i32, i32, i32, i32
  }
  func.func @transform_1(%arg0: i32, %arg1: i32) -> (i32, i32) {
    %c0_i32 = arith.constant 0 : i32
    %c0_i32_0 = arith.constant 0 : i32
    %c0_i32_1 = arith.constant 0 : i32
    return %c0_i32, %c0_i32_0 : i32, i32
  }
  func.func @transform_2(%arg0: i32, %arg1: i32) -> (i32, i32) {
    %c0_i32 = arith.constant 0 : i32
    %c0_i32_0 = arith.constant 0 : i32
    %c0_i32_1 = arith.constant 0 : i32
    return %c0_i32, %c0_i32_0 : i32, i32
  }
  func.func @transform_3(%arg0: i32, %arg1: i32) -> (i32, i32) {
    %c0_i32 = arith.constant 0 : i32
    %c0_i32_0 = arith.constant 0 : i32
    %c0_i32_1 = arith.constant 0 : i32
    return %c0_i32, %c0_i32_0 : i32, i32
  }
  func.func @transform_4(%arg0: i32, %arg1: i32) -> (i32, i32) {
    %c0_i32 = arith.constant 0 : i32
    %c0_i32_0 = arith.constant 0 : i32
    %c0_i32_1 = arith.constant 0 : i32
    return %c0_i32, %c0_i32_0 : i32, i32
  }
  func.func @transform_5(%arg0: i32, %arg1: i32) -> (i32, i32, i32) {
    %c0_i32 = arith.constant 0 : i32
    %c0_i32_0 = arith.constant 0 : i32
    return %arg0, %arg1, %c0_i32 : i32, i32, i32
  }
}

</mosaic_0001>

<llo_original>
// kernel: residual_block_concat.1
$region0: #{residual_block_concat.1}
  #allocation0 [shape = 'u32[]', space=smem, size = 0x4, offset = 0x4, fixed_abs, tag = 'smem constant byte address 0x4 - core index']
  #allocation1 [shape = 'u32[144,128]{1,0:T(1,128)}', space=vmem, size = 0x12000, scoped, tag = 'internal scratch']
  %s0 = inlined_call_operand.vmem [shape: bf16[2,20,18,8], index: 0, kind: input, shape index: {}]
  %s1 = inlined_call_operand.vmem [shape: bf16[72,16], index: 1, kind: input, shape index: {}]
  %s2 = inlined_call_operand.vmem [shape: f32[1,16], index: 2, kind: input, shape index: {}]
  %s3 = inlined_call_operand.vmem [shape: bf16[72,8], index: 3, kind: input, shape index: {}]
  %s4 = inlined_call_operand.vmem [shape: f32[1,8], index: 4, kind: input, shape index: {}]
  %s5 = inlined_call_operand.vmem [shape: bf16[2,16,256], index: 5, kind: output, shape index: {}]
  %s6 = sld [smem:[#allocation0]]
  $region30: #{residual_block_concat.1} parent=0
    _
  %s8 = ssub.s32 1, %s6
  %s9 = scalar_select 0, %s8, %s6
  // Predicated region
  $region2: #{residual_block_concat.1} parent=0 // pred_check
    _
  $region3: #{residual_block_concat.1} parent=0 // pred_check_branch
    %11 = sbr.rel (0) target = $region5
  $region4: #{residual_block_concat.1} parent=0 // pred_region
    _
  $region5: #{residual_block_concat.1} parent=0 // pred_fallthru
    _
  // Predicated region
  $region6: #{residual_block_concat.1} parent=0 // pred_check
    _
  $region7: #{residual_block_concat.1} parent=0 // pred_check_branch
    %13 = sbr.rel (0) target = $region9
  $region8: #{residual_block_concat.1} parent=0 // pred_region
    _
  $region9: #{residual_block_concat.1} parent=0 // pred_fallthru
    _
  // Predicated region
  $region10: #{residual_block_concat.1} parent=0 // pred_check
    _
  $region11: #{residual_block_concat.1} parent=0 // pred_check_branch
    %15 = sbr.rel (0) target = $region13
  $region12: #{residual_block_concat.1} parent=0 // pred_region
    _
  $region13: #{residual_block_concat.1} parent=0 // pred_fallthru
    _
  // Predicated region
  $region14: #{residual_block_concat.1} parent=0 // pred_check
    _
  $region15: #{residual_block_concat.1} parent=0 // pred_check_branch
    %17 = sbr.rel (0) target = $region17
  $region16: #{residual_block_concat.1} parent=0 // pred_region
    _
  $region17: #{residual_block_concat.1} parent=0 // pred_fallthru
    _
  // Predicated region
  $region18: #{residual_block_concat.1} parent=0 // pred_check
    _
  $region19: #{residual_block_concat.1} parent=0 // pred_check_branch
    %19 = sbr.rel (0) target = $region21
  $region20: #{residual_block_concat.1} parent=0 // pred_region
    _
  $region21: #{residual_block_concat.1} parent=0 // pred_fallthru
    _
  %s21 = smul.u32 0, 16
  %s22 = smul.u32 %s21, 3
  %s23 = smul.addr %s22, 4
  %s24 = scalar_lea.vmem %s0, %s23
  %v25 = vld [vmem:[%s24] sm:$0xf]
  %v26 = vld [vmem:[%s24 + $0x4] sm:$0xf]
  %v27 = vld [vmem:[%s24 + $0x8] sm:$0x1]
  %v28 = vld [vmem:[%s24 + $0xc] sm:$0xf]
  %v29 = vld [vmem:[%s24 + $0x10] sm:$0xf]
  %v30 = vld [vmem:[%s24 + $0x14] sm:$0x1]
  %v31 = vld [vmem:[%s24 + $0x18] sm:$0xf]
  %v32 = vld [vmem:[%s24 + $0x1c] sm:$0xf]
  %v33 = vld [vmem:[%s24 + $0x20] sm:$0x1]
  %v34 = vld [vmem:[%s24 + $0x24] sm:$0xf]
  %v35 = vld [vmem:[%s24 + $0x28] sm:$0xf]
  %v36 = vld [vmem:[%s24 + $0x2c] sm:$0x1]
  %v37 = vld [vmem:[%s24 + $0x30] sm:$0xf]
  %v38 = vld [vmem:[%s24 + $0x34] sm:$0xf]
  %v39 = vld [vmem:[%s24 + $0x38] sm:$0x1]
  %v40 = vld [vmem:[%s24 + $0x3c] sm:$0xf]
  %v41 = vld [vmem:[%s24 + $0x40] sm:$0xf]
  %v42 = vld [vmem:[%s24 + $0x44] sm:$0x1]
  %v43 = vld [vmem:[%s24 + $0x48] sm:$0xf]
  %v44 = vld [vmem:[%s24 + $0x4c] sm:$0xf]
  %v45 = vld [vmem:[%s24 + $0x50] sm:$0x1]
  %v46 = vld [vmem:[%s24 + $0x54] sm:$0xf]
  %v47 = vld [vmem:[%s24 + $0x58] sm:$0xf]
  %v48 = vld [vmem:[%s24 + $0x5c] sm:$0x1]
  %v49 = vld [vmem:[%s24 + $0x60] sm:$0xf]
  %v50 = vld [vmem:[%s24 + $0x64] sm:$0xf]
  %v51 = vld [vmem:[%s24 + $0x68] sm:$0x1]
  %v52 = vld [vmem:[%s24 + $0x6c] sm:$0xf]
  %v53 = vld [vmem:[%s24 + $0x70] sm:$0xf]
  %v54 = vld [vmem:[%s24 + $0x74] sm:$0x1]
  %v55 = vld [vmem:[%s24 + $0x78] sm:$0xf]
  %v56 = vld [vmem:[%s24 + $0x7c] sm:$0xf]
  %v57 = vld [vmem:[%s24 + $0x80] sm:$0x1]
  %v58 = vld [vmem:[%s24 + $0x84] sm:$0xf]
  %v59 = vld [vmem:[%s24 + $0x88] sm:$0xf]
  %v60 = vld [vmem:[%s24 + $0x8c] sm:$0x1]
  %v61 = vld [vmem:[%s24 + $0x90] sm:$0xf]
  %v62 = vld [vmem:[%s24 + $0x94] sm:$0xf]
  %v63 = vld [vmem:[%s24 + $0x98] sm:$0x1]
  %v64 = vld [vmem:[%s24 + $0x9c] sm:$0xf]
  %v65 = vld [vmem:[%s24 + $0xa0] sm:$0xf]
  %v66 = vld [vmem:[%s24 + $0xa4] sm:$0x1]
  %v67 = vld [vmem:[%s24 + $0xa8] sm:$0xf]
  %v68 = vld [vmem:[%s24 + $0xac] sm:$0xf]
  %v69 = vld [vmem:[%s24 + $0xb0] sm:$0x1]
  %v70 = vld [vmem:[%s24 + $0xb4] sm:$0xf]
  %v71 = vld [vmem:[%s24 + $0xb8] sm:$0xf]
  %v72 = vld [vmem:[%s24 + $0xbc] sm:$0x1]
  %v73 = vld [vmem:[%s24 + $0xc0] sm:$0xf]
  %v74 = vld [vmem:[%s24 + $0xc4] sm:$0xf]
  %v75 = vld [vmem:[%s24 + $0xc8] sm:$0x1]
  %v76 = vld [vmem:[%s24 + $0xcc] sm:$0xf]
  %v77 = vld [vmem:[%s24 + $0xd0] sm:$0xf]
  %v78 = vld [vmem:[%s24 + $0xd4] sm:$0x1]
  %v79 = vld [vmem:[%s24 + $0xd8] sm:$0xf]
  %v80 = vld [vmem:[%s24 + $0xdc] sm:$0xf]
  %v81 = vld [vmem:[%s24 + $0xe0] sm:$0x1]
  %v82 = vld [vmem:[%s24 + $0xe4] sm:$0xf]
  %v83 = vld [vmem:[%s24 + $0xe8] sm:$0xf]
  %v84 = vld [vmem:[%s24 + $0xec] sm:$0x1]
  %v85 = vld [vmem:[%s24 + $0xf0] sm:$0xf]
  %v86 = vld [vmem:[%s24 + $0xf4] sm:$0xf]
  %v87 = vld [vmem:[%s24 + $0xf8] sm:$0x1]
  %v88 = vld [vmem:[%s24 + $0xfc] sm:$0xf]
  %v89 = vld [vmem:[%s24 + $0x100] sm:$0xf]
  %v90 = vld [vmem:[%s24 + $0x104] sm:$0x1]
  %v91 = vld [vmem:[%s24 + $0x108] sm:$0xf]
  %v92 = vld [vmem:[%s24 + $0x10c] sm:$0xf]
  %v93 = vld [vmem:[%s24 + $0x110] sm:$0x1]
  %v94 = vld [vmem:[%s24 + $0x114] sm:$0xf]
  %v95 = vld [vmem:[%s24 + $0x118] sm:$0xf]
  %v96 = vld [vmem:[%s24 + $0x11c] sm:$0x1]
  %v97 = vld [vmem:[%s24 + $0x120] sm:$0xf]
  %v98 = vld [vmem:[%s24 + $0x124] sm:$0xf]
  %v99 = vld [vmem:[%s24 + $0x128] sm:$0x1]
  %v100 = vld [vmem:[%s24 + $0x12c] sm:$0xf]
  %v101 = vld [vmem:[%s24 + $0x130] sm:$0xf]
  %v102 = vld [vmem:[%s24 + $0x134] sm:$0x1]
  %v103 = vld [vmem:[%s24 + $0x138] sm:$0xf]
  %v104 = vld [vmem:[%s24 + $0x13c] sm:$0xf]
  %v105 = vld [vmem:[%s24 + $0x140] sm:$0x1]
  %v106 = vld [vmem:[%s24 + $0x144] sm:$0xf]
  %v107 = vld [vmem:[%s24 + $0x148] sm:$0xf]
  %v108 = vld [vmem:[%s24 + $0x14c] sm:$0x1]
  %v109 = vld [vmem:[%s24 + $0x150] sm:$0xf]
  %v110 = vld [vmem:[%s24 + $0x154] sm:$0xf]
  %v111 = vld [vmem:[%s24 + $0x158] sm:$0x1]
  %v112 = vld [vmem:[%s24 + $0x15c] sm:$0xf]
  %v113 = vld [vmem:[%s24 + $0x160] sm:$0xf]
  %v114 = vld [vmem:[%s24 + $0x164] sm:$0x1]
  %v115 = vld [vmem:[%s24 + $0x168] sm:$0xf]
  %v116 = vld [vmem:[%s24 + $0x16c] sm:$0xf]
  %v117 = vld [vmem:[%s24 + $0x170] sm:$0x1]
  %v118 = vld [vmem:[%s24 + $0x174] sm:$0xf]
  %v119 = vld [vmem:[%s24 + $0x178] sm:$0xf]
  %v120 = vld [vmem:[%s24 + $0x17c] sm:$0x1]
  %v121 = vld [vmem:[%s24 + $0x180] sm:$0xf]
  %v122 = vld [vmem:[%s24 + $0x184] sm:$0xf]
  %v123 = vld [vmem:[%s24 + $0x188] sm:$0x1]
  %v124 = vld [vmem:[%s24 + $0x18c] sm:$0xf]
  %v125 = vld [vmem:[%s24 + $0x190] sm:$0xf]
  %v126 = vld [vmem:[%s24 + $0x194] sm:$0x1]
  %v127 = vld [vmem:[%s24 + $0x198] sm:$0xf]
  %v128 = vld [vmem:[%s24 + $0x19c] sm:$0xf]
  %v129 = vld [vmem:[%s24 + $0x1a0] sm:$0x1]
  %v130 = vld [vmem:[%s24 + $0x1a4] sm:$0xf]
  %v131 = vld [vmem:[%s24 + $0x1a8] sm:$0xf]
  %v132 = vld [vmem:[%s24 + $0x1ac] sm:$0x1]
  %v133 = vld [vmem:[%s24 + $0x1b0] sm:$0xf]
  %v134 = vld [vmem:[%s24 + $0x1b4] sm:$0xf]
  %v135 = vld [vmem:[%s24 + $0x1b8] sm:$0x1]
  %v136 = vld [vmem:[%s24 + $0x1bc] sm:$0xf]
  %v137 = vld [vmem:[%s24 + $0x1c0] sm:$0xf]
  %v138 = vld [vmem:[%s24 + $0x1c4] sm:$0x1]
  %v139 = vld [vmem:[%s24 + $0x1c8] sm:$0xf]
  %v140 = vld [vmem:[%s24 + $0x1cc] sm:$0xf]
  %v141 = vld [vmem:[%s24 + $0x1d0] sm:$0x1]
  %v142 = vld [vmem:[%s24 + $0x1d4] sm:$0xf]
  %v143 = vld [vmem:[%s24 + $0x1d8] sm:$0xf]
  %v144 = vld [vmem:[%s24 + $0x1dc] sm:$0x1]
  %v217 = vunpack.c.l.b16 %v25
  %v218 = vunpack.c.l.b16 %v26
  %v219 = vunpack.c.l.b16 %v28
  %v220 = vunpack.c.l.b16 %v29
  %v221 = vunpack.c.l.b16 %v31
  %v222 = vunpack.c.l.b16 %v32
  %v223 = vunpack.c.l.b16 %v34
  %v224 = vunpack.c.l.b16 %v35
  %v225 = vunpack.c.l.b16 %v37
  %v226 = vunpack.c.l.b16 %v38
  %v227 = vunpack.c.l.b16 %v40
  %v228 = vunpack.c.l.b16 %v41
  %v229 = vunpack.c.l.b16 %v43
  %v230 = vunpack.c.l.b16 %v44
  %v231 = vunpack.c.l.b16 %v46
  %v232 = vunpack.c.l.b16 %v47
  %v233 = vunpack.c.l.b16 %v49
  %v234 = vunpack.c.l.b16 %v50
  %v235 = vunpack.c.l.b16 %v52
  %v236 = vunpack.c.l.b16 %v53
  %v237 = vunpack.c.l.b16 %v55
  %v238 = vunpack.c.l.b16 %v56
  %v239 = vunpack.c.l.b16 %v58
  %v240 = vunpack.c.l.b16 %v59
  %v241 = vunpack.c.l.b16 %v61
  %v242 = vunpack.c.l.b16 %v62
  %v243 = vunpack.c.l.b16 %v64
  %v244 = vunpack.c.l.b16 %v65
  %v245 = vunpack.c.l.b16 %v67
  %v246 = vunpack.c.l.b16 %v68
  %v247 = vunpack.c.l.b16 %v70
  %v248 = vunpack.c.l.b16 %v71
  %v249 = vunpack.c.l.b16 %v73
  %v250 = vunpack.c.l.b16 %v74
  %v251 = vunpack.c.l.b16 %v76
  %v252 = vunpack.c.l.b16 %v77
  %v253 = vunpack.c.l.b16 %v85
  %v254 = vunpack.c.l.b16 %v86
  %v255 = vunpack.c.l.b16 %v88
  %v256 = vunpack.c.l.b16 %v89
  %v257 = vunpack.c.l.b16 %v91
  %v258 = vunpack.c.l.b16 %v92
  %v259 = vunpack.c.l.b16 %v94
  %v260 = vunpack.c.l.b16 %v95
  %v261 = vunpack.c.l.b16 %v97
  %v262 = vunpack.c.l.b16 %v98
  %v263 = vunpack.c.l.b16 %v100
  %v264 = vunpack.c.l.b16 %v101
  %v265 = vunpack.c.l.b16 %v103
  %v266 = vunpack.c.l.b16 %v104
  %v267 = vunpack.c.l.b16 %v106
  %v268 = vunpack.c.l.b16 %v107
  %v269 = vunpack.c.l.b16 %v109
  %v270 = vunpack.c.l.b16 %v110
  %v271 = vunpack.c.l.b16 %v112
  %v272 = vunpack.c.l.b16 %v113
  %v273 = vunpack.c.l.b16 %v115
  %v274 = vunpack.c.l.b16 %v116
  %v275 = vunpack.c.l.b16 %v118
  %v276 = vunpack.c.l.b16 %v119
  %v277 = vunpack.c.l.b16 %v121
  %v278 = vunpack.c.l.b16 %v122
  %v279 = vunpack.c.l.b16 %v124
  %v280 = vunpack.c.l.b16 %v125
  %v281 = vunpack.c.l.b16 %v127
  %v282 = vunpack.c.l.b16 %v128
  %v283 = vunpack.c.l.b16 %v130
  %v284 = vunpack.c.l.b16 %v131
  %v285 = vunpack.c.l.b16 %v133
  %v286 = vunpack.c.l.b16 %v134
  %v287 = vunpack.c.l.b16 %v136
  %v288 = vunpack.c.l.b16 %v137
  %v289 = vpack.c.b16 %v218, %v217
  %v290 = vpack.c.b16 %v220, %v219
  %v291 = vpack.c.b16 %v222, %v221
  %v292 = vpack.c.b16 %v224, %v223
  %v293 = vpack.c.b16 %v226, %v225
  %v294 = vpack.c.b16 %v228, %v227
  %v295 = vpack.c.b16 %v230, %v229
  %v296 = vpack.c.b16 %v232, %v231
  %v297 = vpack.c.b16 %v234, %v233
  %v298 = vpack.c.b16 %v236, %v235
  %v299 = vpack.c.b16 %v238, %v237
  %v300 = vpack.c.b16 %v240, %v239
  %v301 = vpack.c.b16 %v242, %v241
  %v302 = vpack.c.b16 %v244, %v243
  %v303 = vpack.c.b16 %v246, %v245
  %v304 = vpack.c.b16 %v248, %v247
  %v305 = vpack.c.b16 %v250, %v249
  %v306 = vpack.c.b16 %v252, %v251
  %v307 = vpack.c.b16 %v254, %v253
  %v308 = vpack.c.b16 %v256, %v255
  %v309 = vpack.c.b16 %v258, %v257
  %v310 = vpack.c.b16 %v260, %v259
  %v311 = vpack.c.b16 %v262, %v261
  %v312 = vpack.c.b16 %v264, %v263
  %v313 = vpack.c.b16 %v266, %v265
  %v314 = vpack.c.b16 %v268, %v267
  %v315 = vpack.c.b16 %v270, %v269
  %v316 = vpack.c.b16 %v272, %v271
  %v317 = vpack.c.b16 %v274, %v273
  %v318 = vpack.c.b16 %v276, %v275
  %v319 = vpack.c.b16 %v278, %v277
  %v320 = vpack.c.b16 %v280, %v279
  %v321 = vpack.c.b16 %v282, %v281
  %v322 = vpack.c.b16 %v284, %v283
  %v323 = vpack.c.b16 %v286, %v285
  %v324 = vpack.c.b16 %v288, %v287
  %v361 = vunpack.c.l.b16 %v27
  %v362 = vunpack.c.l.b16 %v30
  %v363 = vunpack.c.l.b16 %v33
  %v364 = vunpack.c.l.b16 %v36
  %v365 = vunpack.c.l.b16 %v39
  %v366 = vunpack.c.l.b16 %v42
  %v367 = vunpack.c.l.b16 %v45
  %v368 = vunpack.c.l.b16 %v48
  %v369 = vunpack.c.l.b16 %v51
  %v370 = vunpack.c.l.b16 %v54
  %v371 = vunpack.c.l.b16 %v57
  %v372 = vunpack.c.l.b16 %v60
  %v373 = vunpack.c.l.b16 %v63
  %v374 = vunpack.c.l.b16 %v66
  %v375 = vunpack.c.l.b16 %v69
  %v376 = vunpack.c.l.b16 %v72
  %v377 = vunpack.c.l.b16 %v75
  %v378 = vunpack.c.l.b16 %v78
  %v379 = vunpack.c.l.b16 %v87
  %v380 = vunpack.c.l.b16 %v90
  %v381 = vunpack.c.l.b16 %v93
  %v382 = vunpack.c.l.b16 %v96
  %v383 = vunpack.c.l.b16 %v99
  %v384 = vunpack.c.l.b16 %v102
  %v385 = vunpack.c.l.b16 %v105
  %v386 = vunpack.c.l.b16 %v108
  %v387 = vunpack.c.l.b16 %v111
  %v388 = vunpack.c.l.b16 %v114
  %v389 = vunpack.c.l.b16 %v117
  %v390 = vunpack.c.l.b16 %v120
  %v391 = vunpack.c.l.b16 %v123
  %v392 = vunpack.c.l.b16 %v126
  %v393 = vunpack.c.l.b16 %v129
  %v394 = vunpack.c.l.b16 %v132
  %v395 = vunpack.c.l.b16 %v135
  %v396 = vunpack.c.l.b16 %v138
  %v397 = vpack.c.b16 %v361, %v361
  %v398 = vpack.c.b16 %v362, %v362
  %v399 = vpack.c.b16 %v363, %v363
  %v400 = vpack.c.b16 %v364, %v364
  %v401 = vpack.c.b16 %v365, %v365
  %v402 = vpack.c.b16 %v366, %v366
  %v403 = vpack.c.b16 %v367, %v367
  %v404 = vpack.c.b16 %v368, %v368
  %v405 = vpack.c.b16 %v369, %v369
  %v406 = vpack.c.b16 %v370, %v370
  %v407 = vpack.c.b16 %v371, %v371
  %v408 = vpack.c.b16 %v372, %v372
  %v409 = vpack.c.b16 %v373, %v373
  %v410 = vpack.c.b16 %v374, %v374
  %v411 = vpack.c.b16 %v375, %v375
  %v412 = vpack.c.b16 %v376, %v376
  %v413 = vpack.c.b16 %v377, %v377
  %v414 = vpack.c.b16 %v378, %v378
  %v415 = vpack.c.b16 %v379, %v379
  %v416 = vpack.c.b16 %v380, %v380
  %v417 = vpack.c.b16 %v381, %v381
  %v418 = vpack.c.b16 %v382, %v382
  %v419 = vpack.c.b16 %v383, %v383
  %v420 = vpack.c.b16 %v384, %v384
  %v421 = vpack.c.b16 %v385, %v385
  %v422 = vpack.c.b16 %v386, %v386
  %v423 = vpack.c.b16 %v387, %v387
  %v424 = vpack.c.b16 %v388, %v388
  %v425 = vpack.c.b16 %v389, %v389
  %v426 = vpack.c.b16 %v390, %v390
  %v427 = vpack.c.b16 %v391, %v391
  %v428 = vpack.c.b16 %v392, %v392
  %v429 = vpack.c.b16 %v393, %v393
  %v430 = vpack.c.b16 %v394, %v394
  %v431 = vpack.c.b16 %v395, %v395
  %v432 = vpack.c.b16 %v396, %v396
  %vm433 = vsmask.f32 7424
  %v435 = vshrl.u32 %v289, 16
  %v437 = vshll.u32 %v289, 16
  %v439 = vrot.slane %v437, 1
  %v440 = vor.u32 %v435, %v439
  %v442 = vshll.u32 %v397, 16
  %v444 = vrot.slane %v442, 1
  %v445 = vsel %vm433, %v440, %v444
  %v447 = vshrl.u32 %v290, 16
  %v449 = vshll.u32 %v290, 16
  %v451 = vrot.slane %v449, 1
  %v452 = vor.u32 %v447, %v451
  %v454 = vshll.u32 %v398, 16
  %v456 = vrot.slane %v454, 1
  %v457 = vsel %vm433, %v452, %v456
  %v459 = vshrl.u32 %v291, 16
  %v461 = vshll.u32 %v291, 16
  %v463 = vrot.slane %v461, 1
  %v464 = vor.u32 %v459, %v463
  %v466 = vshll.u32 %v399, 16
  %v468 = vrot.slane %v466, 1
  %v469 = vsel %vm433, %v464, %v468
  %v471 = vshrl.u32 %v292, 16
  %v473 = vshll.u32 %v292, 16
  %v475 = vrot.slane %v473, 1
  %v476 = vor.u32 %v471, %v475
  %v478 = vshll.u32 %v400, 16
  %v480 = vrot.slane %v478, 1
  %v481 = vsel %vm433, %v476, %v480
  %v483 = vshrl.u32 %v293, 16
  %v485 = vshll.u32 %v293, 16
  %v487 = vrot.slane %v485, 1
  %v488 = vor.u32 %v483, %v487
  %v490 = vshll.u32 %v401, 16
  %v492 = vrot.slane %v490, 1
  %v493 = vsel %vm433, %v488, %v492
  %v495 = vshrl.u32 %v294, 16
  %v497 = vshll.u32 %v294, 16
  %v499 = vrot.slane %v497, 1
  %v500 = vor.u32 %v495, %v499
  %v502 = vshll.u32 %v402, 16
  %v504 = vrot.slane %v502, 1
  %v505 = vsel %vm433, %v500, %v504
  %v507 = vshrl.u32 %v295, 16
  %v509 = vshll.u32 %v295, 16
  %v511 = vrot.slane %v509, 1
  %v512 = vor.u32 %v507, %v511
  %v514 = vshll.u32 %v403, 16
  %v516 = vrot.slane %v514, 1
  %v517 = vsel %vm433, %v512, %v516
  %v519 = vshrl.u32 %v296, 16
  %v521 = vshll.u32 %v296, 16
  %v523 = vrot.slane %v521, 1
  %v524 = vor.u32 %v519, %v523
  %v526 = vshll.u32 %v404, 16
  %v528 = vrot.slane %v526, 1
  %v529 = vsel %vm433, %v524, %v528
  %v531 = vshrl.u32 %v297, 16
  %v533 = vshll.u32 %v297, 16
  %v535 = vrot.slane %v533, 1
  %v536 = vor.u32 %v531, %v535
  %v538 = vshll.u32 %v405, 16
  %v540 = vrot.slane %v538, 1
  %v541 = vsel %vm433, %v536, %v540
  %v543 = vshrl.u32 %v298, 16
  %v545 = vshll.u32 %v298, 16
  %v547 = vrot.slane %v545, 1
  %v548 = vor.u32 %v543, %v547
  %v550 = vshll.u32 %v406, 16
  %v552 = vrot.slane %v550, 1
  %v553 = vsel %vm433, %v548, %v552
  %v555 = vshrl.u32 %v299, 16
  %v557 = vshll.u32 %v299, 16
  %v559 = vrot.slane %v557, 1
  %v560 = vor.u32 %v555, %v559
  %v562 = vshll.u32 %v407, 16
  %v564 = vrot.slane %v562, 1
  %v565 = vsel %vm433, %v560, %v564
  %v567 = vshrl.u32 %v300, 16
  %v569 = vshll.u32 %v300, 16
  %v571 = vrot.slane %v569, 1
  %v572 = vor.u32 %v567, %v571
  %v574 = vshll.u32 %v408, 16
  %v576 = vrot.slane %v574, 1
  %v577 = vsel %vm433, %v572, %v576
  %v579 = vshrl.u32 %v301, 16
  %v581 = vshll.u32 %v301, 16
  %v583 = vrot.slane %v581, 1
  %v584 = vor.u32 %v579, %v583
  %v586 = vshll.u32 %v409, 16
  %v588 = vrot.slane %v586, 1
  %v589 = vsel %vm433, %v584, %v588
  %v591 = vshrl.u32 %v302, 16
  %v593 = vshll.u32 %v302, 16
  %v595 = vrot.slane %v593, 1
  %v596 = vor.u32 %v591, %v595
  %v598 = vshll.u32 %v410, 16
  %v600 = vrot.slane %v598, 1
  %v601 = vsel %vm433, %v596, %v600
  %v603 = vshrl.u32 %v303, 16
  %v605 = vshll.u32 %v303, 16
  %v607 = vrot.slane %v605, 1
  %v608 = vor.u32 %v603, %v607
  %v610 = vshll.u32 %v411, 16
  %v612 = vrot.slane %v610, 1
  %v613 = vsel %vm433, %v608, %v612
  %v615 = vshrl.u32 %v304, 16
  %v617 = vshll.u32 %v304, 16
  %v619 = vrot.slane %v617, 1
  %v620 = vor.u32 %v615, %v619
  %v622 = vshll.u32 %v412, 16
  %v624 = vrot.slane %v622, 1
  %v625 = vsel %vm433, %v620, %v624
  %v627 = vshrl.u32 %v305, 16
  %v629 = vshll.u32 %v305, 16
  %v631 = vrot.slane %v629, 1
  %v632 = vor.u32 %v627, %v631
  %v634 = vshll.u32 %v413, 16
  %v636 = vrot.slane %v634, 1
  %v637 = vsel %vm433, %v632, %v636
  %v639 = vshrl.u32 %v306, 16
  %v641 = vshll.u32 %v306, 16
  %v643 = vrot.slane %v641, 1
  %v644 = vor.u32 %v639, %v643
  %v646 = vshll.u32 %v414, 16
  %v648 = vrot.slane %v646, 1
  %v649 = vsel %vm433, %v644, %v648
  %v651 = vshrl.u32 %v307, 16
  %v653 = vshll.u32 %v307, 16
  %v655 = vrot.slane %v653, 1
  %v656 = vor.u32 %v651, %v655
  %v658 = vshll.u32 %v415, 16
  %v660 = vrot.slane %v658, 1
  %v661 = vsel %vm433, %v656, %v660
  %v663 = vshrl.u32 %v308, 16
  %v665 = vshll.u32 %v308, 16
  %v667 = vrot.slane %v665, 1
  %v668 = vor.u32 %v663, %v667
  %v670 = vshll.u32 %v416, 16
  %v672 = vrot.slane %v670, 1
  %v673 = vsel %vm433, %v668, %v672
  %v675 = vshrl.u32 %v309, 16
  %v677 = vshll.u32 %v309, 16
  %v679 = vrot.slane %v677, 1
  %v680 = vor.u32 %v675, %v679
  %v682 = vshll.u32 %v417, 16
  %v684 = vrot.slane %v682, 1
  %v685 = vsel %vm433, %v680, %v684
  %v687 = vshrl.u32 %v310, 16
  %v689 = vshll.u32 %v310, 16
  %v691 = vrot.slane %v689, 1
  %v692 = vor.u32 %v687, %v691
  %v694 = vshll.u32 %v418, 16
  %v696 = vrot.slane %v694, 1
  %v697 = vsel %vm433, %v692, %v696
  %v699 = vshrl.u32 %v311, 16
  %v701 = vshll.u32 %v311, 16
  %v703 = vrot.slane %v701, 1
  %v704 = vor.u32 %v699, %v703
  %v706 = vshll.u32 %v419, 16
  %v708 = vrot.slane %v706, 1
  %v709 = vsel %vm433, %v704, %v708
  %v711 = vshrl.u32 %v312, 16
  %v713 = vshll.u32 %v312, 16
  %v715 = vrot.slane %v713, 1
  %v716 = vor.u32 %v711, %v715
  %v718 = vshll.u32 %v420, 16
  %v720 = vrot.slane %v718, 1
  %v721 = vsel %vm433, %v716, %v720
  %v723 = vshrl.u32 %v313, 16
  %v725 = vshll.u32 %v313, 16
  %v727 = vrot.slane %v725, 1
  %v728 = vor.u32 %v723, %v727
  %v730 = vshll.u32 %v421, 16
  %v732 = vrot.slane %v730, 1
  %v733 = vsel %vm433, %v728, %v732
  %v735 = vshrl.u32 %v314, 16
  %v737 = vshll.u32 %v314, 16
  %v739 = vrot.slane %v737, 1
  %v740 = vor.u32 %v735, %v739
  %v742 = vshll.u32 %v422, 16
  %v744 = vrot.slane %v742, 1
  %v745 = vsel %vm433, %v740, %v744
  %v747 = vshrl.u32 %v315, 16
  %v749 = vshll.u32 %v315, 16
  %v751 = vrot.slane %v749, 1
  %v752 = vor.u32 %v747, %v751
  %v754 = vshll.u32 %v423, 16
  %v756 = vrot.slane %v754, 1
  %v757 = vsel %vm433, %v752, %v756
  %v759 = vshrl.u32 %v316, 16
  %v761 = vshll.u32 %v316, 16
  %v763 = vrot.slane %v761, 1
  %v764 = vor.u32 %v759, %v763
  %v766 = vshll.u32 %v424, 16
  %v768 = vrot.slane %v766, 1
  %v769 = vsel %vm433, %v764, %v768
  %v771 = vshrl.u32 %v317, 16
  %v773 = vshll.u32 %v317, 16
  %v775 = vrot.slane %v773, 1
  %v776 = vor.u32 %v771, %v775
  %v778 = vshll.u32 %v425, 16
  %v780 = vrot.slane %v778, 1
  %v781 = vsel %vm433, %v776, %v780
  %v783 = vshrl.u32 %v318, 16
  %v785 = vshll.u32 %v318, 16
  %v787 = vrot.slane %v785, 1
  %v788 = vor.u32 %v783, %v787
  %v790 = vshll.u32 %v426, 16
  %v792 = vrot.slane %v790, 1
  %v793 = vsel %vm433, %v788, %v792
  %v795 = vshrl.u32 %v319, 16
  %v797 = vshll.u32 %v319, 16
  %v799 = vrot.slane %v797, 1
  %v800 = vor.u32 %v795, %v799
  %v802 = vshll.u32 %v427, 16
  %v804 = vrot.slane %v802, 1
  %v805 = vsel %vm433, %v800, %v804
  %v807 = vshrl.u32 %v320, 16
  %v809 = vshll.u32 %v320, 16
  %v811 = vrot.slane %v809, 1
  %v812 = vor.u32 %v807, %v811
  %v814 = vshll.u32 %v428, 16
  %v816 = vrot.slane %v814, 1
  %v817 = vsel %vm433, %v812, %v816
  %v819 = vshrl.u32 %v321, 16
  %v821 = vshll.u32 %v321, 16
  %v823 = vrot.slane %v821, 1
  %v824 = vor.u32 %v819, %v823
  %v826 = vshll.u32 %v429, 16
  %v828 = vrot.slane %v826, 1
  %v829 = vsel %vm433, %v824, %v828
  %v831 = vshrl.u32 %v322, 16
  %v833 = vshll.u32 %v322, 16
  %v835 = vrot.slane %v833, 1
  %v836 = vor.u32 %v831, %v835
  %v838 = vshll.u32 %v430, 16
  %v840 = vrot.slane %v838, 1
  %v841 = vsel %vm433, %v836, %v840
  %v843 = vshrl.u32 %v323, 16
  %v845 = vshll.u32 %v323, 16
  %v847 = vrot.slane %v845, 1
  %v848 = vor.u32 %v843, %v847
  %v850 = vshll.u32 %v431, 16
  %v852 = vrot.slane %v850, 1
  %v853 = vsel %vm433, %v848, %v852
  %v855 = vshrl.u32 %v324, 16
  %v857 = vshll.u32 %v324, 16
  %v859 = vrot.slane %v857, 1
  %v860 = vor.u32 %v855, %v859
  %v862 = vshll.u32 %v432, 16
  %v864 = vrot.slane %v862, 1
  %v865 = vsel %vm433, %v860, %v864
  %866 = vrot.lane.b32.xlu0 %v445, 8
  %v867 = vpop.permute.xlu0 %866
  %868 = vrot.lane.b32.xlu0 %v457, 8
  %v869 = vpop.permute.xlu0 %868
  %870 = vrot.lane.b32.xlu0 %v469, 8
  %v871 = vpop.permute.xlu0 %870
  %872 = vrot.lane.b32.xlu0 %v481, 8
  %v873 = vpop.permute.xlu0 %872
  %874 = vrot.lane.b32.xlu0 %v493, 8
  %v875 = vpop.permute.xlu0 %874
  %876 = vrot.lane.b32.xlu0 %v505, 8
  %v877 = vpop.permute.xlu0 %876
  %878 = vrot.lane.b32.xlu0 %v517, 8
  %v879 = vpop.permute.xlu0 %878
  %880 = vrot.lane.b32.xlu0 %v529, 8
  %v881 = vpop.permute.xlu0 %880
  %882 = vrot.lane.b32.xlu0 %v541, 8
  %v883 = vpop.permute.xlu0 %882
  %884 = vrot.lane.b32.xlu0 %v553, 8
  %v885 = vpop.permute.xlu0 %884
  %886 = vrot.lane.b32.xlu0 %v565, 8
  %v887 = vpop.permute.xlu0 %886
  %888 = vrot.lane.b32.xlu0 %v577, 8
  %v889 = vpop.permute.xlu0 %888
  %890 = vrot.lane.b32.xlu0 %v589, 8
  %v891 = vpop.permute.xlu0 %890
  %892 = vrot.lane.b32.xlu0 %v601, 8
  %v893 = vpop.permute.xlu0 %892
  %894 = vrot.lane.b32.xlu0 %v613, 8
  %v895 = vpop.permute.xlu0 %894
  %896 = vrot.lane.b32.xlu0 %v625, 8
  %v897 = vpop.permute.xlu0 %896
  %898 = vrot.lane.b32.xlu0 %v637, 8
  %v899 = vpop.permute.xlu0 %898
  %900 = vrot.lane.b32.xlu0 %v649, 8
  %v901 = vpop.permute.xlu0 %900
  %902 = vrot.lane.b32.xlu0 %v661, 8
  %v903 = vpop.permute.xlu0 %902
  %904 = vrot.lane.b32.xlu0 %v673, 8
  %v905 = vpop.permute.xlu0 %904
  %906 = vrot.lane.b32.xlu0 %v685, 8
  %v907 = vpop.permute.xlu0 %906
  %908 = vrot.lane.b32.xlu0 %v697, 8
  %v909 = vpop.permute.xlu0 %908
  %910 = vrot.lane.b32.xlu0 %v709, 8
  %v911 = vpop.permute.xlu0 %910
  %912 = vrot.lane.b32.xlu0 %v721, 8
  %v913 = vpop.permute.xlu0 %912
  %914 = vrot.lane.b32.xlu0 %v733, 8
  %v915 = vpop.permute.xlu0 %914
  %916 = vrot.lane.b32.xlu0 %v745, 8
  %v917 = vpop.permute.xlu0 %916
  %918 = vrot.lane.b32.xlu0 %v757, 8
  %v919 = vpop.permute.xlu0 %918
  %920 = vrot.lane.b32.xlu0 %v769, 8
  %v921 = vpop.permute.xlu0 %920
  %922 = vrot.lane.b32.xlu0 %v781, 8
  %v923 = vpop.permute.xlu0 %922
  %924 = vrot.lane.b32.xlu0 %v793, 8
  %v925 = vpop.permute.xlu0 %924
  %926 = vrot.lane.b32.xlu0 %v805, 8
  %v927 = vpop.permute.xlu0 %926
  %928 = vrot.lane.b32.xlu0 %v817, 8
  %v929 = vpop.permute.xlu0 %928
  %930 = vrot.lane.b32.xlu0 %v829, 8
  %v931 = vpop.permute.xlu0 %930
  %932 = vrot.lane.b32.xlu0 %v841, 8
  %v933 = vpop.permute.xlu0 %932
  %934 = vrot.lane.b32.xlu0 %v853, 8
  %v935 = vpop.permute.xlu0 %934
  %936 = vrot.lane.b32.xlu0 %v865, 8
  %v937 = vpop.permute.xlu0 %936
  %vm938 = vcmask 1046528
  %v939 = vrot.slane %v289, 1
  %v940 = vrot.slane %v397, 1
  %v941 = vsel %vm938, %v939, %v940
  %v942 = vrot.slane %v290, 1
  %v943 = vrot.slane %v398, 1
  %v944 = vsel %vm938, %v942, %v943
  %v945 = vrot.slane %v291, 1
  %v946 = vrot.slane %v399, 1
  %v947 = vsel %vm938, %v945, %v946
  %v948 = vrot.slane %v292, 1
  %v949 = vrot.slane %v400, 1
  %v950 = vsel %vm938, %v948, %v949
  %v951 = vrot.slane %v293, 1
  %v952 = vrot.slane %v401, 1
  %v953 = vsel %vm938, %v951, %v952
  %v954 = vrot.slane %v294, 1
  %v955 = vrot.slane %v402, 1
  %v956 = vsel %vm938, %v954, %v955
  %v957 = vrot.slane %v295, 1
  %v958 = vrot.slane %v403, 1
  %v959 = vsel %vm938, %v957, %v958
  %v960 = vrot.slane %v296, 1
  %v961 = vrot.slane %v404, 1
  %v962 = vsel %vm938, %v960, %v961
  %v963 = vrot.slane %v297, 1
  %v964 = vrot.slane %v405, 1
  %v965 = vsel %vm938, %v963, %v964
  %v966 = vrot.slane %v298, 1
  %v967 = vrot.slane %v406, 1
  %v968 = vsel %vm938, %v966, %v967
  %v969 = vrot.slane %v299, 1
  %v970 = vrot.slane %v407, 1
  %v971 = vsel %vm938, %v969, %v970
  %v972 = vrot.slane %v300, 1
  %v973 = vrot.slane %v408, 1
  %v974 = vsel %vm938, %v972, %v973
  %v975 = vrot.slane %v301, 1
  %v976 = vrot.slane %v409, 1
  %v977 = vsel %vm938, %v975, %v976
  %v978 = vrot.slane %v302, 1
  %v979 = vrot.slane %v410, 1
  %v980 = vsel %vm938, %v978, %v979
  %v981 = vrot.slane %v303, 1
  %v982 = vrot.slane %v411, 1
  %v983 = vsel %vm938, %v981, %v982
  %v984 = vrot.slane %v304, 1
  %v985 = vrot.slane %v412, 1
  %v986 = vsel %vm938, %v984, %v985
  %v987 = vrot.slane %v305, 1
  %v988 = vrot.slane %v413, 1
  %v989 = vsel %vm938, %v987, %v988
  %v990 = vrot.slane %v306, 1
  %v991 = vrot.slane %v414, 1
  %v992 = vsel %vm938, %v990, %v991
  %v993 = vrot.slane %v307, 1
  %v994 = vrot.slane %v415, 1
  %v995 = vsel %vm938, %v993, %v994
  %v996 = vrot.slane %v308, 1
  %v997 = vrot.slane %v416, 1
  %v998 = vsel %vm938, %v996, %v997
  %v999 = vrot.slane %v309, 1
  %v1000 = vrot.slane %v417, 1
  %v1001 = vsel %vm938, %v999, %v1000
  %v1002 = vrot.slane %v310, 1
  %v1003 = vrot.slane %v418, 1
  %v1004 = vsel %vm938, %v1002, %v1003
  %v1005 = vrot.slane %v311, 1
  %v1006 = vrot.slane %v419, 1
  %v1007 = vsel %vm938, %v1005, %v1006
  %v1008 = vrot.slane %v312, 1
  %v1009 = vrot.slane %v420, 1
  %v1010 = vsel %vm938, %v1008, %v1009
  %v1011 = vrot.slane %v313, 1
  %v1012 = vrot.slane %v421, 1
  %v1013 = vsel %vm938, %v1011, %v1012
  %v1014 = vrot.slane %v314, 1
  %v1015 = vrot.slane %v422, 1
  %v1016 = vsel %vm938, %v1014, %v1015
  %v1017 = vrot.slane %v315, 1
  %v1018 = vrot.slane %v423, 1
  %v1019 = vsel %vm938, %v1017, %v1018
  %v1020 = vrot.slane %v316, 1
  %v1021 = vrot.slane %v424, 1
  %v1022 = vsel %vm938, %v1020, %v1021
  %v1023 = vrot.slane %v317, 1
  %v1024 = vrot.slane %v425, 1
  %v1025 = vsel %vm938, %v1023, %v1024
  %v1026 = vrot.slane %v318, 1
  %v1027 = vrot.slane %v426, 1
  %v1028 = vsel %vm938, %v1026, %v1027
  %v1029 = vrot.slane %v319, 1
  %v1030 = vrot.slane %v427, 1
  %v1031 = vsel %vm938, %v1029, %v1030
  %v1032 = vrot.slane %v320, 1
  %v1033 = vrot.slane %v428, 1
  %v1034 = vsel %vm938, %v1032, %v1033
  %v1035 = vrot.slane %v321, 1
  %v1036 = vrot.slane %v429, 1
  %v1037 = vsel %vm938, %v1035, %v1036
  %v1038 = vrot.slane %v322, 1
  %v1039 = vrot.slane %v430, 1
  %v1040 = vsel %vm938, %v1038, %v1039
  %v1041 = vrot.slane %v323, 1
  %v1042 = vrot.slane %v431, 1
  %v1043 = vsel %vm938, %v1041, %v1042
  %v1044 = vrot.slane %v324, 1
  %v1045 = vrot.slane %v432, 1
  %v1046 = vsel %vm938, %v1044, %v1045
  %1047 = vrot.lane.b32.xlu0 %v941, 16
  %v1048 = vpop.permute.xlu0 %1047
  %1049 = vrot.lane.b32.xlu0 %v944, 16
  %v1050 = vpop.permute.xlu0 %1049
  %1051 = vrot.lane.b32.xlu0 %v947, 16
  %v1052 = vpop.permute.xlu0 %1051
  %1053 = vrot.lane.b32.xlu0 %v950, 16
  %v1054 = vpop.permute.xlu0 %1053
  %1055 = vrot.lane.b32.xlu0 %v953, 16
  %v1056 = vpop.permute.xlu0 %1055
  %1057 = vrot.lane.b32.xlu0 %v956, 16
  %v1058 = vpop.permute.xlu0 %1057
  %1059 = vrot.lane.b32.xlu0 %v959, 16
  %v1060 = vpop.permute.xlu0 %1059
  %1061 = vrot.lane.b32.xlu0 %v962, 16
  %v1062 = vpop.permute.xlu0 %1061
  %1063 = vrot.lane.b32.xlu0 %v965, 16
  %v1064 = vpop.permute.xlu0 %1063
  %1065 = vrot.lane.b32.xlu0 %v968, 16
  %v1066 = vpop.permute.xlu0 %1065
  %1067 = vrot.lane.b32.xlu0 %v971, 16
  %v1068 = vpop.permute.xlu0 %1067
  %1069 = vrot.lane.b32.xlu0 %v974, 16
  %v1070 = vpop.permute.xlu0 %1069
  %1071 = vrot.lane.b32.xlu0 %v977, 16
  %v1072 = vpop.permute.xlu0 %1071
  %1073 = vrot.lane.b32.xlu0 %v980, 16
  %v1074 = vpop.permute.xlu0 %1073
  %1075 = vrot.lane.b32.xlu0 %v983, 16
  %v1076 = vpop.permute.xlu0 %1075
  %1077 = vrot.lane.b32.xlu0 %v986, 16
  %v1078 = vpop.permute.xlu0 %1077
  %1079 = vrot.lane.b32.xlu0 %v989, 16
  %v1080 = vpop.permute.xlu0 %1079
  %1081 = vrot.lane.b32.xlu0 %v992, 16
  %v1082 = vpop.permute.xlu0 %1081
  %1083 = vrot.lane.b32.xlu0 %v995, 16
  %v1084 = vpop.permute.xlu0 %1083
  %1085 = vrot.lane.b32.xlu0 %v998, 16
  %v1086 = vpop.permute.xlu0 %1085
  %1087 = vrot.lane.b32.xlu0 %v1001, 16
  %v1088 = vpop.permute.xlu0 %1087
  %1089 = vrot.lane.b32.xlu0 %v1004, 16
  %v1090 = vpop.permute.xlu0 %1089
  %1091 = vrot.lane.b32.xlu0 %v1007, 16
  %v1092 = vpop.permute.xlu0 %1091
  %1093 = vrot.lane.b32.xlu0 %v1010, 16
  %v1094 = vpop.permute.xlu0 %1093
  %1095 = vrot.lane.b32.xlu0 %v1013, 16
  %v1096 = vpop.permute.xlu0 %1095
  %1097 = vrot.lane.b32.xlu0 %v1016, 16
  %v1098 = vpop.permute.xlu0 %1097
  %1099 = vrot.lane.b32.xlu0 %v1019, 16
  %v1100 = vpop.permute.xlu0 %1099
  %1101 = vrot.lane.b32.xlu0 %v1022, 16
  %v1102 = vpop.permute.xlu0 %1101
  %1103 = vrot.lane.b32.xlu0 %v1025, 16
  %v1104 = vpop.permute.xlu0 %1103
  %1105 = vrot.lane.b32.xlu0 %v1028, 16
  %v1106 = vpop.permute.xlu0 %1105
  %1107 = vrot.lane.b32.xlu0 %v1031, 16
  %v1108 = vpop.permute.xlu0 %1107
  %1109 = vrot.lane.b32.xlu0 %v1034, 16
  %v1110 = vpop.permute.xlu0 %1109
  %1111 = vrot.lane.b32.xlu0 %v1037, 16
  %v1112 = vpop.permute.xlu0 %1111
  %1113 = vrot.lane.b32.xlu0 %v1040, 16
  %v1114 = vpop.permute.xlu0 %1113
  %1115 = vrot.lane.b32.xlu0 %v1043, 16
  %v1116 = vpop.permute.xlu0 %1115
  %1117 = vrot.lane.b32.xlu0 %v1046, 16
  %v1118 = vpop.permute.xlu0 %1117
  %v1123 = vunpack.c.l.b16 %v79
  %v1124 = vunpack.c.l.b16 %v80
  %v1125 = vunpack.c.l.b16 %v139
  %v1126 = vunpack.c.l.b16 %v140
  %v1127 = vpack.c.b16 %v1124, %v1123
  %v1128 = vpack.c.b16 %v1126, %v1125
  %1129 = vrot.lane.b32.xlu0 %v290, 24
  %v1130 = vpop.permute.xlu0 %1129
  %1131 = vrot.lane.b32.xlu0 %v291, 24
  %v1132 = vpop.permute.xlu0 %1131
  %1133 = vrot.lane.b32.xlu0 %v292, 24
  %v1134 = vpop.permute.xlu0 %1133
  %1135 = vrot.lane.b32.xlu0 %v293, 24
  %v1136 = vpop.permute.xlu0 %1135
  %1137 = vrot.lane.b32.xlu0 %v294, 24
  %v1138 = vpop.permute.xlu0 %1137
  %1139 = vrot.lane.b32.xlu0 %v295, 24
  %v1140 = vpop.permute.xlu0 %1139
  %1141 = vrot.lane.b32.xlu0 %v296, 24
  %v1142 = vpop.permute.xlu0 %1141
  %1143 = vrot.lane.b32.xlu0 %v297, 24
  %v1144 = vpop.permute.xlu0 %1143
  %1145 = vrot.lane.b32.xlu0 %v298, 24
  %v1146 = vpop.permute.xlu0 %1145
  %1147 = vrot.lane.b32.xlu0 %v299, 24
  %v1148 = vpop.permute.xlu0 %1147
  %1149 = vrot.lane.b32.xlu0 %v300, 24
  %v1150 = vpop.permute.xlu0 %1149
  %1151 = vrot.lane.b32.xlu0 %v301, 24
  %v1152 = vpop.permute.xlu0 %1151
  %1153 = vrot.lane.b32.xlu0 %v302, 24
  %v1154 = vpop.permute.xlu0 %1153
  %1155 = vrot.lane.b32.xlu0 %v303, 24
  %v1156 = vpop.permute.xlu0 %1155
  %1157 = vrot.lane.b32.xlu0 %v304, 24
  %v1158 = vpop.permute.xlu0 %1157
  %1159 = vrot.lane.b32.xlu0 %v305, 24
  %v1160 = vpop.permute.xlu0 %1159
  %1161 = vrot.lane.b32.xlu0 %v306, 24
  %v1162 = vpop.permute.xlu0 %1161
  %1163 = vrot.lane.b32.xlu0 %v1127, 24
  %v1164 = vpop.permute.xlu0 %1163
  %1165 = vrot.lane.b32.xlu0 %v308, 24
  %v1166 = vpop.permute.xlu0 %1165
  %1167 = vrot.lane.b32.xlu0 %v309, 24
  %v1168 = vpop.permute.xlu0 %1167
  %1169 = vrot.lane.b32.xlu0 %v310, 24
  %v1170 = vpop.permute.xlu0 %1169
  %1171 = vrot.lane.b32.xlu0 %v311, 24
  %v1172 = vpop.permute.xlu0 %1171
  %1173 = vrot.lane.b32.xlu0 %v312, 24
  %v1174 = vpop.permute.xlu0 %1173
  %1175 = vrot.lane.b32.xlu0 %v313, 24
  %v1176 = vpop.permute.xlu0 %1175
  %1177 = vrot.lane.b32.xlu0 %v314, 24
  %v1178 = vpop.permute.xlu0 %1177
  %1179 = vrot.lane.b32.xlu0 %v315, 24
  %v1180 = vpop.permute.xlu0 %1179
  %1181 = vrot.lane.b32.xlu0 %v316, 24
  %v1182 = vpop.permute.xlu0 %1181
  %1183 = vrot.lane.b32.xlu0 %v317, 24
  %v1184 = vpop.permute.xlu0 %1183
  %1185 = vrot.lane.b32.xlu0 %v318, 24
  %v1186 = vpop.permute.xlu0 %1185
  %1187 = vrot.lane.b32.xlu0 %v319, 24
  %v1188 = vpop.permute.xlu0 %1187
  %1189 = vrot.lane.b32.xlu0 %v320, 24
  %v1190 = vpop.permute.xlu0 %1189
  %1191 = vrot.lane.b32.xlu0 %v321, 24
  %v1192 = vpop.permute.xlu0 %1191
  %1193 = vrot.lane.b32.xlu0 %v322, 24
  %v1194 = vpop.permute.xlu0 %1193
  %1195 = vrot.lane.b32.xlu0 %v323, 24
  %v1196 = vpop.permute.xlu0 %1195
  %1197 = vrot.lane.b32.xlu0 %v324, 24
  %v1198 = vpop.permute.xlu0 %1197
  %1199 = vrot.lane.b32.xlu0 %v1128, 24
  %v1200 = vpop.permute.xlu0 %1199
  %v1203 = vunpack.c.l.b16 %v81
  %v1204 = vunpack.c.l.b16 %v141
  %v1205 = vpack.c.b16 %v1203, %v1203
  %v1206 = vpack.c.b16 %v1204, %v1204
  %v1208 = vshrl.u32 %v1127, 16
  %v1210 = vshll.u32 %v1127, 16
  %v1212 = vrot.slane %v1210, 1
  %v1213 = vor.u32 %v1208, %v1212
  %v1215 = vshll.u32 %v1205, 16
  %v1217 = vrot.slane %v1215, 1
  %v1218 = vsel %vm433, %v1213, %v1217
  %v1220 = vshrl.u32 %v1128, 16
  %v1222 = vshll.u32 %v1128, 16
  %v1224 = vrot.slane %v1222, 1
  %v1225 = vor.u32 %v1220, %v1224
  %v1227 = vshll.u32 %v1206, 16
  %v1229 = vrot.slane %v1227, 1
  %v1230 = vsel %vm433, %v1225, %v1229
  %1231 = vrot.lane.b32.xlu0 %v457, 32
  %v1232 = vpop.permute.xlu0 %1231
  %1233 = vrot.lane.b32.xlu0 %v469, 32
  %v1234 = vpop.permute.xlu0 %1233
  %1235 = vrot.lane.b32.xlu0 %v481, 32
  %v1236 = vpop.permute.xlu0 %1235
  %1237 = vrot.lane.b32.xlu0 %v493, 32
  %v1238 = vpop.permute.xlu0 %1237
  %1239 = vrot.lane.b32.xlu0 %v505, 32
  %v1240 = vpop.permute.xlu0 %1239
  %1241 = vrot.lane.b32.xlu0 %v517, 32
  %v1242 = vpop.permute.xlu0 %1241
  %1243 = vrot.lane.b32.xlu0 %v529, 32
  %v1244 = vpop.permute.xlu0 %1243
  %1245 = vrot.lane.b32.xlu0 %v541, 32
  %v1246 = vpop.permute.xlu0 %1245
  %1247 = vrot.lane.b32.xlu0 %v553, 32
  %v1248 = vpop.permute.xlu0 %1247
  %1249 = vrot.lane.b32.xlu0 %v565, 32
  %v1250 = vpop.permute.xlu0 %1249
  %1251 = vrot.lane.b32.xlu0 %v577, 32
  %v1252 = vpop.permute.xlu0 %1251
  %1253 = vrot.lane.b32.xlu0 %v589, 32
  %v1254 = vpop.permute.xlu0 %1253
  %1255 = vrot.lane.b32.xlu0 %v601, 32
  %v1256 = vpop.permute.xlu0 %1255
  %1257 = vrot.lane.b32.xlu0 %v613, 32
  %v1258 = vpop.permute.xlu0 %1257
  %1259 = vrot.lane.b32.xlu0 %v625, 32
  %v1260 = vpop.permute.xlu0 %1259
  %1261 = vrot.lane.b32.xlu0 %v637, 32
  %v1262 = vpop.permute.xlu0 %1261
  %1263 = vrot.lane.b32.xlu0 %v649, 32
  %v1264 = vpop.permute.xlu0 %1263
  %1265 = vrot.lane.b32.xlu0 %v1218, 32
  %v1266 = vpop.permute.xlu0 %1265
  %1267 = vrot.lane.b32.xlu0 %v673, 32
  %v1268 = vpop.permute.xlu0 %1267
  %1269 = vrot.lane.b32.xlu0 %v685, 32
  %v1270 = vpop.permute.xlu0 %1269
  %1271 = vrot.lane.b32.xlu0 %v697, 32
  %v1272 = vpop.permute.xlu0 %1271
  %1273 = vrot.lane.b32.xlu0 %v709, 32
  %v1274 = vpop.permute.xlu0 %1273
  %1275 = vrot.lane.b32.xlu0 %v721, 32
  %v1276 = vpop.permute.xlu0 %1275
  %1277 = vrot.lane.b32.xlu0 %v733, 32
  %v1278 = vpop.permute.xlu0 %1277
  %1279 = vrot.lane.b32.xlu0 %v745, 32
  %v1280 = vpop.permute.xlu0 %1279
  %1281 = vrot.lane.b32.xlu0 %v757, 32
  %v1282 = vpop.permute.xlu0 %1281
  %1283 = vrot.lane.b32.xlu0 %v769, 32
  %v1284 = vpop.permute.xlu0 %1283
  %1285 = vrot.lane.b32.xlu0 %v781, 32
  %v1286 = vpop.permute.xlu0 %1285
  %1287 = vrot.lane.b32.xlu0 %v793, 32
  %v1288 = vpop.permute.xlu0 %1287
  %1289 = vrot.lane.b32.xlu0 %v805, 32
  %v1290 = vpop.permute.xlu0 %1289
  %1291 = vrot.lane.b32.xlu0 %v817, 32
  %v1292 = vpop.permute.xlu0 %1291
  %1293 = vrot.lane.b32.xlu0 %v829, 32
  %v1294 = vpop.permute.xlu0 %1293
  %1295 = vrot.lane.b32.xlu0 %v841, 32
  %v1296 = vpop.permute.xlu0 %1295
  %1297 = vrot.lane.b32.xlu0 %v853, 32
  %v1298 = vpop.permute.xlu0 %1297
  %1299 = vrot.lane.b32.xlu0 %v865, 32
  %v1300 = vpop.permute.xlu0 %1299
  %1301 = vrot.lane.b32.xlu0 %v1230, 32
  %v1302 = vpop.permute.xlu0 %1301
  %v1303 = vrot.slane %v1127, 1
  %v1304 = vrot.slane %v1205, 1
  %v1305 = vsel %vm938, %v1303, %v1304
  %v1306 = vrot.slane %v1128, 1
  %v1307 = vrot.slane %v1206, 1
  %v1308 = vsel %vm938, %v1306, %v1307
  %1309 = vrot.lane.b32.xlu0 %v944, 40
  %v1310 = vpop.permute.xlu0 %1309
  %1311 = vrot.lane.b32.xlu0 %v947, 40
  %v1312 = vpop.permute.xlu0 %1311
  %1313 = vrot.lane.b32.xlu0 %v950, 40
  %v1314 = vpop.permute.xlu0 %1313
  %1315 = vrot.lane.b32.xlu0 %v953, 40
  %v1316 = vpop.permute.xlu0 %1315
  %1317 = vrot.lane.b32.xlu0 %v956, 40
  %v1318 = vpop.permute.xlu0 %1317
  %1319 = vrot.lane.b32.xlu0 %v959, 40
  %v1320 = vpop.permute.xlu0 %1319
  %1321 = vrot.lane.b32.xlu0 %v962, 40
  %v1322 = vpop.permute.xlu0 %1321
  %1323 = vrot.lane.b32.xlu0 %v965, 40
  %v1324 = vpop.permute.xlu0 %1323
  %1325 = vrot.lane.b32.xlu0 %v968, 40
  %v1326 = vpop.permute.xlu0 %1325
  %1327 = vrot.lane.b32.xlu0 %v971, 40
  %v1328 = vpop.permute.xlu0 %1327
  %1329 = vrot.lane.b32.xlu0 %v974, 40
  %v1330 = vpop.permute.xlu0 %1329
  %1331 = vrot.lane.b32.xlu0 %v977, 40
  %v1332 = vpop.permute.xlu0 %1331
  %1333 = vrot.lane.b32.xlu0 %v980, 40
  %v1334 = vpop.permute.xlu0 %1333
  %1335 = vrot.lane.b32.xlu0 %v983, 40
  %v1336 = vpop.permute.xlu0 %1335
  %1337 = vrot.lane.b32.xlu0 %v986, 40
  %v1338 = vpop.permute.xlu0 %1337
  %1339 = vrot.lane.b32.xlu0 %v989, 40
  %v1340 = vpop.permute.xlu0 %1339
  %1341 = vrot.lane.b32.xlu0 %v992, 40
  %v1342 = vpop.permute.xlu0 %1341
  %1343 = vrot.lane.b32.xlu0 %v1305, 40
  %v1344 = vpop.permute.xlu0 %1343
  %1345 = vrot.lane.b32.xlu0 %v998, 40
  %v1346 = vpop.permute.xlu0 %1345
  %1347 = vrot.lane.b32.xlu0 %v1001, 40
  %v1348 = vpop.permute.xlu0 %1347
  %1349 = vrot.lane.b32.xlu0 %v1004, 40
  %v1350 = vpop.permute.xlu0 %1349
  %1351 = vrot.lane.b32.xlu0 %v1007, 40
  %v1352 = vpop.permute.xlu0 %1351
  %1353 = vrot.lane.b32.xlu0 %v1010, 40
  %v1354 = vpop.permute.xlu0 %1353
  %1355 = vrot.lane.b32.xlu0 %v1013, 40
  %v1356 = vpop.permute.xlu0 %1355
  %1357 = vrot.lane.b32.xlu0 %v1016, 40
  %v1358 = vpop.permute.xlu0 %1357
  %1359 = vrot.lane.b32.xlu0 %v1019, 40
  %v1360 = vpop.permute.xlu0 %1359
  %1361 = vrot.lane.b32.xlu0 %v1022, 40
  %v1362 = vpop.permute.xlu0 %1361
  %1363 = vrot.lane.b32.xlu0 %v1025, 40
  %v1364 = vpop.permute.xlu0 %1363
  %1365 = vrot.lane.b32.xlu0 %v1028, 40
  %v1366 = vpop.permute.xlu0 %1365
  %1367 = vrot.lane.b32.xlu0 %v1031, 40
  %v1368 = vpop.permute.xlu0 %1367
  %1369 = vrot.lane.b32.xlu0 %v1034, 40
  %v1370 = vpop.permute.xlu0 %1369
  %1371 = vrot.lane.b32.xlu0 %v1037, 40
  %v1372 = vpop.permute.xlu0 %1371
  %1373 = vrot.lane.b32.xlu0 %v1040, 40
  %v1374 = vpop.permute.xlu0 %1373
  %1375 = vrot.lane.b32.xlu0 %v1043, 40
  %v1376 = vpop.permute.xlu0 %1375
  %1377 = vrot.lane.b32.xlu0 %v1046, 40
  %v1378 = vpop.permute.xlu0 %1377
  %1379 = vrot.lane.b32.xlu0 %v1308, 40
  %v1380 = vpop.permute.xlu0 %1379
  %v1385 = vunpack.c.l.b16 %v82
  %v1386 = vunpack.c.l.b16 %v83
  %v1387 = vunpack.c.l.b16 %v142
  %v1388 = vunpack.c.l.b16 %v143
  %v1389 = vpack.c.b16 %v1386, %v1385
  %v1390 = vpack.c.b16 %v1388, %v1387
  %1391 = vrot.lane.b32.xlu0 %v291, 48
  %v1392 = vpop.permute.xlu0 %1391
  %1393 = vrot.lane.b32.xlu0 %v292, 48
  %v1394 = vpop.permute.xlu0 %1393
  %1395 = vrot.lane.b32.xlu0 %v293, 48
  %v1396 = vpop.permute.xlu0 %1395
  %1397 = vrot.lane.b32.xlu0 %v294, 48
  %v1398 = vpop.permute.xlu0 %1397
  %1399 = vrot.lane.b32.xlu0 %v295, 48
  %v1400 = vpop.permute.xlu0 %1399
  %1401 = vrot.lane.b32.xlu0 %v296, 48
  %v1402 = vpop.permute.xlu0 %1401
  %1403 = vrot.lane.b32.xlu0 %v297, 48
  %v1404 = vpop.permute.xlu0 %1403
  %1405 = vrot.lane.b32.xlu0 %v298, 48
  %v1406 = vpop.permute.xlu0 %1405
  %1407 = vrot.lane.b32.xlu0 %v299, 48
  %v1408 = vpop.permute.xlu0 %1407
  %1409 = vrot.lane.b32.xlu0 %v300, 48
  %v1410 = vpop.permute.xlu0 %1409
  %1411 = vrot.lane.b32.xlu0 %v301, 48
  %v1412 = vpop.permute.xlu0 %1411
  %1413 = vrot.lane.b32.xlu0 %v302, 48
  %v1414 = vpop.permute.xlu0 %1413
  %1415 = vrot.lane.b32.xlu0 %v303, 48
  %v1416 = vpop.permute.xlu0 %1415
  %1417 = vrot.lane.b32.xlu0 %v304, 48
  %v1418 = vpop.permute.xlu0 %1417
  %1419 = vrot.lane.b32.xlu0 %v305, 48
  %v1420 = vpop.permute.xlu0 %1419
  %1421 = vrot.lane.b32.xlu0 %v306, 48
  %v1422 = vpop.permute.xlu0 %1421
  %1423 = vrot.lane.b32.xlu0 %v1127, 48
  %v1424 = vpop.permute.xlu0 %1423
  %1425 = vrot.lane.b32.xlu0 %v1389, 48
  %v1426 = vpop.permute.xlu0 %1425
  %1427 = vrot.lane.b32.xlu0 %v309, 48
  %v1428 = vpop.permute.xlu0 %1427
  %1429 = vrot.lane.b32.xlu0 %v310, 48
  %v1430 = vpop.permute.xlu0 %1429
  %1431 = vrot.lane.b32.xlu0 %v311, 48
  %v1432 = vpop.permute.xlu0 %1431
  %1433 = vrot.lane.b32.xlu0 %v312, 48
  %v1434 = vpop.permute.xlu0 %1433
  %1435 = vrot.lane.b32.xlu0 %v313, 48
  %v1436 = vpop.permute.xlu0 %1435
  %1437 = vrot.lane.b32.xlu0 %v314, 48
  %v1438 = vpop.permute.xlu0 %1437
  %1439 = vrot.lane.b32.xlu0 %v315, 48
  %v1440 = vpop.permute.xlu0 %1439
  %1441 = vrot.lane.b32.xlu0 %v316, 48
  %v1442 = vpop.permute.xlu0 %1441
  %1443 = vrot.lane.b32.xlu0 %v317, 48
  %v1444 = vpop.permute.xlu0 %1443
  %1445 = vrot.lane.b32.xlu0 %v318, 48
  %v1446 = vpop.permute.xlu0 %1445
  %1447 = vrot.lane.b32.xlu0 %v319, 48
  %v1448 = vpop.permute.xlu0 %1447
  %1449 = vrot.lane.b32.xlu0 %v320, 48
  %v1450 = vpop.permute.xlu0 %1449
  %1451 = vrot.lane.b32.xlu0 %v321, 48
  %v1452 = vpop.permute.xlu0 %1451
  %1453 = vrot.lane.b32.xlu0 %v322, 48
  %v1454 = vpop.permute.xlu0 %1453
  %1455 = vrot.lane.b32.xlu0 %v323, 48
  %v1456 = vpop.permute.xlu0 %1455
  %1457 = vrot.lane.b32.xlu0 %v324, 48
  %v1458 = vpop.permute.xlu0 %1457
  %1459 = vrot.lane.b32.xlu0 %v1128, 48
  %v1460 = vpop.permute.xlu0 %1459
  %1461 = vrot.lane.b32.xlu0 %v1390, 48
  %v1462 = vpop.permute.xlu0 %1461
  %v1465 = vunpack.c.l.b16 %v84
  %v1466 = vunpack.c.l.b16 %v144
  %v1467 = vpack.c.b16 %v1465, %v1465
  %v1468 = vpack.c.b16 %v1466, %v1466
  %v1470 = vshrl.u32 %v1389, 16
  %v1472 = vshll.u32 %v1389, 16
  %v1474 = vrot.slane %v1472, 1
  %v1475 = vor.u32 %v1470, %v1474
  %v1477 = vshll.u32 %v1467, 16
  %v1479 = vrot.slane %v1477, 1
  %v1480 = vsel %vm433, %v1475, %v1479
  %v1482 = vshrl.u32 %v1390, 16
  %v1484 = vshll.u32 %v1390, 16
  %v1486 = vrot.slane %v1484, 1
  %v1487 = vor.u32 %v1482, %v1486
  %v1489 = vshll.u32 %v1468, 16
  %v1491 = vrot.slane %v1489, 1
  %v1492 = vsel %vm433, %v1487, %v1491
  %1493 = vrot.lane.b32.xlu0 %v469, 56
  %v1494 = vpop.permute.xlu0 %1493
  %1495 = vrot.lane.b32.xlu0 %v481, 56
  %v1496 = vpop.permute.xlu0 %1495
  %1497 = vrot.lane.b32.xlu0 %v493, 56
  %v1498 = vpop.permute.xlu0 %1497
  %1499 = vrot.lane.b32.xlu0 %v505, 56
  %v1500 = vpop.permute.xlu0 %1499
  %1501 = vrot.lane.b32.xlu0 %v517, 56
  %v1502 = vpop.permute.xlu0 %1501
  %1503 = vrot.lane.b32.xlu0 %v529, 56
  %v1504 = vpop.permute.xlu0 %1503
  %1505 = vrot.lane.b32.xlu0 %v541, 56
  %v1506 = vpop.permute.xlu0 %1505
  %1507 = vrot.lane.b32.xlu0 %v553, 56
  %v1508 = vpop.permute.xlu0 %1507
  %1509 = vrot.lane.b32.xlu0 %v565, 56
  %v1510 = vpop.permute.xlu0 %1509
  %1511 = vrot.lane.b32.xlu0 %v577, 56
  %v1512 = vpop.permute.xlu0 %1511
  %1513 = vrot.lane.b32.xlu0 %v589, 56
  %v1514 = vpop.permute.xlu0 %1513
  %1515 = vrot.lane.b32.xlu0 %v601, 56
  %v1516 = vpop.permute.xlu0 %1515
  %1517 = vrot.lane.b32.xlu0 %v613, 56
  %v1518 = vpop.permute.xlu0 %1517
  %1519 = vrot.lane.b32.xlu0 %v625, 56
  %v1520 = vpop.permute.xlu0 %1519
  %1521 = vrot.lane.b32.xlu0 %v637, 56
  %v1522 = vpop.permute.xlu0 %1521
  %1523 = vrot.lane.b32.xlu0 %v649, 56
  %v1524 = vpop.permute.xlu0 %1523
  %1525 = vrot.lane.b32.xlu0 %v1218, 56
  %v1526 = vpop.permute.xlu0 %1525
  %1527 = vrot.lane.b32.xlu0 %v1480, 56
  %v1528 = vpop.permute.xlu0 %1527
  %1529 = vrot.lane.b32.xlu0 %v685, 56
  %v1530 = vpop.permute.xlu0 %1529
  %1531 = vrot.lane.b32.xlu0 %v697, 56
  %v1532 = vpop.permute.xlu0 %1531
  %1533 = vrot.lane.b32.xlu0 %v709, 56
  %v1534 = vpop.permute.xlu0 %1533
  %1535 = vrot.lane.b32.xlu0 %v721, 56
  %v1536 = vpop.permute.xlu0 %1535
  %1537 = vrot.lane.b32.xlu0 %v733, 56
  %v1538 = vpop.permute.xlu0 %1537
  %1539 = vrot.lane.b32.xlu0 %v745, 56
  %v1540 = vpop.permute.xlu0 %1539
  %1541 = vrot.lane.b32.xlu0 %v757, 56
  %v1542 = vpop.permute.xlu0 %1541
  %1543 = vrot.lane.b32.xlu0 %v769, 56
  %v1544 = vpop.permute.xlu0 %1543
  %1545 = vrot.lane.b32.xlu0 %v781, 56
  %v1546 = vpop.permute.xlu0 %1545
  %1547 = vrot.lane.b32.xlu0 %v793, 56
  %v1548 = vpop.permute.xlu0 %1547
  %1549 = vrot.lane.b32.xlu0 %v805, 56
  %v1550 = vpop.permute.xlu0 %1549
  %1551 = vrot.lane.b32.xlu0 %v817, 56
  %v1552 = vpop.permute.xlu0 %1551
  %1553 = vrot.lane.b32.xlu0 %v829, 56
  %v1554 = vpop.permute.xlu0 %1553
  %1555 = vrot.lane.b32.xlu0 %v841, 56
  %v1556 = vpop.permute.xlu0 %1555
  %1557 = vrot.lane.b32.xlu0 %v853, 56
  %v1558 = vpop.permute.xlu0 %1557
  %1559 = vrot.lane.b32.xlu0 %v865, 56
  %v1560 = vpop.permute.xlu0 %1559
  %1561 = vrot.lane.b32.xlu0 %v1230, 56
  %v1562 = vpop.permute.xlu0 %1561
  %1563 = vrot.lane.b32.xlu0 %v1492, 56
  %v1564 = vpop.permute.xlu0 %1563
  %v1565 = vrot.slane %v1389, 1
  %v1566 = vrot.slane %v1467, 1
  %v1567 = vsel %vm938, %v1565, %v1566
  %v1568 = vrot.slane %v1390, 1
  %v1569 = vrot.slane %v1468, 1
  %v1570 = vsel %vm938, %v1568, %v1569
  %1571 = vrot.lane.b32.xlu0 %v947, 64
  %v1572 = vpop.permute.xlu0 %1571
  %1573 = vrot.lane.b32.xlu0 %v950, 64
  %v1574 = vpop.permute.xlu0 %1573
  %1575 = vrot.lane.b32.xlu0 %v953, 64
  %v1576 = vpop.permute.xlu0 %1575
  %1577 = vrot.lane.b32.xlu0 %v956, 64
  %v1578 = vpop.permute.xlu0 %1577
  %1579 = vrot.lane.b32.xlu0 %v959, 64
  %v1580 = vpop.permute.xlu0 %1579
  %1581 = vrot.lane.b32.xlu0 %v962, 64
  %v1582 = vpop.permute.xlu0 %1581
  %1583 = vrot.lane.b32.xlu0 %v965, 64
  %v1584 = vpop.permute.xlu0 %1583
  %1585 = vrot.lane.b32.xlu0 %v968, 64
  %v1586 = vpop.permute.xlu0 %1585
  %1587 = vrot.lane.b32.xlu0 %v971, 64
  %v1588 = vpop.permute.xlu0 %1587
  %1589 = vrot.lane.b32.xlu0 %v974, 64
  %v1590 = vpop.permute.xlu0 %1589
  %1591 = vrot.lane.b32.xlu0 %v977, 64
  %v1592 = vpop.permute.xlu0 %1591
  %1593 = vrot.lane.b32.xlu0 %v980, 64
  %v1594 = vpop.permute.xlu0 %1593
  %1595 = vrot.lane.b32.xlu0 %v983, 64
  %v1596 = vpop.permute.xlu0 %1595
  %1597 = vrot.lane.b32.xlu0 %v986, 64
  %v1598 = vpop.permute.xlu0 %1597
  %1599 = vrot.lane.b32.xlu0 %v989, 64
  %v1600 = vpop.permute.xlu0 %1599
  %1601 = vrot.lane.b32.xlu0 %v992, 64
  %v1602 = vpop.permute.xlu0 %1601
  %1603 = vrot.lane.b32.xlu0 %v1305, 64
  %v1604 = vpop.permute.xlu0 %1603
  %1605 = vrot.lane.b32.xlu0 %v1567, 64
  %v1606 = vpop.permute.xlu0 %1605
  %1607 = vrot.lane.b32.xlu0 %v1001, 64
  %v1608 = vpop.permute.xlu0 %1607
  %1609 = vrot.lane.b32.xlu0 %v1004, 64
  %v1610 = vpop.permute.xlu0 %1609
  %1611 = vrot.lane.b32.xlu0 %v1007, 64
  %v1612 = vpop.permute.xlu0 %1611
  %1613 = vrot.lane.b32.xlu0 %v1010, 64
  %v1614 = vpop.permute.xlu0 %1613
  %1615 = vrot.lane.b32.xlu0 %v1013, 64
  %v1616 = vpop.permute.xlu0 %1615
  %1617 = vrot.lane.b32.xlu0 %v1016, 64
  %v1618 = vpop.permute.xlu0 %1617
  %1619 = vrot.lane.b32.xlu0 %v1019, 64
  %v1620 = vpop.permute.xlu0 %1619
  %1621 = vrot.lane.b32.xlu0 %v1022, 64
  %v1622 = vpop.permute.xlu0 %1621
  %1623 = vrot.lane.b32.xlu0 %v1025, 64
  %v1624 = vpop.permute.xlu0 %1623
  %1625 = vrot.lane.b32.xlu0 %v1028, 64
  %v1626 = vpop.permute.xlu0 %1625
  %1627 = vrot.lane.b32.xlu0 %v1031, 64
  %v1628 = vpop.permute.xlu0 %1627
  %1629 = vrot.lane.b32.xlu0 %v1034, 64
  %v1630 = vpop.permute.xlu0 %1629
  %1631 = vrot.lane.b32.xlu0 %v1037, 64
  %v1632 = vpop.permute.xlu0 %1631
  %1633 = vrot.lane.b32.xlu0 %v1040, 64
  %v1634 = vpop.permute.xlu0 %1633
  %1635 = vrot.lane.b32.xlu0 %v1043, 64
  %v1636 = vpop.permute.xlu0 %1635
  %1637 = vrot.lane.b32.xlu0 %v1046, 64
  %v1638 = vpop.permute.xlu0 %1637
  %1639 = vrot.lane.b32.xlu0 %v1308, 64
  %v1640 = vpop.permute.xlu0 %1639
  %1641 = vrot.lane.b32.xlu0 %v1570, 64
  %v1642 = vpop.permute.xlu0 %1641
  %vm1643 = vcmask 64512
  %v1645 = vsel %vm1643, %v289, %v867
  %v1647 = vsel %vm1643, %v290, %v869
  %v1649 = vsel %vm1643, %v291, %v871
  %v1651 = vsel %vm1643, %v292, %v873
  %v1653 = vsel %vm1643, %v293, %v875
  %v1655 = vsel %vm1643, %v294, %v877
  %v1657 = vsel %vm1643, %v295, %v879
  %v1659 = vsel %vm1643, %v296, %v881
  %v1661 = vsel %vm1643, %v297, %v883
  %v1663 = vsel %vm1643, %v298, %v885
  %v1665 = vsel %vm1643, %v299, %v887
  %v1667 = vsel %vm1643, %v300, %v889
  %v1669 = vsel %vm1643, %v301, %v891
  %v1671 = vsel %vm1643, %v302, %v893
  %v1673 = vsel %vm1643, %v303, %v895
  %v1675 = vsel %vm1643, %v304, %v897
  %v1677 = vsel %vm1643, %v305, %v899
  %v1679 = vsel %vm1643, %v306, %v901
  %v1681 = vsel %vm1643, %v307, %v903
  %v1683 = vsel %vm1643, %v308, %v905
  %v1685 = vsel %vm1643, %v309, %v907
  %v1687 = vsel %vm1643, %v310, %v909
  %v1689 = vsel %vm1643, %v311, %v911
  %v1691 = vsel %vm1643, %v312, %v913
  %v1693 = vsel %vm1643, %v313, %v915
  %v1695 = vsel %vm1643, %v314, %v917
  %v1697 = vsel %vm1643, %v315, %v919
  %v1699 = vsel %vm1643, %v316, %v921
  %v1701 = vsel %vm1643, %v317, %v923
  %v1703 = vsel %vm1643, %v318, %v925
  %v1705 = vsel %vm1643, %v319, %v927
  %v1707 = vsel %vm1643, %v320, %v929
  %v1709 = vsel %vm1643, %v321, %v931
  %v1711 = vsel %vm1643, %v322, %v933
  %v1713 = vsel %vm1643, %v323, %v935
  %v1715 = vsel %vm1643, %v324, %v937
  %vm1716 = vcmask 130048
  %v1718 = vsel %vm1716, %v1645, %v1048
  %v1720 = vsel %vm1716, %v1647, %v1050
  %v1722 = vsel %vm1716, %v1649, %v1052
  %v1724 = vsel %vm1716, %v1651, %v1054
  %v1726 = vsel %vm1716, %v1653, %v1056
  %v1728 = vsel %vm1716, %v1655, %v1058
  %v1730 = vsel %vm1716, %v1657, %v1060
  %v1732 = vsel %vm1716, %v1659, %v1062
  %v1734 = vsel %vm1716, %v1661, %v1064
  %v1736 = vsel %vm1716, %v1663, %v1066
  %v1738 = vsel %vm1716, %v1665, %v1068
  %v1740 = vsel %vm1716, %v1667, %v1070
  %v1742 = vsel %vm1716, %v1669, %v1072
  %v1744 = vsel %vm1716, %v1671, %v1074
  %v1746 = vsel %vm1716, %v1673, %v1076
  %v1748 = vsel %vm1716, %v1675, %v1078
  %v1750 = vsel %vm1716, %v1677, %v1080
  %v1752 = vsel %vm1716, %v1679, %v1082
  %v1754 = vsel %vm1716, %v1681, %v1084
  %v1756 = vsel %vm1716, %v1683, %v1086
  %v1758 = vsel %vm1716, %v1685, %v1088
  %v1760 = vsel %vm1716, %v1687, %v1090
  %v1762 = vsel %vm1716, %v1689, %v1092
  %v1764 = vsel %vm1716, %v1691, %v1094
  %v1766 = vsel %vm1716, %v1693, %v1096
  %v1768 = vsel %vm1716, %v1695, %v1098
  %v1770 = vsel %vm1716, %v1697, %v1100
  %v1772 = vsel %vm1716, %v1699, %v1102
  %v1774 = vsel %vm1716, %v1701, %v1104
  %v1776 = vsel %vm1716, %v1703, %v1106
  %v1778 = vsel %vm1716, %v1705, %v1108
  %v1780 = vsel %vm1716, %v1707, %v1110
  %v1782 = vsel %vm1716, %v1709, %v1112
  %v1784 = vsel %vm1716, %v1711, %v1114
  %v1786 = vsel %vm1716, %v1713, %v1116
  %v1788 = vsel %vm1716, %v1715, %v1118
  %vm1789 = vcmask 195584
  %v1791 = vsel %vm1789, %v1718, %v1130
  %v1793 = vsel %vm1789, %v1720, %v1132
  %v1795 = vsel %vm1789, %v1722, %v1134
  %v1797 = vsel %vm1789, %v1724, %v1136
  %v1799 = vsel %vm1789, %v1726, %v1138
  %v1801 = vsel %vm1789, %v1728, %v1140
  %v1803 = vsel %vm1789, %v1730, %v1142
  %v1805 = vsel %vm1789, %v1732, %v1144
  %v1807 = vsel %vm1789, %v1734, %v1146
  %v1809 = vsel %vm1789, %v1736, %v1148
  %v1811 = vsel %vm1789, %v1738, %v1150
  %v1813 = vsel %vm1789, %v1740, %v1152
  %v1815 = vsel %vm1789, %v1742, %v1154
  %v1817 = vsel %vm1789, %v1744, %v1156
  %v1819 = vsel %vm1789, %v1746, %v1158
  %v1821 = vsel %vm1789, %v1748, %v1160
  %v1823 = vsel %vm1789, %v1750, %v1162
  %v1825 = vsel %vm1789, %v1752, %v1164
  %v1827 = vsel %vm1789, %v1754, %v1166
  %v1829 = vsel %vm1789, %v1756, %v1168
  %v1831 = vsel %vm1789, %v1758, %v1170
  %v1833 = vsel %vm1789, %v1760, %v1172
  %v1835 = vsel %vm1789, %v1762, %v1174
  %v1837 = vsel %vm1789, %v1764, %v1176
  %v1839 = vsel %vm1789, %v1766, %v1178
  %v1841 = vsel %vm1789, %v1768, %v1180
  %v1843 = vsel %vm1789, %v1770, %v1182
  %v1845 = vsel %vm1789, %v1772, %v1184
  %v1847 = vsel %vm1789, %v1774, %v1186
  %v1849 = vsel %vm1789, %v1776, %v1188
  %v1851 = vsel %vm1789, %v1778, %v1190
  %v1853 = vsel %vm1789, %v1780, %v1192
  %v1855 = vsel %vm1789, %v1782, %v1194
  %v1857 = vsel %vm1789, %v1784, %v1196
  %v1859 = vsel %vm1789, %v1786, %v1198
  %v1861 = vsel %vm1789, %v1788, %v1200
  %vm1862 = vcmask 261120
  %v1864 = vsel %vm1862, %v1791, %v1232
  %v1866 = vsel %vm1862, %v1793, %v1234
  %v1868 = vsel %vm1862, %v1795, %v1236
  %v1870 = vsel %vm1862, %v1797, %v1238
  %v1872 = vsel %vm1862, %v1799, %v1240
  %v1874 = vsel %vm1862, %v1801, %v1242
  %v1876 = vsel %vm1862, %v1803, %v1244
  %v1878 = vsel %vm1862, %v1805, %v1246
  %v1880 = vsel %vm1862, %v1807, %v1248
  %v1882 = vsel %vm1862, %v1809, %v1250
  %v1884 = vsel %vm1862, %v1811, %v1252
  %v1886 = vsel %vm1862, %v1813, %v1254
  %v1888 = vsel %vm1862, %v1815, %v1256
  %v1890 = vsel %vm1862, %v1817, %v1258
  %v1892 = vsel %vm1862, %v1819, %v1260
  %v1894 = vsel %vm1862, %v1821, %v1262
  %v1896 = vsel %vm1862, %v1823, %v1264
  %v1898 = vsel %vm1862, %v1825, %v1266
  %v1900 = vsel %vm1862, %v1827, %v1268
  %v1902 = vsel %vm1862, %v1829, %v1270
  %v1904 = vsel %vm1862, %v1831, %v1272
  %v1906 = vsel %vm1862, %v1833, %v1274
  %v1908 = vsel %vm1862, %v1835, %v1276
  %v1910 = vsel %vm1862, %v1837, %v1278
  %v1912 = vsel %vm1862, %v1839, %v1280
  %v1914 = vsel %vm1862, %v1841, %v1282
  %v1916 = vsel %vm1862, %v1843, %v1284
  %v1918 = vsel %vm1862, %v1845, %v1286
  %v1920 = vsel %vm1862, %v1847, %v1288
  %v1922 = vsel %vm1862, %v1849, %v1290
  %v1924 = vsel %vm1862, %v1851, %v1292
  %v1926 = vsel %vm1862, %v1853, %v1294
  %v1928 = vsel %vm1862, %v1855, %v1296
  %v1930 = vsel %vm1862, %v1857, %v1298
  %v1932 = vsel %vm1862, %v1859, %v1300
  %v1934 = vsel %vm1862, %v1861, %v1302
  %vm1935 = vcmask 326656
  %v1937 = vsel %vm1935, %v1864, %v1310
  %v1939 = vsel %vm1935, %v1866, %v1312
  %v1941 = vsel %vm1935, %v1868, %v1314
  %v1943 = vsel %vm1935, %v1870, %v1316
  %v1945 = vsel %vm1935, %v1872, %v1318
  %v1947 = vsel %vm1935, %v1874, %v1320
  %v1949 = vsel %vm1935, %v1876, %v1322
  %v1951 = vsel %vm1935, %v1878, %v1324
  %v1953 = vsel %vm1935, %v1880, %v1326
  %v1955 = vsel %vm1935, %v1882, %v1328
  %v1957 = vsel %vm1935, %v1884, %v1330
  %v1959 = vsel %vm1935, %v1886, %v1332
  %v1961 = vsel %vm1935, %v1888, %v1334
  %v1963 = vsel %vm1935, %v1890, %v1336
  %v1965 = vsel %vm1935, %v1892, %v1338
  %v1967 = vsel %vm1935, %v1894, %v1340
  %v1969 = vsel %vm1935, %v1896, %v1342
  %v1971 = vsel %vm1935, %v1898, %v1344
  %v1973 = vsel %vm1935, %v1900, %v1346
  %v1975 = vsel %vm1935, %v1902, %v1348
  %v1977 = vsel %vm1935, %v1904, %v1350
  %v1979 = vsel %vm1935, %v1906, %v1352
  %v1981 = vsel %vm1935, %v1908, %v1354
  %v1983 = vsel %vm1935, %v1910, %v1356
  %v1985 = vsel %vm1935, %v1912, %v1358
  %v1987 = vsel %vm1935, %v1914, %v1360
  %v1989 = vsel %vm1935, %v1916, %v1362
  %v1991 = vsel %vm1935, %v1918, %v1364
  %v1993 = vsel %vm1935, %v1920, %v1366
  %v1995 = vsel %vm1935, %v1922, %v1368
  %v1997 = vsel %vm1935, %v1924, %v1370
  %v1999 = vsel %vm1935, %v1926, %v1372
  %v2001 = vsel %vm1935, %v1928, %v1374
  %v2003 = vsel %vm1935, %v1930, %v1376
  %v2005 = vsel %vm1935, %v1932, %v1378
  %v2007 = vsel %vm1935, %v1934, %v1380
  %vm2008 = vcmask 392192
  %v2010 = vsel %vm2008, %v1937, %v1392
  %v2012 = vsel %vm2008, %v1939, %v1394
  %v2014 = vsel %vm2008, %v1941, %v1396
  %v2016 = vsel %vm2008, %v1943, %v1398
  %v2018 = vsel %vm2008, %v1945, %v1400
  %v2020 = vsel %vm2008, %v1947, %v1402
  %v2022 = vsel %vm2008, %v1949, %v1404
  %v2024 = vsel %vm2008, %v1951, %v1406
  %v2026 = vsel %vm2008, %v1953, %v1408
  %v2028 = vsel %vm2008, %v1955, %v1410
  %v2030 = vsel %vm2008, %v1957, %v1412
  %v2032 = vsel %vm2008, %v1959, %v1414
  %v2034 = vsel %vm2008, %v1961, %v1416
  %v2036 = vsel %vm2008, %v1963, %v1418
  %v2038 = vsel %vm2008, %v1965, %v1420
  %v2040 = vsel %vm2008, %v1967, %v1422
  %v2042 = vsel %vm2008, %v1969, %v1424
  %v2044 = vsel %vm2008, %v1971, %v1426
  %v2046 = vsel %vm2008, %v1973, %v1428
  %v2048 = vsel %vm2008, %v1975, %v1430
  %v2050 = vsel %vm2008, %v1977, %v1432
  %v2052 = vsel %vm2008, %v1979, %v1434
  %v2054 = vsel %vm2008, %v1981, %v1436
  %v2056 = vsel %vm2008, %v1983, %v1438
  %v2058 = vsel %vm2008, %v1985, %v1440
  %v2060 = vsel %vm2008, %v1987, %v1442
  %v2062 = vsel %vm2008, %v1989, %v1444
  %v2064 = vsel %vm2008, %v1991, %v1446
  %v2066 = vsel %vm2008, %v1993, %v1448
  %v2068 = vsel %vm2008, %v1995, %v1450
  %v2070 = vsel %vm2008, %v1997, %v1452
  %v2072 = vsel %vm2008, %v1999, %v1454
  %v2074 = vsel %vm2008, %v2001, %v1456
  %v2076 = vsel %vm2008, %v2003, %v1458
  %v2078 = vsel %vm2008, %v2005, %v1460
  %v2080 = vsel %vm2008, %v2007, %v1462
  %vm2081 = vcmask 457728
  %v2083 = vsel %vm2081, %v2010, %v1494
  %v2085 = vsel %vm2081, %v2012, %v1496
  %v2087 = vsel %vm2081, %v2014, %v1498
  %v2089 = vsel %vm2081, %v2016, %v1500
  %v2091 = vsel %vm2081, %v2018, %v1502
  %v2093 = vsel %vm2081, %v2020, %v1504
  %v2095 = vsel %vm2081, %v2022, %v1506
  %v2097 = vsel %vm2081, %v2024, %v1508
  %v2099 = vsel %vm2081, %v2026, %v1510
  %v2101 = vsel %vm2081, %v2028, %v1512
  %v2103 = vsel %vm2081, %v2030, %v1514
  %v2105 = vsel %vm2081, %v2032, %v1516
  %v2107 = vsel %vm2081, %v2034, %v1518
  %v2109 = vsel %vm2081, %v2036, %v1520
  %v2111 = vsel %vm2081, %v2038, %v1522
  %v2113 = vsel %vm2081, %v2040, %v1524
  %v2115 = vsel %vm2081, %v2042, %v1526
  %v2117 = vsel %vm2081, %v2044, %v1528
  %v2119 = vsel %vm2081, %v2046, %v1530
  %v2121 = vsel %vm2081, %v2048, %v1532
  %v2123 = vsel %vm2081, %v2050, %v1534
  %v2125 = vsel %vm2081, %v2052, %v1536
  %v2127 = vsel %vm2081, %v2054, %v1538
  %v2129 = vsel %vm2081, %v2056, %v1540
  %v2131 = vsel %vm2081, %v2058, %v1542
  %v2133 = vsel %vm2081, %v2060, %v1544
  %v2135 = vsel %vm2081, %v2062, %v1546
  %v2137 = vsel %vm2081, %v2064, %v1548
  %v2139 = vsel %vm2081, %v2066, %v1550
  %v2141 = vsel %vm2081, %v2068, %v1552
  %v2143 = vsel %vm2081, %v2070, %v1554
  %v2145 = vsel %vm2081, %v2072, %v1556
  %v2147 = vsel %vm2081, %v2074, %v1558
  %v2149 = vsel %vm2081, %v2076, %v1560
  %v2151 = vsel %vm2081, %v2078, %v1562
  %v2153 = vsel %vm2081, %v2080, %v1564
  %vm2154 = vcmask 523264
  %v2156 = vsel %vm2154, %v2083, %v1572
  %v2158 = vsel %vm2154, %v2085, %v1574
  %v2160 = vsel %vm2154, %v2087, %v1576
  %v2162 = vsel %vm2154, %v2089, %v1578
  %v2164 = vsel %vm2154, %v2091, %v1580
  %v2166 = vsel %vm2154, %v2093, %v1582
  %v2168 = vsel %vm2154, %v2095, %v1584
  %v2170 = vsel %vm2154, %v2097, %v1586
  %v2172 = vsel %vm2154, %v2099, %v1588
  %v2174 = vsel %vm2154, %v2101, %v1590
  %v2176 = vsel %vm2154, %v2103, %v1592
  %v2178 = vsel %vm2154, %v2105, %v1594
  %v2180 = vsel %vm2154, %v2107, %v1596
  %v2182 = vsel %vm2154, %v2109, %v1598
  %v2184 = vsel %vm2154, %v2111, %v1600
  %v2186 = vsel %vm2154, %v2113, %v1602
  %v2188 = vsel %vm2154, %v2115, %v1604
  %v2190 = vsel %vm2154, %v2117, %v1606
  %v2192 = vsel %vm2154, %v2119, %v1608
  %v2194 = vsel %vm2154, %v2121, %v1610
  %v2196 = vsel %vm2154, %v2123, %v1612
  %v2198 = vsel %vm2154, %v2125, %v1614
  %v2200 = vsel %vm2154, %v2127, %v1616
  %v2202 = vsel %vm2154, %v2129, %v1618
  %v2204 = vsel %vm2154, %v2131, %v1620
  %v2206 = vsel %vm2154, %v2133, %v1622
  %v2208 = vsel %vm2154, %v2135, %v1624
  %v2210 = vsel %vm2154, %v2137, %v1626
  %v2212 = vsel %vm2154, %v2139, %v1628
  %v2214 = vsel %vm2154, %v2141, %v1630
  %v2216 = vsel %vm2154, %v2143, %v1632
  %v2218 = vsel %vm2154, %v2145, %v1634
  %v2220 = vsel %vm2154, %v2147, %v1636
  %v2222 = vsel %vm2154, %v2149, %v1638
  %v2224 = vsel %vm2154, %v2151, %v1640
  %v2226 = vsel %vm2154, %v2153, %v1642
  %v2227 = vld [vmem:[%s1] sm:$0xf]
  %v2228 = vld [vmem:[%s1 + $0x4] sm:$0xf]
  %v2229 = vld [vmem:[%s1 + $0x8] sm:$0xf]
  %v2230 = vld [vmem:[%s1 + $0xc] sm:$0xf]
  %v2231 = vld [vmem:[%s1 + $0x10] sm:$0xf]
  %v2232 = vld [vmem:[%s1 + $0x14] sm:$0xf]
  %v2233 = vld [vmem:[%s1 + $0x18] sm:$0xf]
  %v2234 = vld [vmem:[%s1 + $0x1c] sm:$0xf]
  %v2235 = vld [vmem:[%s1 + $0x20] sm:$0xf]
  %v2236 = vld [vmem:[%s2] sm:$0x1]
  %v2238 = vlaneseq
  %v2239 = vshrl.u32 %v2238, 7
  %v2240 = vsub.s32 0, %v2239
  %v2241 = vrot.slane %v2236, %v2240
  %v2252 = vunpack.c.l.b16 %v2227
  %v2253 = vunpack.c.l.b16 %v2228
  %v2254 = vunpack.c.l.b16 %v2229
  %v2255 = vunpack.c.l.b16 %v2230
  %v2256 = vunpack.c.l.b16 %v2231
  %v2257 = vunpack.c.l.b16 %v2232
  %v2258 = vunpack.c.l.b16 %v2233
  %v2259 = vunpack.c.l.b16 %v2234
  %v2260 = vunpack.c.l.b16 %v2235
  %v2261 = vpack.c.b16 %v2253, %v2252
  %v2262 = vpack.c.b16 %v2255, %v2254
  %v2263 = vpack.c.b16 %v2257, %v2256
  %v2264 = vpack.c.b16 %v2259, %v2258
  %v2265 = vpack.c.b16 %v2260, %v2260
  %vm2270 = vcmask 588800
  %v2271 = vsel %vm2270, %v2156, 0
  %v2273 = vsel %vm2270, %v2158, 0
  %v2275 = vsel %vm2270, %v2160, 0
  %v2277 = vsel %vm2270, %v2162, 0
  %v2279 = vsel %vm2270, %v2164, 0
  %v2281 = vsel %vm2270, %v2166, 0
  %v2283 = vsel %vm2270, %v2168, 0
  %v2285 = vsel %vm2270, %v2170, 0
  %v2287 = vsel %vm2270, %v2172, 0
  %v2289 = vsel %vm2270, %v2174, 0
  %v2291 = vsel %vm2270, %v2176, 0
  %v2293 = vsel %vm2270, %v2178, 0
  %v2295 = vsel %vm2270, %v2180, 0
  %v2297 = vsel %vm2270, %v2182, 0
  %v2299 = vsel %vm2270, %v2184, 0
  %v2301 = vsel %vm2270, %v2186, 0
  %v2303 = vsel %vm2270, %v2188, 0
  %v2305 = vsel %vm2270, %v2190, 0
  %v2307 = vsel %vm2270, %v2192, 0
  %v2309 = vsel %vm2270, %v2194, 0
  %v2311 = vsel %vm2270, %v2196, 0
  %v2313 = vsel %vm2270, %v2198, 0
  %v2315 = vsel %vm2270, %v2200, 0
  %v2317 = vsel %vm2270, %v2202, 0
  %v2319 = vsel %vm2270, %v2204, 0
  %v2321 = vsel %vm2270, %v2206, 0
  %v2323 = vsel %vm2270, %v2208, 0
  %v2325 = vsel %vm2270, %v2210, 0
  %v2327 = vsel %vm2270, %v2212, 0
  %v2329 = vsel %vm2270, %v2214, 0
  %v2331 = vsel %vm2270, %v2216, 0
  %v2333 = vsel %vm2270, %v2218, 0
  %v2335 = vsel %vm2270, %v2220, 0
  %v2337 = vsel %vm2270, %v2222, 0
  %v2339 = vsel %vm2270, %v2224, 0
  %v2341 = vsel %vm2270, %v2226, 0
  %vm2343 = vcmask 1043456
  %v2345 = vsel %vm2343, %v2265, 0
  %2347 = vmatprep.subr.bf16.mxu0 0
  %2348 = vmatpush1.bf16.msra.mxu0 %v2261
  %2349 = vmatprep.subr.bf16.mxu0 0
  %2350 = vmatpush1.bf16.msra.mxu0 %v2262
  %2351 = vmatprep.subr.bf16.mxu0 0
  %2352 = vmatpush1.bf16.msra.mxu0 %v2263
  %2353 = vmatprep.subr.bf16.mxu0 0
  %2354 = vmatpush1.bf16.msra.mxu0 %v2264
  %2355 = vmatprep.subr.bf16.mxu0 0
  %2356 = vmatpush1.bf16.msra.mxu0 %v2345
  %2357 = vmatprep.subr.bf16.mxu0 0
  %2358 = vmatpush1.bf16.msra.mxu0 0
  %2359 = vmatprep.subr.bf16.mxu0 0
  %2360 = vmatpush1.bf16.msra.mxu0 0
  %2361 = vmatprep.subr.bf16.mxu0 0
  %2362 = vmatpush1.bf16.msra.mxu0 0
  %2363 = vmatprep.subr.bf16.mxu0 0
  %2364 = vmatpush1.bf16.msra.mxu0 0
  %2365 = vmatprep.subr.bf16.mxu0 0
  %2366 = vmatpush1.bf16.msra.mxu0 0
  %2367 = vmatprep.subr.bf16.mxu0 0
  %2368 = vmatpush1.bf16.msra.mxu0 0
  %2369 = vmatprep.subr.bf16.mxu0 0
  %2370 = vmatpush1.bf16.msra.mxu0 0
  %2371 = vmatprep.subr.bf16.mxu0 0
  %2372 = vmatpush1.bf16.msra.mxu0 0
  %2373 = vmatprep.subr.bf16.mxu0 0
  %2374 = vmatpush1.bf16.msra.mxu0 0
  %2375 = vmatprep.subr.bf16.mxu0 0
  %2376 = vmatpush1.bf16.msra.mxu0 0
  %2377 = vmatprep.subr.bf16.mxu0 0
  %2378 = vmatpush1.bf16.msra.mxu0 0
  %2379 = vmatprep.mubr.bf16.mxu0 0
  %2380 = vmatmul.mubr.bf16.gmra.mrb[0].mxu0 %v2271
  %v2381 = vpop.f32.mrb[0].mxu0
  %v2382 = vadd.f32 %v2241, %v2381
  %v2383 = vpop.f32.mrb[0].mxu0
  %v2384 = vpop.f32.mrb[0].mxu0
  %v2385 = vadd.f32 %v2241, %v2384
  %v2386 = vpop.f32.mrb[0].mxu0
  %2387 = vmatprep.mubr.bf16.mxu0 0
  %2388 = vmatmul.mubr.bf16.gmra.mrb[0].mxu0 %v2273
  %v2389 = vpop.f32.mrb[0].mxu0
  %v2390 = vadd.f32 %v2241, %v2389
  %v2391 = vpop.f32.mrb[0].mxu0
  %v2392 = vpop.f32.mrb[0].mxu0
  %v2393 = vadd.f32 %v2241, %v2392
  %v2394 = vpop.f32.mrb[0].mxu0
  %2395 = vmatprep.mubr.bf16.mxu0 0
  %2396 = vmatmul.mubr.bf16.gmra.mrb[0].mxu0 %v2275
  %v2397 = vpop.f32.mrb[0].mxu0
  %v2398 = vadd.f32 %v2241, %v2397
  %v2399 = vpop.f32.mrb[0].mxu0
  %v2400 = vpop.f32.mrb[0].mxu0
  %v2401 = vadd.f32 %v2241, %v2400
  %v2402 = vpop.f32.mrb[0].mxu0
  %2403 = vmatprep.mubr.bf16.mxu0 0
  %2404 = vmatmul.mubr.bf16.gmra.mrb[0].mxu0 %v2277
  %v2405 = vpop.f32.mrb[0].mxu0
  %v2406 = vadd.f32 %v2241, %v2405
  %v2407 = vpop.f32.mrb[0].mxu0
  %v2408 = vpop.f32.mrb[0].mxu0
  %v2409 = vadd.f32 %v2241, %v2408
  %v2410 = vpop.f32.mrb[0].mxu0
  %2411 = vmatprep.mubr.bf16.mxu0 0
  %2412 = vmatmul.mubr.bf16.gmra.mrb[0].mxu0 %v2279
  %v2413 = vpop.f32.mrb[0].mxu0
  %v2414 = vadd.f32 %v2241, %v2413
  %v2415 = vpop.f32.mrb[0].mxu0
  %v2416 = vpop.f32.mrb[0].mxu0
  %v2417 = vadd.f32 %v2241, %v2416
  %v2418 = vpop.f32.mrb[0].mxu0
  %2419 = vmatprep.mubr.bf16.mxu0 0
  %2420 = vmatmul.mubr.bf16.gmra.mrb[0].mxu0 %v2281
  %v2421 = vpop.f32.mrb[0].mxu0
  %v2422 = vadd.f32 %v2241, %v2421
  %v2423 = vpop.f32.mrb[0].mxu0
  %v2424 = vpop.f32.mrb[0].mxu0
  %v2425 = vadd.f32 %v2241, %v2424
  %v2426 = vpop.f32.mrb[0].mxu0
  %2427 = vmatprep.mubr.bf16.mxu0 0
  %2428 = vmatmul.mubr.bf16.gmra.mrb[0].mxu0 %v2283
  %v2429 = vpop.f32.mrb[0].mxu0
  %v2430 = vadd.f32 %v2241, %v2429
  %v2431 = vpop.f32.mrb[0].mxu0
  %v2432 = vpop.f32.mrb[0].mxu0
  %v2433 = vadd.f32 %v2241, %v2432
  %v2434 = vpop.f32.mrb[0].mxu0
  %2435 = vmatprep.mubr.bf16.mxu0 0
  %2436 = vmatmul.mubr.bf16.gmra.mrb[0].mxu0 %v2285
  %v2437 = vpop.f32.mrb[0].mxu0
  %v2438 = vadd.f32 %v2241, %v2437
  %v2439 = vpop.f32.mrb[0].mxu0
  %v2440 = vpop.f32.mrb[0].mxu0
  %v2441 = vadd.f32 %v2241, %v2440
  %v2442 = vpop.f32.mrb[0].mxu0
  %2443 = vmatprep.mubr.bf16.mxu0 0
  %2444 = vmatmul.mubr.bf16.gmra.mrb[0].mxu0 %v2287
  %v2445 = vpop.f32.mrb[0].mxu0
  %v2446 = vadd.f32 %v2241, %v2445
  %v2447 = vpop.f32.mrb[0].mxu0
  %v2448 = vpop.f32.mrb[0].mxu0
  %v2449 = vadd.f32 %v2241, %v2448
  %v2450 = vpop.f32.mrb[0].mxu0
  %2451 = vmatprep.mubr.bf16.mxu0 0
  %2452 = vmatmul.mubr.bf16.gmra.mrb[0].mxu0 %v2289
  %v2453 = vpop.f32.mrb[0].mxu0
  %v2454 = vadd.f32 %v2241, %v2453
  %v2455 = vpop.f32.mrb[0].mxu0
  %v2456 = vpop.f32.mrb[0].mxu0
  %v2457 = vadd.f32 %v2241, %v2456
  %v2458 = vpop.f32.mrb[0].mxu0
  %2459 = vmatprep.mubr.bf16.mxu0 0
  %2460 = vmatmul.mubr.bf16.gmra.mrb[0].mxu0 %v2291
  %v2461 = vpop.f32.mrb[0].mxu0
  %v2462 = vadd.f32 %v2241, %v2461
  %v2463 = vpop.f32.mrb[0].mxu0
  %v2464 = vpop.f32.mrb[0].mxu0
  %v2465 = vadd.f32 %v2241, %v2464
  %v2466 = vpop.f32.mrb[0].mxu0
  %2467 = vmatprep.mubr.bf16.mxu0 0
  %2468 = vmatmul.mubr.bf16.gmra.mrb[0].mxu0 %v2293
  %v2469 = vpop.f32.mrb[0].mxu0
  %v2470 = vadd.f32 %v2241, %v2469
  %v2471 = vpop.f32.mrb[0].mxu0
  %v2472 = vpop.f32.mrb[0].mxu0
  %v2473 = vadd.f32 %v2241, %v2472
  %v2474 = vpop.f32.mrb[0].mxu0
  %2475 = vmatprep.mubr.bf16.mxu0 0
  %2476 = vmatmul.mubr.bf16.gmra.mrb[0].mxu0 %v2295
  %v2477 = vpop.f32.mrb[0].mxu0
  %v2478 = vadd.f32 %v2241, %v2477
  %v2479 = vpop.f32.mrb[0].mxu0
  %v2480 = vpop.f32.mrb[0].mxu0
  %v2481 = vadd.f32 %v2241, %v2480
  %v2482 = vpop.f32.mrb[0].mxu0
  %2483 = vmatprep.mubr.bf16.mxu0 0
  %2484 = vmatmul.mubr.bf16.gmra.mrb[0].mxu0 %v2297
  %v2485 = vpop.f32.mrb[0].mxu0
  %v2486 = vadd.f32 %v2241, %v2485
  %v2487 = vpop.f32.mrb[0].mxu0
  %v2488 = vpop.f32.mrb[0].mxu0
  %v2489 = vadd.f32 %v2241, %v2488
  %v2490 = vpop.f32.mrb[0].mxu0
  %2491 = vmatprep.mubr.bf16.mxu0 0
  %2492 = vmatmul.mubr.bf16.gmra.mrb[0].mxu0 %v2299
  %v2493 = vpop.f32.mrb[0].mxu0
  %v2494 = vadd.f32 %v2241, %v2493
  %v2495 = vpop.f32.mrb[0].mxu0
  %v2496 = vpop.f32.mrb[0].mxu0
  %v2497 = vadd.f32 %v2241, %v2496
  %v2498 = vpop.f32.mrb[0].mxu0
  %2499 = vmatprep.mubr.bf16.mxu0 0
  %2500 = vmatmul.mubr.bf16.gmra.mrb[0].mxu0 %v2301
  %v2501 = vpop.f32.mrb[0].mxu0
  %v2502 = vadd.f32 %v2241, %v2501
  %v2503 = vpop.f32.mrb[0].mxu0
  %v2504 = vpop.f32.mrb[0].mxu0
  %v2505 = vadd.f32 %v2241, %v2504
  %v2506 = vpop.f32.mrb[0].mxu0
  %2507 = vmatprep.mubr.bf16.mxu0 0
  %2508 = vmatmul.mubr.bf16.gmra.mrb[0].mxu0 %v2303
  %v2509 = vpop.f32.mrb[0].mxu0
  %v2510 = vadd.f32 %v2241, %v2509
  %v2511 = vpop.f32.mrb[0].mxu0
  %v2512 = vpop.f32.mrb[0].mxu0
  %v2513 = vadd.f32 %v2241, %v2512
  %v2514 = vpop.f32.mrb[0].mxu0
  %2515 = vmatprep.mubr.bf16.mxu0 0
  %2516 = vmatmul.mubr.bf16.gmra.mrb[0].mxu0 %v2305
  %v2517 = vpop.f32.mrb[0].mxu0
  %v2518 = vadd.f32 %v2241, %v2517
  %v2519 = vpop.f32.mrb[0].mxu0
  %v2520 = vpop.f32.mrb[0].mxu0
  %v2521 = vadd.f32 %v2241, %v2520
  %v2522 = vpop.f32.mrb[0].mxu0
  %2523 = vmatprep.mubr.bf16.mxu0 0
  %2524 = vmatmul.mubr.bf16.gmra.mrb[0].mxu0 %v2307
  %v2525 = vpop.f32.mrb[0].mxu0
  %v2526 = vadd.f32 %v2241, %v2525
  %v2527 = vpop.f32.mrb[0].mxu0
  %v2528 = vpop.f32.mrb[0].mxu0
  %v2529 = vadd.f32 %v2241, %v2528
  %v2530 = vpop.f32.mrb[0].mxu0
  %2531 = vmatprep.mubr.bf16.mxu0 0
  %2532 = vmatmul.mubr.bf16.gmra.mrb[0].mxu0 %v2309
  %v2533 = vpop.f32.mrb[0].mxu0
  %v2534 = vadd.f32 %v2241, %v2533
  %v2535 = vpop.f32.mrb[0].mxu0
  %v2536 = vpop.f32.mrb[0].mxu0
  %v2537 = vadd.f32 %v2241, %v2536
  %v2538 = vpop.f32.mrb[0].mxu0
  %2539 = vmatprep.mubr.bf16.mxu0 0
  %2540 = vmatmul.mubr.bf16.gmra.mrb[0].mxu0 %v2311
  %v2541 = vpop.f32.mrb[0].mxu0
  %v2542 = vadd.f32 %v2241, %v2541
  %v2543 = vpop.f32.mrb[0].mxu0
  %v2544 = vpop.f32.mrb[0].mxu0
  %v2545 = vadd.f32 %v2241, %v2544
  %v2546 = vpop.f32.mrb[0].mxu0
  %2547 = vmatprep.mubr.bf16.mxu0 0
  %2548 = vmatmul.mubr.bf16.gmra.mrb[0].mxu0 %v2313
  %v2549 = vpop.f32.mrb[0].mxu0
  %v2550 = vadd.f32 %v2241, %v2549
  %v2551 = vpop.f32.mrb[0].mxu0
  %v2552 = vpop.f32.mrb[0].mxu0
  %v2553 = vadd.f32 %v2241, %v2552
  %v2554 = vpop.f32.mrb[0].mxu0
  %2555 = vmatprep.mubr.bf16.mxu0 0
  %2556 = vmatmul.mubr.bf16.gmra.mrb[0].mxu0 %v2315
  %v2557 = vpop.f32.mrb[0].mxu0
  %v2558 = vadd.f32 %v2241, %v2557
  %v2559 = vpop.f32.mrb[0].mxu0
  %v2560 = vpop.f32.mrb[0].mxu0
  %v2561 = vadd.f32 %v2241, %v2560
  %v2562 = vpop.f32.mrb[0].mxu0
  %2563 = vmatprep.mubr.bf16.mxu0 0
  %2564 = vmatmul.mubr.bf16.gmra.mrb[0].mxu0 %v2317
  %v2565 = vpop.f32.mrb[0].mxu0
  %v2566 = vadd.f32 %v2241, %v2565
  %v2567 = vpop.f32.mrb[0].mxu0
  %v2568 = vpop.f32.mrb[0].mxu0
  %v2569 = vadd.f32 %v2241, %v2568
  %v2570 = vpop.f32.mrb[0].mxu0
  %2571 = vmatprep.mubr.bf16.mxu0 0
  %2572 = vmatmul.mubr.bf16.gmra.mrb[0].mxu0 %v2319
  %v2573 = vpop.f32.mrb[0].mxu0
  %v2574 = vadd.f32 %v2241, %v2573
  %v2575 = vpop.f32.mrb[0].mxu0
  %v2576 = vpop.f32.mrb[0].mxu0
  %v2577 = vadd.f32 %v2241, %v2576
  %v2578 = vpop.f32.mrb[0].mxu0
  %2579 = vmatprep.mubr.bf16.mxu0 0
  %2580 = vmatmul.mubr.bf16.gmra.mrb[0].mxu0 %v2321
  %v2581 = vpop.f32.mrb[0].mxu0
  %v2582 = vadd.f32 %v2241, %v2581
  %v2583 = vpop.f32.mrb[0].mxu0
  %v2584 = vpop.f32.mrb[0].mxu0
  %v2585 = vadd.f32 %v2241, %v2584
  %v2586 = vpop.f32.mrb[0].mxu0
  %2587 = vmatprep.mubr.bf16.mxu0 0
  %2588 = vmatmul.mubr.bf16.gmra.mrb[0].mxu0 %v2323
  %v2589 = vpop.f32.mrb[0].mxu0
  %v2590 = vadd.f32 %v2241, %v2589
  %v2591 = vpop.f32.mrb[0].mxu0
  %v2592 = vpop.f32.mrb[0].mxu0
  %v2593 = vadd.f32 %v2241, %v2592
  %v2594 = vpop.f32.mrb[0].mxu0
  %2595 = vmatprep.mubr.bf16.mxu0 0
  %2596 = vmatmul.mubr.bf16.gmra.mrb[0].mxu0 %v2325
  %v2597 = vpop.f32.mrb[0].mxu0
  %v2598 = vadd.f32 %v2241, %v2597
  %v2599 = vpop.f32.mrb[0].mxu0
  %v2600 = vpop.f32.mrb[0].mxu0
  %v2601 = vadd.f32 %v2241, %v2600
  %v2602 = vpop.f32.mrb[0].mxu0
  %2603 = vmatprep.mubr.bf16.mxu0 0
  %2604 = vmatmul.mubr.bf16.gmra.mrb[0].mxu0 %v2327
  %v2605 = vpop.f32.mrb[0].mxu0
  %v2606 = vadd.f32 %v2241, %v2605
  %v2607 = vpop.f32.mrb[0].mxu0
  %v2608 = vpop.f32.mrb[0].mxu0
  %v2609 = vadd.f32 %v2241, %v2608
  %v2610 = vpop.f32.mrb[0].mxu0
  %2611 = vmatprep.mubr.bf16.mxu0 0
  %2612 = vmatmul.mubr.bf16.gmra.mrb[0].mxu0 %v2329
  %v2613 = vpop.f32.mrb[0].mxu0
  %v2614 = vadd.f32 %v2241, %v2613
  %v2615 = vpop.f32.mrb[0].mxu0
  %v2616 = vpop.f32.mrb[0].mxu0
  %v2617 = vadd.f32 %v2241, %v2616
  %v2618 = vpop.f32.mrb[0].mxu0
  %2619 = vmatprep.mubr.bf16.mxu0 0
  %2620 = vmatmul.mubr.bf16.gmra.mrb[0].mxu0 %v2331
  %v2621 = vpop.f32.mrb[0].mxu0
  %v2622 = vadd.f32 %v2241, %v2621
  %v2623 = vpop.f32.mrb[0].mxu0
  %v2624 = vpop.f32.mrb[0].mxu0
  %v2625 = vadd.f32 %v2241, %v2624
  %v2626 = vpop.f32.mrb[0].mxu0
  %2627 = vmatprep.mubr.bf16.mxu0 0
  %2628 = vmatmul.mubr.bf16.gmra.mrb[0].mxu0 %v2333
  %v2629 = vpop.f32.mrb[0].mxu0
  %v2630 = vadd.f32 %v2241, %v2629
  %v2631 = vpop.f32.mrb[0].mxu0
  %v2632 = vpop.f32.mrb[0].mxu0
  %v2633 = vadd.f32 %v2241, %v2632
  %v2634 = vpop.f32.mrb[0].mxu0
  %2635 = vmatprep.mubr.bf16.mxu0 0
  %2636 = vmatmul.mubr.bf16.gmra.mrb[0].mxu0 %v2335
  %v2637 = vpop.f32.mrb[0].mxu0
  %v2638 = vadd.f32 %v2241, %v2637
  %v2639 = vpop.f32.mrb[0].mxu0
  %v2640 = vpop.f32.mrb[0].mxu0
  %v2641 = vadd.f32 %v2241, %v2640
  %v2642 = vpop.f32.mrb[0].mxu0
  %2643 = vmatprep.mubr.bf16.mxu0 0
  %2644 = vmatmul.mubr.bf16.gmra.mrb[0].mxu0 %v2337
  %v2645 = vpop.f32.mrb[0].mxu0
  %v2646 = vadd.f32 %v2241, %v2645
  %v2647 = vpop.f32.mrb[0].mxu0
  %v2648 = vpop.f32.mrb[0].mxu0
  %v2649 = vadd.f32 %v2241, %v2648
  %v2650 = vpop.f32.mrb[0].mxu0
  %2651 = vmatprep.mubr.bf16.mxu0 0
  %2652 = vmatmul.mubr.bf16.gmra.mrb[0].mxu0 %v2339
  %v2653 = vpop.f32.mrb[0].mxu0
  %v2654 = vadd.f32 %v2241, %v2653
  %v2655 = vpop.f32.mrb[0].mxu0
  %v2656 = vpop.f32.mrb[0].mxu0
  %v2657 = vadd.f32 %v2241, %v2656
  %v2658 = vpop.f32.mrb[0].mxu0
  %2659 = vmatprep.mubr.bf16.mxu0 0
  %2660 = vmatmul.mubr.bf16.gmra.mrb[0].mxu0 %v2341
  %v2661 = vpop.f32.mrb[0].mxu0
  %v2662 = vadd.f32 %v2241, %v2661
  %v2663 = vpop.f32.mrb[0].mxu0
  %v2664 = vpop.f32.mrb[0].mxu0
  %v2665 = vadd.f32 %v2241, %v2664
  %v2666 = vpop.f32.mrb[0].mxu0
  %2667 = vdwg.mxu0
  %v2668 = vmax.f32 %v2382, 0.0
  %v2669 = vmax.f32 %v2385, 0.0
  %v2670 = vmax.f32 %v2390, 0.0
  %v2671 = vmax.f32 %v2393, 0.0
  %v2672 = vmax.f32 %v2398, 0.0
  %v2673 = vmax.f32 %v2401, 0.0
  %v2674 = vmax.f32 %v2406, 0.0
  %v2675 = vmax.f32 %v2409, 0.0
  %v2676 = vmax.f32 %v2414, 0.0
  %v2677 = vmax.f32 %v2417, 0.0
  %v2678 = vmax.f32 %v2422, 0.0
  %v2679 = vmax.f32 %v2425, 0.0
  %v2680 = vmax.f32 %v2430, 0.0
  %v2681 = vmax.f32 %v2433, 0.0
  %v2682 = vmax.f32 %v2438, 0.0
  %v2683 = vmax.f32 %v2441, 0.0
  %v2684 = vmax.f32 %v2446, 0.0
  %v2685 = vmax.f32 %v2449, 0.0
  %v2686 = vmax.f32 %v2454, 0.0
  %v2687 = vmax.f32 %v2457, 0.0
  %v2688 = vmax.f32 %v2462, 0.0
  %v2689 = vmax.f32 %v2465, 0.0
  %v2690 = vmax.f32 %v2470, 0.0
  %v2691 = vmax.f32 %v2473, 0.0
  %v2692 = vmax.f32 %v2478, 0.0
  %v2693 = vmax.f32 %v2481, 0.0
  %v2694 = vmax.f32 %v2486, 0.0
  %v2695 = vmax.f32 %v2489, 0.0
  %v2696 = vmax.f32 %v2494, 0.0
  %v2697 = vmax.f32 %v2497, 0.0
  %v2698 = vmax.f32 %v2502, 0.0
  %v2699 = vmax.f32 %v2505, 0.0
  %v2700 = vmax.f32 %v2510, 0.0
  %v2701 = vmax.f32 %v2513, 0.0
  %v2702 = vmax.f32 %v2518, 0.0
  %v2703 = vmax.f32 %v2521, 0.0
  %v2704 = vmax.f32 %v2526, 0.0
  %v2705 = vmax.f32 %v2529, 0.0
  %v2706 = vmax.f32 %v2534, 0.0
  %v2707 = vmax.f32 %v2537, 0.0
  %v2708 = vmax.f32 %v2542, 0.0
  %v2709 = vmax.f32 %v2545, 0.0
  %v2710 = vmax.f32 %v2550, 0.0
  %v2711 = vmax.f32 %v2553, 0.0
  %v2712 = vmax.f32 %v2558, 0.0
  %v2713 = vmax.f32 %v2561, 0.0
  %v2714 = vmax.f32 %v2566, 0.0
  %v2715 = vmax.f32 %v2569, 0.0
  %v2716 = vmax.f32 %v2574, 0.0
  %v2717 = vmax.f32 %v2577, 0.0
  %v2718 = vmax.f32 %v2582, 0.0
  %v2719 = vmax.f32 %v2585, 0.0
  %v2720 = vmax.f32 %v2590, 0.0
  %v2721 = vmax.f32 %v2593, 0.0
  %v2722 = vmax.f32 %v2598, 0.0
  %v2723 = vmax.f32 %v2601, 0.0
  %v2724 = vmax.f32 %v2606, 0.0
  %v2725 = vmax.f32 %v2609, 0.0
  %v2726 = vmax.f32 %v2614, 0.0
  %v2727 = vmax.f32 %v2617, 0.0
  %v2728 = vmax.f32 %v2622, 0.0
  %v2729 = vmax.f32 %v2625, 0.0
  %v2730 = vmax.f32 %v2630, 0.0
  %v2731 = vmax.f32 %v2633, 0.0
  %v2732 = vmax.f32 %v2638, 0.0
  %v2733 = vmax.f32 %v2641, 0.0
  %v2734 = vmax.f32 %v2646, 0.0
  %v2735 = vmax.f32 %v2649, 0.0
  %v2736 = vmax.f32 %v2654, 0.0
  %v2737 = vmax.f32 %v2657, 0.0
  %v2738 = vmax.f32 %v2662, 0.0
  %v2739 = vmax.f32 %v2665, 0.0
  %p2740 = scmp.gt.s32.totalorder 0, 0
  %s2741 = scalar_select %p2740, 1, 0
  %v2742 = vstv %s2741
  %vm2743 = vcmp.eq.s32.totalorder %v2742, 1
  %p2744 = scmp.lt.s32.totalorder 0, 0
  %s2745 = scalar_select %p2744, 1, 0
  %v2746 = vstv %s2745
  %vm2747 = vcmp.eq.s32.totalorder %v2746, 1
  %v2748 = vsel %vm2743, 1, 0
  %v2749 = vsel %vm2747, 1, 0
  %vm2750 = vcmp.eq.s32.totalorder %v2748, 1
  %vm2751 = vcmp.eq.s32.totalorder %v2749, 1
  %v2752 = vsel %vm2750, %v2668, 0.0
  %v2753 = vsel %vm2750, %v2669, 0.0
  %v2754 = vsel 1, %v2670, 0.0
  %v2755 = vsel 1, %v2671, 0.0
  %v2756 = vsel 1, %v2672, 0.0
  %v2757 = vsel 1, %v2673, 0.0
  %v2758 = vsel 1, %v2674, 0.0
  %v2759 = vsel 1, %v2675, 0.0
  %v2760 = vsel 1, %v2676, 0.0
  %v2761 = vsel 1, %v2677, 0.0
  %v2762 = vsel 1, %v2678, 0.0
  %v2763 = vsel 1, %v2679, 0.0
  %v2764 = vsel 1, %v2680, 0.0
  %v2765 = vsel 1, %v2681, 0.0
  %v2766 = vsel 1, %v2682, 0.0
  %v2767 = vsel 1, %v2683, 0.0
  %v2768 = vsel 1, %v2684, 0.0
  %v2769 = vsel 1, %v2685, 0.0
  %v2770 = vsel 1, %v2686, 0.0
  %v2771 = vsel 1, %v2687, 0.0
  %v2772 = vsel 1, %v2688, 0.0
  %v2773 = vsel 1, %v2689, 0.0
  %v2774 = vsel 1, %v2690, 0.0
  %v2775 = vsel 1, %v2691, 0.0
  %v2776 = vsel 1, %v2692, 0.0
  %v2777 = vsel 1, %v2693, 0.0
  %v2778 = vsel 1, %v2694, 0.0
  %v2779 = vsel 1, %v2695, 0.0
  %v2780 = vsel 1, %v2696, 0.0
  %v2781 = vsel 1, %v2697, 0.0
  %v2782 = vsel 1, %v2698, 0.0
  %v2783 = vsel 1, %v2699, 0.0
  %v2784 = vsel 1, %v2700, 0.0
  %v2785 = vsel 1, %v2701, 0.0
  %v2786 = vsel %vm2751, %v2702, 0.0
  %v2787 = vsel %vm2751, %v2703, 0.0
  %v2788 = vsel %vm2750, %v2704, 0.0
  %v2789 = vsel %vm2750, %v2705, 0.0
  %v2790 = vsel 1, %v2706, 0.0
  %v2791 = vsel 1, %v2707, 0.0
  %v2792 = vsel 1, %v2708, 0.0
  %v2793 = vsel 1, %v2709, 0.0
  %v2794 = vsel 1, %v2710, 0.0
  %v2795 = vsel 1, %v2711, 0.0
  %v2796 = vsel 1, %v2712, 0.0
  %v2797 = vsel 1, %v2713, 0.0
  %v2798 = vsel 1, %v2714, 0.0
  %v2799 = vsel 1, %v2715, 0.0
  %v2800 = vsel 1, %v2716, 0.0
  %v2801 = vsel 1, %v2717, 0.0
  %v2802 = vsel 1, %v2718, 0.0
  %v2803 = vsel 1, %v2719, 0.0
  %v2804 = vsel 1, %v2720, 0.0
  %v2805 = vsel 1, %v2721, 0.0
  %v2806 = vsel 1, %v2722, 0.0
  %v2807 = vsel 1, %v2723, 0.0
  %v2808 = vsel 1, %v2724, 0.0
  %v2809 = vsel 1, %v2725, 0.0
  %v2810 = vsel 1, %v2726, 0.0
  %v2811 = vsel 1, %v2727, 0.0
  %v2812 = vsel 1, %v2728, 0.0
  %v2813 = vsel 1, %v2729, 0.0
  %v2814 = vsel 1, %v2730, 0.0
  %v2815 = vsel 1, %v2731, 0.0
  %v2816 = vsel 1, %v2732, 0.0
  %v2817 = vsel 1, %v2733, 0.0
  %v2818 = vsel 1, %v2734, 0.0
  %v2819 = vsel 1, %v2735, 0.0
  %v2820 = vsel 1, %v2736, 0.0
  %v2821 = vsel 1, %v2737, 0.0
  %v2822 = vsel %vm2751, %v2738, 0.0
  %v2823 = vsel %vm2751, %v2739, 0.0
  %v2824 = vpack.c.bf16 %v2753, %v2752
  %v2825 = vpack.c.bf16 %v2755, %v2754
  %v2826 = vpack.c.bf16 %v2757, %v2756
  %v2827 = vpack.c.bf16 %v2759, %v2758
  %v2828 = vpack.c.bf16 %v2761, %v2760
  %v2829 = vpack.c.bf16 %v2763, %v2762
  %v2830 = vpack.c.bf16 %v2765, %v2764
  %v2831 = vpack.c.bf16 %v2767, %v2766
  %v2832 = vpack.c.bf16 %v2769, %v2768
  %v2833 = vpack.c.bf16 %v2771, %v2770
  %v2834 = vpack.c.bf16 %v2773, %v2772
  %v2835 = vpack.c.bf16 %v2775, %v2774
  %v2836 = vpack.c.bf16 %v2777, %v2776
  %v2837 = vpack.c.bf16 %v2779, %v2778
  %v2838 = vpack.c.bf16 %v2781, %v2780
  %v2839 = vpack.c.bf16 %v2783, %v2782
  %v2840 = vpack.c.bf16 %v2785, %v2784
  %v2841 = vpack.c.bf16 %v2787, %v2786
  %v2842 = vpack.c.bf16 %v2789, %v2788
  %v2843 = vpack.c.bf16 %v2791, %v2790
  %v2844 = vpack.c.bf16 %v2793, %v2792
  %v2845 = vpack.c.bf16 %v2795, %v2794
  %v2846 = vpack.c.bf16 %v2797, %v2796
  %v2847 = vpack.c.bf16 %v2799, %v2798
  %v2848 = vpack.c.bf16 %v2801, %v2800
  %v2849 = vpack.c.bf16 %v2803, %v2802
  %v2850 = vpack.c.bf16 %v2805, %v2804
  %v2851 = vpack.c.bf16 %v2807, %v2806
  %v2852 = vpack.c.bf16 %v2809, %v2808
  %v2853 = vpack.c.bf16 %v2811, %v2810
  %v2854 = vpack.c.bf16 %v2813, %v2812
  %v2855 = vpack.c.bf16 %v2815, %v2814
  %v2856 = vpack.c.bf16 %v2817, %v2816
  %v2857 = vpack.c.bf16 %v2819, %v2818
  %v2858 = vpack.c.bf16 %v2821, %v2820
  %v2859 = vpack.c.bf16 %v2823, %v2822
  %v2861 = vshrl.u32 %v2824, 16
  %v2863 = vrot.slane %v2861, 7
  %v2864 = vshll.u32 %v2824, 16
  %v2866 = vor.u32 %v2863, %v2864
  %v2868 = vshrl.u32 %v2825, 16
  %v2870 = vrot.slane %v2868, 7
  %v2871 = vshll.u32 %v2825, 16
  %v2873 = vor.u32 %v2870, %v2871
  %v2875 = vshrl.u32 %v2826, 16
  %v2877 = vrot.slane %v2875, 7
  %v2878 = vshll.u32 %v2826, 16
  %v2880 = vor.u32 %v2877, %v2878
  %v2882 = vshrl.u32 %v2827, 16
  %v2884 = vrot.slane %v2882, 7
  %v2885 = vshll.u32 %v2827, 16
  %v2887 = vor.u32 %v2884, %v2885
  %v2889 = vshrl.u32 %v2828, 16
  %v2891 = vrot.slane %v2889, 7
  %v2892 = vshll.u32 %v2828, 16
  %v2894 = vor.u32 %v2891, %v2892
  %v2896 = vshrl.u32 %v2829, 16
  %v2898 = vrot.slane %v2896, 7
  %v2899 = vshll.u32 %v2829, 16
  %v2901 = vor.u32 %v2898, %v2899
  %v2903 = vshrl.u32 %v2830, 16
  %v2905 = vrot.slane %v2903, 7
  %v2906 = vshll.u32 %v2830, 16
  %v2908 = vor.u32 %v2905, %v2906
  %v2910 = vshrl.u32 %v2831, 16
  %v2912 = vrot.slane %v2910, 7
  %v2913 = vshll.u32 %v2831, 16
  %v2915 = vor.u32 %v2912, %v2913
  %v2917 = vshrl.u32 %v2832, 16
  %v2919 = vrot.slane %v2917, 7
  %v2920 = vshll.u32 %v2832, 16
  %v2922 = vor.u32 %v2919, %v2920
  %v2924 = vshrl.u32 %v2833, 16
  %v2926 = vrot.slane %v2924, 7
  %v2927 = vshll.u32 %v2833, 16
  %v2929 = vor.u32 %v2926, %v2927
  %v2931 = vshrl.u32 %v2834, 16
  %v2933 = vrot.slane %v2931, 7
  %v2934 = vshll.u32 %v2834, 16
  %v2936 = vor.u32 %v2933, %v2934
  %v2938 = vshrl.u32 %v2835, 16
  %v2940 = vrot.slane %v2938, 7
  %v2941 = vshll.u32 %v2835, 16
  %v2943 = vor.u32 %v2940, %v2941
  %v2945 = vshrl.u32 %v2836, 16
  %v2947 = vrot.slane %v2945, 7
  %v2948 = vshll.u32 %v2836, 16
  %v2950 = vor.u32 %v2947, %v2948
  %v2952 = vshrl.u32 %v2837, 16
  %v2954 = vrot.slane %v2952, 7
  %v2955 = vshll.u32 %v2837, 16
  %v2957 = vor.u32 %v2954, %v2955
  %v2959 = vshrl.u32 %v2838, 16
  %v2961 = vrot.slane %v2959, 7
  %v2962 = vshll.u32 %v2838, 16
  %v2964 = vor.u32 %v2961, %v2962
  %v2966 = vshrl.u32 %v2839, 16
  %v2968 = vrot.slane %v2966, 7
  %v2969 = vshll.u32 %v2839, 16
  %v2971 = vor.u32 %v2968, %v2969
  %v2973 = vshrl.u32 %v2840, 16
  %v2975 = vrot.slane %v2973, 7
  %v2976 = vshll.u32 %v2840, 16
  %v2978 = vor.u32 %v2975, %v2976
  %v2980 = vshrl.u32 %v2841, 16
  %v2982 = vrot.slane %v2980, 7
  %v2983 = vshll.u32 %v2841, 16
  %v2985 = vor.u32 %v2982, %v2983
  %v2987 = vshrl.u32 %v2842, 16
  %v2989 = vrot.slane %v2987, 7
  %v2990 = vshll.u32 %v2842, 16
  %v2992 = vor.u32 %v2989, %v2990
  %v2994 = vshrl.u32 %v2843, 16
  %v2996 = vrot.slane %v2994, 7
  %v2997 = vshll.u32 %v2843, 16
  %v2999 = vor.u32 %v2996, %v2997
  %v3001 = vshrl.u32 %v2844, 16
  %v3003 = vrot.slane %v3001, 7
  %v3004 = vshll.u32 %v2844, 16
  %v3006 = vor.u32 %v3003, %v3004
  %v3008 = vshrl.u32 %v2845, 16
  %v3010 = vrot.slane %v3008, 7
  %v3011 = vshll.u32 %v2845, 16
  %v3013 = vor.u32 %v3010, %v3011
  %v3015 = vshrl.u32 %v2846, 16
  %v3017 = vrot.slane %v3015, 7
  %v3018 = vshll.u32 %v2846, 16
  %v3020 = vor.u32 %v3017, %v3018
  %v3022 = vshrl.u32 %v2847, 16
  %v3024 = vrot.slane %v3022, 7
  %v3025 = vshll.u32 %v2847, 16
  %v3027 = vor.u32 %v3024, %v3025
  %v3029 = vshrl.u32 %v2848, 16
  %v3031 = vrot.slane %v3029, 7
  %v3032 = vshll.u32 %v2848, 16
  %v3034 = vor.u32 %v3031, %v3032
  %v3036 = vshrl.u32 %v2849, 16
  %v3038 = vrot.slane %v3036, 7
  %v3039 = vshll.u32 %v2849, 16
  %v3041 = vor.u32 %v3038, %v3039
  %v3043 = vshrl.u32 %v2850, 16
  %v3045 = vrot.slane %v3043, 7
  %v3046 = vshll.u32 %v2850, 16
  %v3048 = vor.u32 %v3045, %v3046
  %v3050 = vshrl.u32 %v2851, 16
  %v3052 = vrot.slane %v3050, 7
  %v3053 = vshll.u32 %v2851, 16
  %v3055 = vor.u32 %v3052, %v3053
  %v3057 = vshrl.u32 %v2852, 16
  %v3059 = vrot.slane %v3057, 7
  %v3060 = vshll.u32 %v2852, 16
  %v3062 = vor.u32 %v3059, %v3060
  %v3064 = vshrl.u32 %v2853, 16
  %v3066 = vrot.slane %v3064, 7
  %v3067 = vshll.u32 %v2853, 16
  %v3069 = vor.u32 %v3066, %v3067
  %v3071 = vshrl.u32 %v2854, 16
  %v3073 = vrot.slane %v3071, 7
  %v3074 = vshll.u32 %v2854, 16
  %v3076 = vor.u32 %v3073, %v3074
  %v3078 = vshrl.u32 %v2855, 16
  %v3080 = vrot.slane %v3078, 7
  %v3081 = vshll.u32 %v2855, 16
  %v3083 = vor.u32 %v3080, %v3081
  %v3085 = vshrl.u32 %v2856, 16
  %v3087 = vrot.slane %v3085, 7
  %v3088 = vshll.u32 %v2856, 16
  %v3090 = vor.u32 %v3087, %v3088
  %v3092 = vshrl.u32 %v2857, 16
  %v3094 = vrot.slane %v3092, 7
  %v3095 = vshll.u32 %v2857, 16
  %v3097 = vor.u32 %v3094, %v3095
  %v3099 = vshrl.u32 %v2858, 16
  %v3101 = vrot.slane %v3099, 7
  %v3102 = vshll.u32 %v2858, 16
  %v3104 = vor.u32 %v3101, %v3102
  %v3106 = vshrl.u32 %v2859, 16
  %v3108 = vrot.slane %v3106, 7
  %v3109 = vshll.u32 %v2859, 16
  %v3111 = vor.u32 %v3108, %v3109
  %vm3184 = vcmask 1040384
  %vm3185 = vsmask.f32 256
  %vm3186 = vmand %vm3184, %vm3185
  %v3187 = vsel %vm3186, 0, %v2866
  %v3188 = vsel %vm3186, 0, %v2873
  %v3189 = vsel %vm3186, 0, %v2880
  %v3190 = vsel %vm3186, 0, %v2887
  %v3191 = vsel %vm3186, 0, %v2894
  %v3192 = vsel %vm3186, 0, %v2901
  %v3193 = vsel %vm3186, 0, %v2908
  %v3194 = vsel %vm3186, 0, %v2915
  %v3195 = vsel %vm3186, 0, %v2922
  %v3196 = vsel %vm3186, 0, %v2929
  %v3197 = vsel %vm3186, 0, %v2936
  %v3198 = vsel %vm3186, 0, %v2943
  %v3199 = vsel %vm3186, 0, %v2950
  %v3200 = vsel %vm3186, 0, %v2957
  %v3201 = vsel %vm3186, 0, %v2964
  %v3202 = vsel %vm3186, 0, %v2971
  %v3203 = vsel %vm3186, 0, %v2978
  %v3204 = vsel %vm3186, 0, %v2985
  %v3205 = vsel %vm3186, 0, %v2992
  %v3206 = vsel %vm3186, 0, %v2999
  %v3207 = vsel %vm3186, 0, %v3006
  %v3208 = vsel %vm3186, 0, %v3013
  %v3209 = vsel %vm3186, 0, %v3020
  %v3210 = vsel %vm3186, 0, %v3027
  %v3211 = vsel %vm3186, 0, %v3034
  %v3212 = vsel %vm3186, 0, %v3041
  %v3213 = vsel %vm3186, 0, %v3048
  %v3214 = vsel %vm3186, 0, %v3055
  %v3215 = vsel %vm3186, 0, %v3062
  %v3216 = vsel %vm3186, 0, %v3069
  %v3217 = vsel %vm3186, 0, %v3076
  %v3218 = vsel %vm3186, 0, %v3083
  %v3219 = vsel %vm3186, 0, %v3090
  %v3220 = vsel %vm3186, 0, %v3097
  %v3221 = vsel %vm3186, 0, %v3104
  %v3222 = vsel %vm3186, 0, %v3111
  %v3223 = vsel %vm3186, %v2863, 0
  %v3224 = vsel %vm3186, %v2870, 0
  %v3225 = vsel %vm3186, %v2877, 0
  %v3226 = vsel %vm3186, %v2884, 0
  %v3227 = vsel %vm3186, %v2891, 0
  %v3228 = vsel %vm3186, %v2898, 0
  %v3229 = vsel %vm3186, %v2905, 0
  %v3230 = vsel %vm3186, %v2912, 0
  %v3231 = vsel %vm3186, %v2919, 0
  %v3232 = vsel %vm3186, %v2926, 0
  %v3233 = vsel %vm3186, %v2933, 0
  %v3234 = vsel %vm3186, %v2940, 0
  %v3235 = vsel %vm3186, %v2947, 0
  %v3236 = vsel %vm3186, %v2954, 0
  %v3237 = vsel %vm3186, %v2961, 0
  %v3238 = vsel %vm3186, %v2968, 0
  %v3239 = vsel %vm3186, %v2975, 0
  %v3240 = vsel %vm3186, %v2982, 0
  %v3241 = vsel %vm3186, %v2989, 0
  %v3242 = vsel %vm3186, %v2996, 0
  %v3243 = vsel %vm3186, %v3003, 0
  %v3244 = vsel %vm3186, %v3010, 0
  %v3245 = vsel %vm3186, %v3017, 0
  %v3246 = vsel %vm3186, %v3024, 0
  %v3247 = vsel %vm3186, %v3031, 0
  %v3248 = vsel %vm3186, %v3038, 0
  %v3249 = vsel %vm3186, %v3045, 0
  %v3250 = vsel %vm3186, %v3052, 0
  %v3251 = vsel %vm3186, %v3059, 0
  %v3252 = vsel %vm3186, %v3066, 0
  %v3253 = vsel %vm3186, %v3073, 0
  %v3254 = vsel %vm3186, %v3080, 0
  %v3255 = vsel %vm3186, %v3087, 0
  %v3256 = vsel %vm3186, %v3094, 0
  %v3257 = vsel %vm3186, %v3101, 0
  %v3258 = vsel %vm3186, %v3108, 0
  %v3260 = vshrl.u32 %v3187, 16
  %v3262 = vshll.u32 %v3187, 16
  %v3264 = vrot.slane %v3262, 1
  %v3265 = vor.u32 %v3260, %v3264
  %v3267 = vshll.u32 %v3223, 16
  %v3269 = vrot.slane %v3267, 1
  %v3270 = vsel %vm433, %v3265, %v3269
  %v3272 = vshrl.u32 %v3188, 16
  %v3274 = vshll.u32 %v3188, 16
  %v3276 = vrot.slane %v3274, 1
  %v3277 = vor.u32 %v3272, %v3276
  %v3279 = vshll.u32 %v3224, 16
  %v3281 = vrot.slane %v3279, 1
  %v3282 = vsel %vm433, %v3277, %v3281
  %v3284 = vshrl.u32 %v3189, 16
  %v3286 = vshll.u32 %v3189, 16
  %v3288 = vrot.slane %v3286, 1
  %v3289 = vor.u32 %v3284, %v3288
  %v3291 = vshll.u32 %v3225, 16
  %v3293 = vrot.slane %v3291, 1
  %v3294 = vsel %vm433, %v3289, %v3293
  %v3296 = vshrl.u32 %v3190, 16
  %v3298 = vshll.u32 %v3190, 16
  %v3300 = vrot.slane %v3298, 1
  %v3301 = vor.u32 %v3296, %v3300
  %v3303 = vshll.u32 %v3226, 16
  %v3305 = vrot.slane %v3303, 1
  %v3306 = vsel %vm433, %v3301, %v3305
  %v3308 = vshrl.u32 %v3191, 16
  %v3310 = vshll.u32 %v3191, 16
  %v3312 = vrot.slane %v3310, 1
  %v3313 = vor.u32 %v3308, %v3312
  %v3315 = vshll.u32 %v3227, 16
  %v3317 = vrot.slane %v3315, 1
  %v3318 = vsel %vm433, %v3313, %v3317
  %v3320 = vshrl.u32 %v3192, 16
  %v3322 = vshll.u32 %v3192, 16
  %v3324 = vrot.slane %v3322, 1
  %v3325 = vor.u32 %v3320, %v3324
  %v3327 = vshll.u32 %v3228, 16
  %v3329 = vrot.slane %v3327, 1
  %v3330 = vsel %vm433, %v3325, %v3329
  %v3332 = vshrl.u32 %v3193, 16
  %v3334 = vshll.u32 %v3193, 16
  %v3336 = vrot.slane %v3334, 1
  %v3337 = vor.u32 %v3332, %v3336
  %v3339 = vshll.u32 %v3229, 16
  %v3341 = vrot.slane %v3339, 1
  %v3342 = vsel %vm433, %v3337, %v3341
  %v3344 = vshrl.u32 %v3194, 16
  %v3346 = vshll.u32 %v3194, 16
  %v3348 = vrot.slane %v3346, 1
  %v3349 = vor.u32 %v3344, %v3348
  %v3351 = vshll.u32 %v3230, 16
  %v3353 = vrot.slane %v3351, 1
  %v3354 = vsel %vm433, %v3349, %v3353
  %v3356 = vshrl.u32 %v3195, 16
  %v3358 = vshll.u32 %v3195, 16
  %v3360 = vrot.slane %v3358, 1
  %v3361 = vor.u32 %v3356, %v3360
  %v3363 = vshll.u32 %v3231, 16
  %v3365 = vrot.slane %v3363, 1
  %v3366 = vsel %vm433, %v3361, %v3365
  %v3368 = vshrl.u32 %v3196, 16
  %v3370 = vshll.u32 %v3196, 16
  %v3372 = vrot.slane %v3370, 1
  %v3373 = vor.u32 %v3368, %v3372
  %v3375 = vshll.u32 %v3232, 16
  %v3377 = vrot.slane %v3375, 1
  %v3378 = vsel %vm433, %v3373, %v3377
  %v3380 = vshrl.u32 %v3197, 16
  %v3382 = vshll.u32 %v3197, 16
  %v3384 = vrot.slane %v3382, 1
  %v3385 = vor.u32 %v3380, %v3384
  %v3387 = vshll.u32 %v3233, 16
  %v3389 = vrot.slane %v3387, 1
  %v3390 = vsel %vm433, %v3385, %v3389
  %v3392 = vshrl.u32 %v3198, 16
  %v3394 = vshll.u32 %v3198, 16
  %v3396 = vrot.slane %v3394, 1
  %v3397 = vor.u32 %v3392, %v3396
  %v3399 = vshll.u32 %v3234, 16
  %v3401 = vrot.slane %v3399, 1
  %v3402 = vsel %vm433, %v3397, %v3401
  %v3404 = vshrl.u32 %v3199, 16
  %v3406 = vshll.u32 %v3199, 16
  %v3408 = vrot.slane %v3406, 1
  %v3409 = vor.u32 %v3404, %v3408
  %v3411 = vshll.u32 %v3235, 16
  %v3413 = vrot.slane %v3411, 1
  %v3414 = vsel %vm433, %v3409, %v3413
  %v3416 = vshrl.u32 %v3200, 16
  %v3418 = vshll.u32 %v3200, 16
  %v3420 = vrot.slane %v3418, 1
  %v3421 = vor.u32 %v3416, %v3420
  %v3423 = vshll.u32 %v3236, 16
  %v3425 = vrot.slane %v3423, 1
  %v3426 = vsel %vm433, %v3421, %v3425
  %v3428 = vshrl.u32 %v3201, 16
  %v3430 = vshll.u32 %v3201, 16
  %v3432 = vrot.slane %v3430, 1
  %v3433 = vor.u32 %v3428, %v3432
  %v3435 = vshll.u32 %v3237, 16
  %v3437 = vrot.slane %v3435, 1
  %v3438 = vsel %vm433, %v3433, %v3437
  %v3440 = vshrl.u32 %v3202, 16
  %v3442 = vshll.u32 %v3202, 16
  %v3444 = vrot.slane %v3442, 1
  %v3445 = vor.u32 %v3440, %v3444
  %v3447 = vshll.u32 %v3238, 16
  %v3449 = vrot.slane %v3447, 1
  %v3450 = vsel %vm433, %v3445, %v3449
  %v3452 = vshrl.u32 %v3205, 16
  %v3454 = vshll.u32 %v3205, 16
  %v3456 = vrot.slane %v3454, 1
  %v3457 = vor.u32 %v3452, %v3456
  %v3459 = vshll.u32 %v3241, 16
  %v3461 = vrot.slane %v3459, 1
  %v3462 = vsel %vm433, %v3457, %v3461
  %v3464 = vshrl.u32 %v3206, 16
  %v3466 = vshll.u32 %v3206, 16
  %v3468 = vrot.slane %v3466, 1
  %v3469 = vor.u32 %v3464, %v3468
  %v3471 = vshll.u32 %v3242, 16
  %v3473 = vrot.slane %v3471, 1
  %v3474 = vsel %vm433, %v3469, %v3473
  %v3476 = vshrl.u32 %v3207, 16
  %v3478 = vshll.u32 %v3207, 16
  %v3480 = vrot.slane %v3478, 1
  %v3481 = vor.u32 %v3476, %v3480
  %v3483 = vshll.u32 %v3243, 16
  %v3485 = vrot.slane %v3483, 1
  %v3486 = vsel %vm433, %v3481, %v3485
  %v3488 = vshrl.u32 %v3208, 16
  %v3490 = vshll.u32 %v3208, 16
  %v3492 = vrot.slane %v3490, 1
  %v3493 = vor.u32 %v3488, %v3492
  %v3495 = vshll.u32 %v3244, 16
  %v3497 = vrot.slane %v3495, 1
  %v3498 = vsel %vm433, %v3493, %v3497
  %v3500 = vshrl.u32 %v3209, 16
  %v3502 = vshll.u32 %v3209, 16
  %v3504 = vrot.slane %v3502, 1
  %v3505 = vor.u32 %v3500, %v3504
  %v3507 = vshll.u32 %v3245, 16
  %v3509 = vrot.slane %v3507, 1
  %v3510 = vsel %vm433, %v3505, %v3509
  %v3512 = vshrl.u32 %v3210, 16
  %v3514 = vshll.u32 %v3210, 16
  %v3516 = vrot.slane %v3514, 1
  %v3517 = vor.u32 %v3512, %v3516
  %v3519 = vshll.u32 %v3246, 16
  %v3521 = vrot.slane %v3519, 1
  %v3522 = vsel %vm433, %v3517, %v3521
  %v3524 = vshrl.u32 %v3211, 16
  %v3526 = vshll.u32 %v3211, 16
  %v3528 = vrot.slane %v3526, 1
  %v3529 = vor.u32 %v3524, %v3528
  %v3531 = vshll.u32 %v3247, 16
  %v3533 = vrot.slane %v3531, 1
  %v3534 = vsel %vm433, %v3529, %v3533
  %v3536 = vshrl.u32 %v3212, 16
  %v3538 = vshll.u32 %v3212, 16
  %v3540 = vrot.slane %v3538, 1
  %v3541 = vor.u32 %v3536, %v3540
  %v3543 = vshll.u32 %v3248, 16
  %v3545 = vrot.slane %v3543, 1
  %v3546 = vsel %vm433, %v3541, %v3545
  %v3548 = vshrl.u32 %v3213, 16
  %v3550 = vshll.u32 %v3213, 16
  %v3552 = vrot.slane %v3550, 1
  %v3553 = vor.u32 %v3548, %v3552
  %v3555 = vshll.u32 %v3249, 16
  %v3557 = vrot.slane %v3555, 1
  %v3558 = vsel %vm433, %v3553, %v3557
  %v3560 = vshrl.u32 %v3214, 16
  %v3562 = vshll.u32 %v3214, 16
  %v3564 = vrot.slane %v3562, 1
  %v3565 = vor.u32 %v3560, %v3564
  %v3567 = vshll.u32 %v3250, 16
  %v3569 = vrot.slane %v3567, 1
  %v3570 = vsel %vm433, %v3565, %v3569
  %v3572 = vshrl.u32 %v3215, 16
  %v3574 = vshll.u32 %v3215, 16
  %v3576 = vrot.slane %v3574, 1
  %v3577 = vor.u32 %v3572, %v3576
  %v3579 = vshll.u32 %v3251, 16
  %v3581 = vrot.slane %v3579, 1
  %v3582 = vsel %vm433, %v3577, %v3581
  %v3584 = vshrl.u32 %v3216, 16
  %v3586 = vshll.u32 %v3216, 16
  %v3588 = vrot.slane %v3586, 1
  %v3589 = vor.u32 %v3584, %v3588
  %v3591 = vshll.u32 %v3252, 16
  %v3593 = vrot.slane %v3591, 1
  %v3594 = vsel %vm433, %v3589, %v3593
  %v3596 = vshrl.u32 %v3217, 16
  %v3598 = vshll.u32 %v3217, 16
  %v3600 = vrot.slane %v3598, 1
  %v3601 = vor.u32 %v3596, %v3600
  %v3603 = vshll.u32 %v3253, 16
  %v3605 = vrot.slane %v3603, 1
  %v3606 = vsel %vm433, %v3601, %v3605
  %v3608 = vshrl.u32 %v3218, 16
  %v3610 = vshll.u32 %v3218, 16
  %v3612 = vrot.slane %v3610, 1
  %v3613 = vor.u32 %v3608, %v3612
  %v3615 = vshll.u32 %v3254, 16
  %v3617 = vrot.slane %v3615, 1
  %v3618 = vsel %vm433, %v3613, %v3617
  %v3620 = vshrl.u32 %v3219, 16
  %v3622 = vshll.u32 %v3219, 16
  %v3624 = vrot.slane %v3622, 1
  %v3625 = vor.u32 %v3620, %v3624
  %v3627 = vshll.u32 %v3255, 16
  %v3629 = vrot.slane %v3627, 1
  %v3630 = vsel %vm433, %v3625, %v3629
  %v3632 = vshrl.u32 %v3220, 16
  %v3634 = vshll.u32 %v3220, 16
  %v3636 = vrot.slane %v3634, 1
  %v3637 = vor.u32 %v3632, %v3636
  %v3639 = vshll.u32 %v3256, 16
  %v3641 = vrot.slane %v3639, 1
  %v3642 = vsel %vm433, %v3637, %v3641
  %3643 = vrot.lane.b32.xlu0 %v3270, 8
  %v3644 = vpop.permute.xlu0 %3643
  %3645 = vrot.lane.b32.xlu0 %v3282, 8
  %v3646 = vpop.permute.xlu0 %3645
  %3647 = vrot.lane.b32.xlu0 %v3294, 8
  %v3648 = vpop.permute.xlu0 %3647
  %3649 = vrot.lane.b32.xlu0 %v3306, 8
  %v3650 = vpop.permute.xlu0 %3649
  %3651 = vrot.lane.b32.xlu0 %v3318, 8
  %v3652 = vpop.permute.xlu0 %3651
  %3653 = vrot.lane.b32.xlu0 %v3330, 8
  %v3654 = vpop.permute.xlu0 %3653
  %3655 = vrot.lane.b32.xlu0 %v3342, 8
  %v3656 = vpop.permute.xlu0 %3655
  %3657 = vrot.lane.b32.xlu0 %v3354, 8
  %v3658 = vpop.permute.xlu0 %3657
  %3659 = vrot.lane.b32.xlu0 %v3366, 8
  %v3660 = vpop.permute.xlu0 %3659
  %3661 = vrot.lane.b32.xlu0 %v3378, 8
  %v3662 = vpop.permute.xlu0 %3661
  %3663 = vrot.lane.b32.xlu0 %v3390, 8
  %v3664 = vpop.permute.xlu0 %3663
  %3665 = vrot.lane.b32.xlu0 %v3402, 8
  %v3666 = vpop.permute.xlu0 %3665
  %3667 = vrot.lane.b32.xlu0 %v3414, 8
  %v3668 = vpop.permute.xlu0 %3667
  %3669 = vrot.lane.b32.xlu0 %v3426, 8
  %v3670 = vpop.permute.xlu0 %3669
  %3671 = vrot.lane.b32.xlu0 %v3438, 8
  %v3672 = vpop.permute.xlu0 %3671
  %3673 = vrot.lane.b32.xlu0 %v3450, 8
  %v3674 = vpop.permute.xlu0 %3673
  %3675 = vrot.lane.b32.xlu0 %v3462, 8
  %v3676 = vpop.permute.xlu0 %3675
  %3677 = vrot.lane.b32.xlu0 %v3474, 8
  %v3678 = vpop.permute.xlu0 %3677
  %3679 = vrot.lane.b32.xlu0 %v3486, 8
  %v3680 = vpop.permute.xlu0 %3679
  %3681 = vrot.lane.b32.xlu0 %v3498, 8
  %v3682 = vpop.permute.xlu0 %3681
  %3683 = vrot.lane.b32.xlu0 %v3510, 8
  %v3684 = vpop.permute.xlu0 %3683
  %3685 = vrot.lane.b32.xlu0 %v3522, 8
  %v3686 = vpop.permute.xlu0 %3685
  %3687 = vrot.lane.b32.xlu0 %v3534, 8
  %v3688 = vpop.permute.xlu0 %3687
  %3689 = vrot.lane.b32.xlu0 %v3546, 8
  %v3690 = vpop.permute.xlu0 %3689
  %3691 = vrot.lane.b32.xlu0 %v3558, 8
  %v3692 = vpop.permute.xlu0 %3691
  %3693 = vrot.lane.b32.xlu0 %v3570, 8
  %v3694 = vpop.permute.xlu0 %3693
  %3695 = vrot.lane.b32.xlu0 %v3582, 8
  %v3696 = vpop.permute.xlu0 %3695
  %3697 = vrot.lane.b32.xlu0 %v3594, 8
  %v3698 = vpop.permute.xlu0 %3697
  %3699 = vrot.lane.b32.xlu0 %v3606, 8
  %v3700 = vpop.permute.xlu0 %3699
  %3701 = vrot.lane.b32.xlu0 %v3618, 8
  %v3702 = vpop.permute.xlu0 %3701
  %3703 = vrot.lane.b32.xlu0 %v3630, 8
  %v3704 = vpop.permute.xlu0 %3703
  %3705 = vrot.lane.b32.xlu0 %v3642, 8
  %v3706 = vpop.permute.xlu0 %3705
  %v3771 = vrot.slane %v3187, 1
  %v3772 = vrot.slane %v3223, 1
  %v3773 = vsel %vm938, %v3771, %v3772
  %v3774 = vrot.slane %v3188, 1
  %v3775 = vrot.slane %v3224, 1
  %v3776 = vsel %vm938, %v3774, %v3775
  %v3777 = vrot.slane %v3189, 1
  %v3778 = vrot.slane %v3225, 1
  %v3779 = vsel %vm938, %v3777, %v3778
  %v3780 = vrot.slane %v3190, 1
  %v3781 = vrot.slane %v3226, 1
  %v3782 = vsel %vm938, %v3780, %v3781
  %v3783 = vrot.slane %v3191, 1
  %v3784 = vrot.slane %v3227, 1
  %v3785 = vsel %vm938, %v3783, %v3784
  %v3786 = vrot.slane %v3192, 1
  %v3787 = vrot.slane %v3228, 1
  %v3788 = vsel %vm938, %v3786, %v3787
  %v3789 = vrot.slane %v3193, 1
  %v3790 = vrot.slane %v3229, 1
  %v3791 = vsel %vm938, %v3789, %v3790
  %v3792 = vrot.slane %v3194, 1
  %v3793 = vrot.slane %v3230, 1
  %v3794 = vsel %vm938, %v3792, %v3793
  %v3795 = vrot.slane %v3195, 1
  %v3796 = vrot.slane %v3231, 1
  %v3797 = vsel %vm938, %v3795, %v3796
  %v3798 = vrot.slane %v3196, 1
  %v3799 = vrot.slane %v3232, 1
  %v3800 = vsel %vm938, %v3798, %v3799
  %v3801 = vrot.slane %v3197, 1
  %v3802 = vrot.slane %v3233, 1
  %v3803 = vsel %vm938, %v3801, %v3802
  %v3804 = vrot.slane %v3198, 1
  %v3805 = vrot.slane %v3234, 1
  %v3806 = vsel %vm938, %v3804, %v3805
  %v3807 = vrot.slane %v3199, 1
  %v3808 = vrot.slane %v3235, 1
  %v3809 = vsel %vm938, %v3807, %v3808
  %v3810 = vrot.slane %v3200, 1
  %v3811 = vrot.slane %v3236, 1
  %v3812 = vsel %vm938, %v3810, %v3811
  %v3813 = vrot.slane %v3201, 1
  %v3814 = vrot.slane %v3237, 1
  %v3815 = vsel %vm938, %v3813, %v3814
  %v3816 = vrot.slane %v3202, 1
  %v3817 = vrot.slane %v3238, 1
  %v3818 = vsel %vm938, %v3816, %v3817
  %v3819 = vrot.slane %v3205, 1
  %v3820 = vrot.slane %v3241, 1
  %v3821 = vsel %vm938, %v3819, %v3820
  %v3822 = vrot.slane %v3206, 1
  %v3823 = vrot.slane %v3242, 1
  %v3824 = vsel %vm938, %v3822, %v3823
  %v3825 = vrot.slane %v3207, 1
  %v3826 = vrot.slane %v3243, 1
  %v3827 = vsel %vm938, %v3825, %v3826
  %v3828 = vrot.slane %v3208, 1
  %v3829 = vrot.slane %v3244, 1
  %v3830 = vsel %vm938, %v3828, %v3829
  %v3831 = vrot.slane %v3209, 1
  %v3832 = vrot.slane %v3245, 1
  %v3833 = vsel %vm938, %v3831, %v3832
  %v3834 = vrot.slane %v3210, 1
  %v3835 = vrot.slane %v3246, 1
  %v3836 = vsel %vm938, %v3834, %v3835
  %v3837 = vrot.slane %v3211, 1
  %v3838 = vrot.slane %v3247, 1
  %v3839 = vsel %vm938, %v3837, %v3838
  %v3840 = vrot.slane %v3212, 1
  %v3841 = vrot.slane %v3248, 1
  %v3842 = vsel %vm938, %v3840, %v3841
  %v3843 = vrot.slane %v3213, 1
  %v3844 = vrot.slane %v3249, 1
  %v3845 = vsel %vm938, %v3843, %v3844
  %v3846 = vrot.slane %v3214, 1
  %v3847 = vrot.slane %v3250, 1
  %v3848 = vsel %vm938, %v3846, %v3847
  %v3849 = vrot.slane %v3215, 1
  %v3850 = vrot.slane %v3251, 1
  %v3851 = vsel %vm938, %v3849, %v3850
  %v3852 = vrot.slane %v3216, 1
  %v3853 = vrot.slane %v3252, 1
  %v3854 = vsel %vm938, %v3852, %v3853
  %v3855 = vrot.slane %v3217, 1
  %v3856 = vrot.slane %v3253, 1
  %v3857 = vsel %vm938, %v3855, %v3856
  %v3858 = vrot.slane %v3218, 1
  %v3859 = vrot.slane %v3254, 1
  %v3860 = vsel %vm938, %v3858, %v3859
  %v3861 = vrot.slane %v3219, 1
  %v3862 = vrot.slane %v3255, 1
  %v3863 = vsel %vm938, %v3861, %v3862
  %v3864 = vrot.slane %v3220, 1
  %v3865 = vrot.slane %v3256, 1
  %v3866 = vsel %vm938, %v3864, %v3865
  %3867 = vrot.lane.b32.xlu0 %v3773, 16
  %v3868 = vpop.permute.xlu0 %3867
  %3869 = vrot.lane.b32.xlu0 %v3776, 16
  %v3870 = vpop.permute.xlu0 %3869
  %3871 = vrot.lane.b32.xlu0 %v3779, 16
  %v3872 = vpop.permute.xlu0 %3871
  %3873 = vrot.lane.b32.xlu0 %v3782, 16
  %v3874 = vpop.permute.xlu0 %3873
  %3875 = vrot.lane.b32.xlu0 %v3785, 16
  %v3876 = vpop.permute.xlu0 %3875
  %3877 = vrot.lane.b32.xlu0 %v3788, 16
  %v3878 = vpop.permute.xlu0 %3877
  %3879 = vrot.lane.b32.xlu0 %v3791, 16
  %v3880 = vpop.permute.xlu0 %3879
  %3881 = vrot.lane.b32.xlu0 %v3794, 16
  %v3882 = vpop.permute.xlu0 %3881
  %3883 = vrot.lane.b32.xlu0 %v3797, 16
  %v3884 = vpop.permute.xlu0 %3883
  %3885 = vrot.lane.b32.xlu0 %v3800, 16
  %v3886 = vpop.permute.xlu0 %3885
  %3887 = vrot.lane.b32.xlu0 %v3803, 16
  %v3888 = vpop.permute.xlu0 %3887
  %3889 = vrot.lane.b32.xlu0 %v3806, 16
  %v3890 = vpop.permute.xlu0 %3889
  %3891 = vrot.lane.b32.xlu0 %v3809, 16
  %v3892 = vpop.permute.xlu0 %3891
  %3893 = vrot.lane.b32.xlu0 %v3812, 16
  %v3894 = vpop.permute.xlu0 %3893
  %3895 = vrot.lane.b32.xlu0 %v3815, 16
  %v3896 = vpop.permute.xlu0 %3895
  %3897 = vrot.lane.b32.xlu0 %v3818, 16
  %v3898 = vpop.permute.xlu0 %3897
  %3899 = vrot.lane.b32.xlu0 %v3821, 16
  %v3900 = vpop.permute.xlu0 %3899
  %3901 = vrot.lane.b32.xlu0 %v3824, 16
  %v3902 = vpop.permute.xlu0 %3901
  %3903 = vrot.lane.b32.xlu0 %v3827, 16
  %v3904 = vpop.permute.xlu0 %3903
  %3905 = vrot.lane.b32.xlu0 %v3830, 16
  %v3906 = vpop.permute.xlu0 %3905
  %3907 = vrot.lane.b32.xlu0 %v3833, 16
  %v3908 = vpop.permute.xlu0 %3907
  %3909 = vrot.lane.b32.xlu0 %v3836, 16
  %v3910 = vpop.permute.xlu0 %3909
  %3911 = vrot.lane.b32.xlu0 %v3839, 16
  %v3912 = vpop.permute.xlu0 %3911
  %3913 = vrot.lane.b32.xlu0 %v3842, 16
  %v3914 = vpop.permute.xlu0 %3913
  %3915 = vrot.lane.b32.xlu0 %v3845, 16
  %v3916 = vpop.permute.xlu0 %3915
  %3917 = vrot.lane.b32.xlu0 %v3848, 16
  %v3918 = vpop.permute.xlu0 %3917
  %3919 = vrot.lane.b32.xlu0 %v3851, 16
  %v3920 = vpop.permute.xlu0 %3919
  %3921 = vrot.lane.b32.xlu0 %v3854, 16
  %v3922 = vpop.permute.xlu0 %3921
  %3923 = vrot.lane.b32.xlu0 %v3857, 16
  %v3924 = vpop.permute.xlu0 %3923
  %3925 = vrot.lane.b32.xlu0 %v3860, 16
  %v3926 = vpop.permute.xlu0 %3925
  %3927 = vrot.lane.b32.xlu0 %v3863, 16
  %v3928 = vpop.permute.xlu0 %3927
  %3929 = vrot.lane.b32.xlu0 %v3866, 16
  %v3930 = vpop.permute.xlu0 %3929
  %3933 = vrot.lane.b32.xlu0 %v3188, 24
  %v3934 = vpop.permute.xlu0 %3933
  %3935 = vrot.lane.b32.xlu0 %v3189, 24
  %v3936 = vpop.permute.xlu0 %3935
  %3937 = vrot.lane.b32.xlu0 %v3190, 24
  %v3938 = vpop.permute.xlu0 %3937
  %3939 = vrot.lane.b32.xlu0 %v3191, 24
  %v3940 = vpop.permute.xlu0 %3939
  %3941 = vrot.lane.b32.xlu0 %v3192, 24
  %v3942 = vpop.permute.xlu0 %3941
  %3943 = vrot.lane.b32.xlu0 %v3193, 24
  %v3944 = vpop.permute.xlu0 %3943
  %3945 = vrot.lane.b32.xlu0 %v3194, 24
  %v3946 = vpop.permute.xlu0 %3945
  %3947 = vrot.lane.b32.xlu0 %v3195, 24
  %v3948 = vpop.permute.xlu0 %3947
  %3949 = vrot.lane.b32.xlu0 %v3196, 24
  %v3950 = vpop.permute.xlu0 %3949
  %3951 = vrot.lane.b32.xlu0 %v3197, 24
  %v3952 = vpop.permute.xlu0 %3951
  %3953 = vrot.lane.b32.xlu0 %v3198, 24
  %v3954 = vpop.permute.xlu0 %3953
  %3955 = vrot.lane.b32.xlu0 %v3199, 24
  %v3956 = vpop.permute.xlu0 %3955
  %3957 = vrot.lane.b32.xlu0 %v3200, 24
  %v3958 = vpop.permute.xlu0 %3957
  %3959 = vrot.lane.b32.xlu0 %v3201, 24
  %v3960 = vpop.permute.xlu0 %3959
  %3961 = vrot.lane.b32.xlu0 %v3202, 24
  %v3962 = vpop.permute.xlu0 %3961
  %3963 = vrot.lane.b32.xlu0 %v3203, 24
  %v3964 = vpop.permute.xlu0 %3963
  %3965 = vrot.lane.b32.xlu0 %v3206, 24
  %v3966 = vpop.permute.xlu0 %3965
  %3967 = vrot.lane.b32.xlu0 %v3207, 24
  %v3968 = vpop.permute.xlu0 %3967
  %3969 = vrot.lane.b32.xlu0 %v3208, 24
  %v3970 = vpop.permute.xlu0 %3969
  %3971 = vrot.lane.b32.xlu0 %v3209, 24
  %v3972 = vpop.permute.xlu0 %3971
  %3973 = vrot.lane.b32.xlu0 %v3210, 24
  %v3974 = vpop.permute.xlu0 %3973
  %3975 = vrot.lane.b32.xlu0 %v3211, 24
  %v3976 = vpop.permute.xlu0 %3975
  %3977 = vrot.lane.b32.xlu0 %v3212, 24
  %v3978 = vpop.permute.xlu0 %3977
  %3979 = vrot.lane.b32.xlu0 %v3213, 24
  %v3980 = vpop.permute.xlu0 %3979
  %3981 = vrot.lane.b32.xlu0 %v3214, 24
  %v3982 = vpop.permute.xlu0 %3981
  %3983 = vrot.lane.b32.xlu0 %v3215, 24
  %v3984 = vpop.permute.xlu0 %3983
  %3985 = vrot.lane.b32.xlu0 %v3216, 24
  %v3986 = vpop.permute.xlu0 %3985
  %3987 = vrot.lane.b32.xlu0 %v3217, 24
  %v3988 = vpop.permute.xlu0 %3987
  %3989 = vrot.lane.b32.xlu0 %v3218, 24
  %v3990 = vpop.permute.xlu0 %3989
  %3991 = vrot.lane.b32.xlu0 %v3219, 24
  %v3992 = vpop.permute.xlu0 %3991
  %3993 = vrot.lane.b32.xlu0 %v3220, 24
  %v3994 = vpop.permute.xlu0 %3993
  %3995 = vrot.lane.b32.xlu0 %v3221, 24
  %v3996 = vpop.permute.xlu0 %3995
  %v3998 = vshrl.u32 %v3203, 16
  %v4000 = vshll.u32 %v3203, 16
  %v4002 = vrot.slane %v4000, 1
  %v4003 = vor.u32 %v3998, %v4002
  %v4005 = vshll.u32 %v3239, 16
  %v4007 = vrot.slane %v4005, 1
  %v4008 = vsel %vm433, %v4003, %v4007
  %v4010 = vshrl.u32 %v3221, 16
  %v4012 = vshll.u32 %v3221, 16
  %v4014 = vrot.slane %v4012, 1
  %v4015 = vor.u32 %v4010, %v4014
  %v4017 = vshll.u32 %v3257, 16
  %v4019 = vrot.slane %v4017, 1
  %v4020 = vsel %vm433, %v4015, %v4019
  %4021 = vrot.lane.b32.xlu0 %v3282, 32
  %v4022 = vpop.permute.xlu0 %4021
  %4023 = vrot.lane.b32.xlu0 %v3294, 32
  %v4024 = vpop.permute.xlu0 %4023
  %4025 = vrot.lane.b32.xlu0 %v3306, 32
  %v4026 = vpop.permute.xlu0 %4025
  %4027 = vrot.lane.b32.xlu0 %v3318, 32
  %v4028 = vpop.permute.xlu0 %4027
  %4029 = vrot.lane.b32.xlu0 %v3330, 32
  %v4030 = vpop.permute.xlu0 %4029
  %4031 = vrot.lane.b32.xlu0 %v3342, 32
  %v4032 = vpop.permute.xlu0 %4031
  %4033 = vrot.lane.b32.xlu0 %v3354, 32
  %v4034 = vpop.permute.xlu0 %4033
  %4035 = vrot.lane.b32.xlu0 %v3366, 32
  %v4036 = vpop.permute.xlu0 %4035
  %4037 = vrot.lane.b32.xlu0 %v3378, 32
  %v4038 = vpop.permute.xlu0 %4037
  %4039 = vrot.lane.b32.xlu0 %v3390, 32
  %v4040 = vpop.permute.xlu0 %4039
  %4041 = vrot.lane.b32.xlu0 %v3402, 32
  %v4042 = vpop.permute.xlu0 %4041
  %4043 = vrot.lane.b32.xlu0 %v3414, 32
  %v4044 = vpop.permute.xlu0 %4043
  %4045 = vrot.lane.b32.xlu0 %v3426, 32
  %v4046 = vpop.permute.xlu0 %4045
  %4047 = vrot.lane.b32.xlu0 %v3438, 32
  %v4048 = vpop.permute.xlu0 %4047
  %4049 = vrot.lane.b32.xlu0 %v3450, 32
  %v4050 = vpop.permute.xlu0 %4049
  %4051 = vrot.lane.b32.xlu0 %v4008, 32
  %v4052 = vpop.permute.xlu0 %4051
  %4053 = vrot.lane.b32.xlu0 %v3474, 32
  %v4054 = vpop.permute.xlu0 %4053
  %4055 = vrot.lane.b32.xlu0 %v3486, 32
  %v4056 = vpop.permute.xlu0 %4055
  %4057 = vrot.lane.b32.xlu0 %v3498, 32
  %v4058 = vpop.permute.xlu0 %4057
  %4059 = vrot.lane.b32.xlu0 %v3510, 32
  %v4060 = vpop.permute.xlu0 %4059
  %4061 = vrot.lane.b32.xlu0 %v3522, 32
  %v4062 = vpop.permute.xlu0 %4061
  %4063 = vrot.lane.b32.xlu0 %v3534, 32
  %v4064 = vpop.permute.xlu0 %4063
  %4065 = vrot.lane.b32.xlu0 %v3546, 32
  %v4066 = vpop.permute.xlu0 %4065
  %4067 = vrot.lane.b32.xlu0 %v3558, 32
  %v4068 = vpop.permute.xlu0 %4067
  %4069 = vrot.lane.b32.xlu0 %v3570, 32
  %v4070 = vpop.permute.xlu0 %4069
  %4071 = vrot.lane.b32.xlu0 %v3582, 32
  %v4072 = vpop.permute.xlu0 %4071
  %4073 = vrot.lane.b32.xlu0 %v3594, 32
  %v4074 = vpop.permute.xlu0 %4073
  %4075 = vrot.lane.b32.xlu0 %v3606, 32
  %v4076 = vpop.permute.xlu0 %4075
  %4077 = vrot.lane.b32.xlu0 %v3618, 32
  %v4078 = vpop.permute.xlu0 %4077
  %4079 = vrot.lane.b32.xlu0 %v3630, 32
  %v4080 = vpop.permute.xlu0 %4079
  %4081 = vrot.lane.b32.xlu0 %v3642, 32
  %v4082 = vpop.permute.xlu0 %4081
  %4083 = vrot.lane.b32.xlu0 %v4020, 32
  %v4084 = vpop.permute.xlu0 %4083
  %v4087 = vrot.slane %v3203, 1
  %v4088 = vrot.slane %v3239, 1
  %v4089 = vsel %vm938, %v4087, %v4088
  %v4090 = vrot.slane %v3221, 1
  %v4091 = vrot.slane %v3257, 1
  %v4092 = vsel %vm938, %v4090, %v4091
  %4093 = vrot.lane.b32.xlu0 %v3776, 40
  %v4094 = vpop.permute.xlu0 %4093
  %4095 = vrot.lane.b32.xlu0 %v3779, 40
  %v4096 = vpop.permute.xlu0 %4095
  %4097 = vrot.lane.b32.xlu0 %v3782, 40
  %v4098 = vpop.permute.xlu0 %4097
  %4099 = vrot.lane.b32.xlu0 %v3785, 40
  %v4100 = vpop.permute.xlu0 %4099
  %4101 = vrot.lane.b32.xlu0 %v3788, 40
  %v4102 = vpop.permute.xlu0 %4101
  %4103 = vrot.lane.b32.xlu0 %v3791, 40
  %v4104 = vpop.permute.xlu0 %4103
  %4105 = vrot.lane.b32.xlu0 %v3794, 40
  %v4106 = vpop.permute.xlu0 %4105
  %4107 = vrot.lane.b32.xlu0 %v3797, 40
  %v4108 = vpop.permute.xlu0 %4107
  %4109 = vrot.lane.b32.xlu0 %v3800, 40
  %v4110 = vpop.permute.xlu0 %4109
  %4111 = vrot.lane.b32.xlu0 %v3803, 40
  %v4112 = vpop.permute.xlu0 %4111
  %4113 = vrot.lane.b32.xlu0 %v3806, 40
  %v4114 = vpop.permute.xlu0 %4113
  %4115 = vrot.lane.b32.xlu0 %v3809, 40
  %v4116 = vpop.permute.xlu0 %4115
  %4117 = vrot.lane.b32.xlu0 %v3812, 40
  %v4118 = vpop.permute.xlu0 %4117
  %4119 = vrot.lane.b32.xlu0 %v3815, 40
  %v4120 = vpop.permute.xlu0 %4119
  %4121 = vrot.lane.b32.xlu0 %v3818, 40
  %v4122 = vpop.permute.xlu0 %4121
  %4123 = vrot.lane.b32.xlu0 %v4089, 40
  %v4124 = vpop.permute.xlu0 %4123
  %4125 = vrot.lane.b32.xlu0 %v3824, 40
  %v4126 = vpop.permute.xlu0 %4125
  %4127 = vrot.lane.b32.xlu0 %v3827, 40
  %v4128 = vpop.permute.xlu0 %4127
  %4129 = vrot.lane.b32.xlu0 %v3830, 40
  %v4130 = vpop.permute.xlu0 %4129
  %4131 = vrot.lane.b32.xlu0 %v3833, 40
  %v4132 = vpop.permute.xlu0 %4131
  %4133 = vrot.lane.b32.xlu0 %v3836, 40
  %v4134 = vpop.permute.xlu0 %4133
  %4135 = vrot.lane.b32.xlu0 %v3839, 40
  %v4136 = vpop.permute.xlu0 %4135
  %4137 = vrot.lane.b32.xlu0 %v3842, 40
  %v4138 = vpop.permute.xlu0 %4137
  %4139 = vrot.lane.b32.xlu0 %v3845, 40
  %v4140 = vpop.permute.xlu0 %4139
  %4141 = vrot.lane.b32.xlu0 %v3848, 40
  %v4142 = vpop.permute.xlu0 %4141
  %4143 = vrot.lane.b32.xlu0 %v3851, 40
  %v4144 = vpop.permute.xlu0 %4143
  %4145 = vrot.lane.b32.xlu0 %v3854, 40
  %v4146 = vpop.permute.xlu0 %4145
  %4147 = vrot.lane.b32.xlu0 %v3857, 40
  %v4148 = vpop.permute.xlu0 %4147
  %4149 = vrot.lane.b32.xlu0 %v3860, 40
  %v4150 = vpop.permute.xlu0 %4149
  %4151 = vrot.lane.b32.xlu0 %v3863, 40
  %v4152 = vpop.permute.xlu0 %4151
  %4153 = vrot.lane.b32.xlu0 %v3866, 40
  %v4154 = vpop.permute.xlu0 %4153
  %4155 = vrot.lane.b32.xlu0 %v4092, 40
  %v4156 = vpop.permute.xlu0 %4155
  %4159 = vrot.lane.b32.xlu0 %v3189, 48
  %v4160 = vpop.permute.xlu0 %4159
  %4161 = vrot.lane.b32.xlu0 %v3190, 48
  %v4162 = vpop.permute.xlu0 %4161
  %4163 = vrot.lane.b32.xlu0 %v3191, 48
  %v4164 = vpop.permute.xlu0 %4163
  %4165 = vrot.lane.b32.xlu0 %v3192, 48
  %v4166 = vpop.permute.xlu0 %4165
  %4167 = vrot.lane.b32.xlu0 %v3193, 48
  %v4168 = vpop.permute.xlu0 %4167
  %4169 = vrot.lane.b32.xlu0 %v3194, 48
  %v4170 = vpop.permute.xlu0 %4169
  %4171 = vrot.lane.b32.xlu0 %v3195, 48
  %v4172 = vpop.permute.xlu0 %4171
  %4173 = vrot.lane.b32.xlu0 %v3196, 48
  %v4174 = vpop.permute.xlu0 %4173
  %4175 = vrot.lane.b32.xlu0 %v3197, 48
  %v4176 = vpop.permute.xlu0 %4175
  %4177 = vrot.lane.b32.xlu0 %v3198, 48
  %v4178 = vpop.permute.xlu0 %4177
  %4179 = vrot.lane.b32.xlu0 %v3199, 48
  %v4180 = vpop.permute.xlu0 %4179
  %4181 = vrot.lane.b32.xlu0 %v3200, 48
  %v4182 = vpop.permute.xlu0 %4181
  %4183 = vrot.lane.b32.xlu0 %v3201, 48
  %v4184 = vpop.permute.xlu0 %4183
  %4185 = vrot.lane.b32.xlu0 %v3202, 48
  %v4186 = vpop.permute.xlu0 %4185
  %4187 = vrot.lane.b32.xlu0 %v3203, 48
  %v4188 = vpop.permute.xlu0 %4187
  %4189 = vrot.lane.b32.xlu0 %v3204, 48
  %v4190 = vpop.permute.xlu0 %4189
  %4191 = vrot.lane.b32.xlu0 %v3207, 48
  %v4192 = vpop.permute.xlu0 %4191
  %4193 = vrot.lane.b32.xlu0 %v3208, 48
  %v4194 = vpop.permute.xlu0 %4193
  %4195 = vrot.lane.b32.xlu0 %v3209, 48
  %v4196 = vpop.permute.xlu0 %4195
  %4197 = vrot.lane.b32.xlu0 %v3210, 48
  %v4198 = vpop.permute.xlu0 %4197
  %4199 = vrot.lane.b32.xlu0 %v3211, 48
  %v4200 = vpop.permute.xlu0 %4199
  %4201 = vrot.lane.b32.xlu0 %v3212, 48
  %v4202 = vpop.permute.xlu0 %4201
  %4203 = vrot.lane.b32.xlu0 %v3213, 48
  %v4204 = vpop.permute.xlu0 %4203
  %4205 = vrot.lane.b32.xlu0 %v3214, 48
  %v4206 = vpop.permute.xlu0 %4205
  %4207 = vrot.lane.b32.xlu0 %v3215, 48
  %v4208 = vpop.permute.xlu0 %4207
  %4209 = vrot.lane.b32.xlu0 %v3216, 48
  %v4210 = vpop.permute.xlu0 %4209
  %4211 = vrot.lane.b32.xlu0 %v3217, 48
  %v4212 = vpop.permute.xlu0 %4211
  %4213 = vrot.lane.b32.xlu0 %v3218, 48
  %v4214 = vpop.permute.xlu0 %4213
  %4215 = vrot.lane.b32.xlu0 %v3219, 48
  %v4216 = vpop.permute.xlu0 %4215
  %4217 = vrot.lane.b32.xlu0 %v3220, 48
  %v4218 = vpop.permute.xlu0 %4217
  %4219 = vrot.lane.b32.xlu0 %v3221, 48
  %v4220 = vpop.permute.xlu0 %4219
  %4221 = vrot.lane.b32.xlu0 %v3222, 48
  %v4222 = vpop.permute.xlu0 %4221
  %v4224 = vshrl.u32 %v3204, 16
  %v4226 = vshll.u32 %v3204, 16
  %v4228 = vrot.slane %v4226, 1
  %v4229 = vor.u32 %v4224, %v4228
  %v4231 = vshll.u32 %v3240, 16
  %v4233 = vrot.slane %v4231, 1
  %v4234 = vsel %vm433, %v4229, %v4233
  %v4236 = vshrl.u32 %v3222, 16
  %v4238 = vshll.u32 %v3222, 16
  %v4240 = vrot.slane %v4238, 1
  %v4241 = vor.u32 %v4236, %v4240
  %v4243 = vshll.u32 %v3258, 16
  %v4245 = vrot.slane %v4243, 1
  %v4246 = vsel %vm433, %v4241, %v4245
  %4247 = vrot.lane.b32.xlu0 %v3294, 56
  %v4248 = vpop.permute.xlu0 %4247
  %4249 = vrot.lane.b32.xlu0 %v3306, 56
  %v4250 = vpop.permute.xlu0 %4249
  %4251 = vrot.lane.b32.xlu0 %v3318, 56
  %v4252 = vpop.permute.xlu0 %4251
  %4253 = vrot.lane.b32.xlu0 %v3330, 56
  %v4254 = vpop.permute.xlu0 %4253
  %4255 = vrot.lane.b32.xlu0 %v3342, 56
  %v4256 = vpop.permute.xlu0 %4255
  %4257 = vrot.lane.b32.xlu0 %v3354, 56
  %v4258 = vpop.permute.xlu0 %4257
  %4259 = vrot.lane.b32.xlu0 %v3366, 56
  %v4260 = vpop.permute.xlu0 %4259
  %4261 = vrot.lane.b32.xlu0 %v3378, 56
  %v4262 = vpop.permute.xlu0 %4261
  %4263 = vrot.lane.b32.xlu0 %v3390, 56
  %v4264 = vpop.permute.xlu0 %4263
  %4265 = vrot.lane.b32.xlu0 %v3402, 56
  %v4266 = vpop.permute.xlu0 %4265
  %4267 = vrot.lane.b32.xlu0 %v3414, 56
  %v4268 = vpop.permute.xlu0 %4267
  %4269 = vrot.lane.b32.xlu0 %v3426, 56
  %v4270 = vpop.permute.xlu0 %4269
  %4271 = vrot.lane.b32.xlu0 %v3438, 56
  %v4272 = vpop.permute.xlu0 %4271
  %4273 = vrot.lane.b32.xlu0 %v3450, 56
  %v4274 = vpop.permute.xlu0 %4273
  %4275 = vrot.lane.b32.xlu0 %v4008, 56
  %v4276 = vpop.permute.xlu0 %4275
  %4277 = vrot.lane.b32.xlu0 %v4234, 56
  %v4278 = vpop.permute.xlu0 %4277
  %4279 = vrot.lane.b32.xlu0 %v3486, 56
  %v4280 = vpop.permute.xlu0 %4279
  %4281 = vrot.lane.b32.xlu0 %v3498, 56
  %v4282 = vpop.permute.xlu0 %4281
  %4283 = vrot.lane.b32.xlu0 %v3510, 56
  %v4284 = vpop.permute.xlu0 %4283
  %4285 = vrot.lane.b32.xlu0 %v3522, 56
  %v4286 = vpop.permute.xlu0 %4285
  %4287 = vrot.lane.b32.xlu0 %v3534, 56
  %v4288 = vpop.permute.xlu0 %4287
  %4289 = vrot.lane.b32.xlu0 %v3546, 56
  %v4290 = vpop.permute.xlu0 %4289
  %4291 = vrot.lane.b32.xlu0 %v3558, 56
  %v4292 = vpop.permute.xlu0 %4291
  %4293 = vrot.lane.b32.xlu0 %v3570, 56
  %v4294 = vpop.permute.xlu0 %4293
  %4295 = vrot.lane.b32.xlu0 %v3582, 56
  %v4296 = vpop.permute.xlu0 %4295
  %4297 = vrot.lane.b32.xlu0 %v3594, 56
  %v4298 = vpop.permute.xlu0 %4297
  %4299 = vrot.lane.b32.xlu0 %v3606, 56
  %v4300 = vpop.permute.xlu0 %4299
  %4301 = vrot.lane.b32.xlu0 %v3618, 56
  %v4302 = vpop.permute.xlu0 %4301
  %4303 = vrot.lane.b32.xlu0 %v3630, 56
  %v4304 = vpop.permute.xlu0 %4303
  %4305 = vrot.lane.b32.xlu0 %v3642, 56
  %v4306 = vpop.permute.xlu0 %4305
  %4307 = vrot.lane.b32.xlu0 %v4020, 56
  %v4308 = vpop.permute.xlu0 %4307
  %4309 = vrot.lane.b32.xlu0 %v4246, 56
  %v4310 = vpop.permute.xlu0 %4309
  %v4313 = vrot.slane %v3204, 1
  %v4314 = vrot.slane %v3240, 1
  %v4315 = vsel %vm938, %v4313, %v4314
  %v4316 = vrot.slane %v3222, 1
  %v4317 = vrot.slane %v3258, 1
  %v4318 = vsel %vm938, %v4316, %v4317
  %4319 = vrot.lane.b32.xlu0 %v3779, 64
  %v4320 = vpop.permute.xlu0 %4319
  %4321 = vrot.lane.b32.xlu0 %v3782, 64
  %v4322 = vpop.permute.xlu0 %4321
  %4323 = vrot.lane.b32.xlu0 %v3785, 64
  %v4324 = vpop.permute.xlu0 %4323
  %4325 = vrot.lane.b32.xlu0 %v3788, 64
  %v4326 = vpop.permute.xlu0 %4325
  %4327 = vrot.lane.b32.xlu0 %v3791, 64
  %v4328 = vpop.permute.xlu0 %4327
  %4329 = vrot.lane.b32.xlu0 %v3794, 64
  %v4330 = vpop.permute.xlu0 %4329
  %4331 = vrot.lane.b32.xlu0 %v3797, 64
  %v4332 = vpop.permute.xlu0 %4331
  %4333 = vrot.lane.b32.xlu0 %v3800, 64
  %v4334 = vpop.permute.xlu0 %4333
  %4335 = vrot.lane.b32.xlu0 %v3803, 64
  %v4336 = vpop.permute.xlu0 %4335
  %4337 = vrot.lane.b32.xlu0 %v3806, 64
  %v4338 = vpop.permute.xlu0 %4337
  %4339 = vrot.lane.b32.xlu0 %v3809, 64
  %v4340 = vpop.permute.xlu0 %4339
  %4341 = vrot.lane.b32.xlu0 %v3812, 64
  %v4342 = vpop.permute.xlu0 %4341
  %4343 = vrot.lane.b32.xlu0 %v3815, 64
  %v4344 = vpop.permute.xlu0 %4343
  %4345 = vrot.lane.b32.xlu0 %v3818, 64
  %v4346 = vpop.permute.xlu0 %4345
  %4347 = vrot.lane.b32.xlu0 %v4089, 64
  %v4348 = vpop.permute.xlu0 %4347
  %4349 = vrot.lane.b32.xlu0 %v4315, 64
  %v4350 = vpop.permute.xlu0 %4349
  %4351 = vrot.lane.b32.xlu0 %v3827, 64
  %v4352 = vpop.permute.xlu0 %4351
  %4353 = vrot.lane.b32.xlu0 %v3830, 64
  %v4354 = vpop.permute.xlu0 %4353
  %4355 = vrot.lane.b32.xlu0 %v3833, 64
  %v4356 = vpop.permute.xlu0 %4355
  %4357 = vrot.lane.b32.xlu0 %v3836, 64
  %v4358 = vpop.permute.xlu0 %4357
  %4359 = vrot.lane.b32.xlu0 %v3839, 64
  %v4360 = vpop.permute.xlu0 %4359
  %4361 = vrot.lane.b32.xlu0 %v3842, 64
  %v4362 = vpop.permute.xlu0 %4361
  %4363 = vrot.lane.b32.xlu0 %v3845, 64
  %v4364 = vpop.permute.xlu0 %4363
  %4365 = vrot.lane.b32.xlu0 %v3848, 64
  %v4366 = vpop.permute.xlu0 %4365
  %4367 = vrot.lane.b32.xlu0 %v3851, 64
  %v4368 = vpop.permute.xlu0 %4367
  %4369 = vrot.lane.b32.xlu0 %v3854, 64
  %v4370 = vpop.permute.xlu0 %4369
  %4371 = vrot.lane.b32.xlu0 %v3857, 64
  %v4372 = vpop.permute.xlu0 %4371
  %4373 = vrot.lane.b32.xlu0 %v3860, 64
  %v4374 = vpop.permute.xlu0 %4373
  %4375 = vrot.lane.b32.xlu0 %v3863, 64
  %v4376 = vpop.permute.xlu0 %4375
  %4377 = vrot.lane.b32.xlu0 %v3866, 64
  %v4378 = vpop.permute.xlu0 %4377
  %4379 = vrot.lane.b32.xlu0 %v4092, 64
  %v4380 = vpop.permute.xlu0 %4379
  %4381 = vrot.lane.b32.xlu0 %v4318, 64
  %v4382 = vpop.permute.xlu0 %4381
  %v4384 = vsel %vm1643, %v3187, %v3644
  %v4386 = vsel %vm1643, %v3188, %v3646
  %v4388 = vsel %vm1643, %v3189, %v3648
  %v4390 = vsel %vm1643, %v3190, %v3650
  %v4392 = vsel %vm1643, %v3191, %v3652
  %v4394 = vsel %vm1643, %v3192, %v3654
  %v4396 = vsel %vm1643, %v3193, %v3656
  %v4398 = vsel %vm1643, %v3194, %v3658
  %v4400 = vsel %vm1643, %v3195, %v3660
  %v4402 = vsel %vm1643, %v3196, %v3662
  %v4404 = vsel %vm1643, %v3197, %v3664
  %v4406 = vsel %vm1643, %v3198, %v3666
  %v4408 = vsel %vm1643, %v3199, %v3668
  %v4410 = vsel %vm1643, %v3200, %v3670
  %v4412 = vsel %vm1643, %v3201, %v3672
  %v4414 = vsel %vm1643, %v3202, %v3674
  %v4416 = vsel %vm1643, %v3205, %v3676
  %v4418 = vsel %vm1643, %v3206, %v3678
  %v4420 = vsel %vm1643, %v3207, %v3680
  %v4422 = vsel %vm1643, %v3208, %v3682
  %v4424 = vsel %vm1643, %v3209, %v3684
  %v4426 = vsel %vm1643, %v3210, %v3686
  %v4428 = vsel %vm1643, %v3211, %v3688
  %v4430 = vsel %vm1643, %v3212, %v3690
  %v4432 = vsel %vm1643, %v3213, %v3692
  %v4434 = vsel %vm1643, %v3214, %v3694
  %v4436 = vsel %vm1643, %v3215, %v3696
  %v4438 = vsel %vm1643, %v3216, %v3698
  %v4440 = vsel %vm1643, %v3217, %v3700
  %v4442 = vsel %vm1643, %v3218, %v3702
  %v4444 = vsel %vm1643, %v3219, %v3704
  %v4446 = vsel %vm1643, %v3220, %v3706
  %v4448 = vsel %vm1716, %v4384, %v3868
  %v4450 = vsel %vm1716, %v4386, %v3870
  %v4452 = vsel %vm1716, %v4388, %v3872
  %v4454 = vsel %vm1716, %v4390, %v3874
  %v4456 = vsel %vm1716, %v4392, %v3876
  %v4458 = vsel %vm1716, %v4394, %v3878
  %v4460 = vsel %vm1716, %v4396, %v3880
  %v4462 = vsel %vm1716, %v4398, %v3882
  %v4464 = vsel %vm1716, %v4400, %v3884
  %v4466 = vsel %vm1716, %v4402, %v3886
  %v4468 = vsel %vm1716, %v4404, %v3888
  %v4470 = vsel %vm1716, %v4406, %v3890
  %v4472 = vsel %vm1716, %v4408, %v3892
  %v4474 = vsel %vm1716, %v4410, %v3894
  %v4476 = vsel %vm1716, %v4412, %v3896
  %v4478 = vsel %vm1716, %v4414, %v3898
  %v4480 = vsel %vm1716, %v4416, %v3900
  %v4482 = vsel %vm1716, %v4418, %v3902
  %v4484 = vsel %vm1716, %v4420, %v3904
  %v4486 = vsel %vm1716, %v4422, %v3906
  %v4488 = vsel %vm1716, %v4424, %v3908
  %v4490 = vsel %vm1716, %v4426, %v3910
  %v4492 = vsel %vm1716, %v4428, %v3912
  %v4494 = vsel %vm1716, %v4430, %v3914
  %v4496 = vsel %vm1716, %v4432, %v3916
  %v4498 = vsel %vm1716, %v4434, %v3918
  %v4500 = vsel %vm1716, %v4436, %v3920
  %v4502 = vsel %vm1716, %v4438, %v3922
  %v4504 = vsel %vm1716, %v4440, %v3924
  %v4506 = vsel %vm1716, %v4442, %v3926
  %v4508 = vsel %vm1716, %v4444, %v3928
  %v4510 = vsel %vm1716, %v4446, %v3930
  %v4512 = vsel %vm1789, %v4448, %v3934
  %v4514 = vsel %vm1789, %v4450, %v3936
  %v4516 = vsel %vm1789, %v4452, %v3938
  %v4518 = vsel %vm1789, %v4454, %v3940
  %v4520 = vsel %vm1789, %v4456, %v3942
  %v4522 = vsel %vm1789, %v4458, %v3944
  %v4524 = vsel %vm1789, %v4460, %v3946
  %v4526 = vsel %vm1789, %v4462, %v3948
  %v4528 = vsel %vm1789, %v4464, %v3950
  %v4530 = vsel %vm1789, %v4466, %v3952
  %v4532 = vsel %vm1789, %v4468, %v3954
  %v4534 = vsel %vm1789, %v4470, %v3956
  %v4536 = vsel %vm1789, %v4472, %v3958
  %v4538 = vsel %vm1789, %v4474, %v3960
  %v4540 = vsel %vm1789, %v4476, %v3962
  %v4542 = vsel %vm1789, %v4478, %v3964
  %v4544 = vsel %vm1789, %v4480, %v3966
  %v4546 = vsel %vm1789, %v4482, %v3968
  %v4548 = vsel %vm1789, %v4484, %v3970
  %v4550 = vsel %vm1789, %v4486, %v3972
  %v4552 = vsel %vm1789, %v4488, %v3974
  %v4554 = vsel %vm1789, %v4490, %v3976
  %v4556 = vsel %vm1789, %v4492, %v3978
  %v4558 = vsel %vm1789, %v4494, %v3980
  %v4560 = vsel %vm1789, %v4496, %v3982
  %v4562 = vsel %vm1789, %v4498, %v3984
  %v4564 = vsel %vm1789, %v4500, %v3986
  %v4566 = vsel %vm1789, %v4502, %v3988
  %v4568 = vsel %vm1789, %v4504, %v3990
  %v4570 = vsel %vm1789, %v4506, %v3992
  %v4572 = vsel %vm1789, %v4508, %v3994
  %v4574 = vsel %vm1789, %v4510, %v3996
  %v4576 = vsel %vm1862, %v4512, %v4022
  %v4578 = vsel %vm1862, %v4514, %v4024
  %v4580 = vsel %vm1862, %v4516, %v4026
  %v4582 = vsel %vm1862, %v4518, %v4028
  %v4584 = vsel %vm1862, %v4520, %v4030
  %v4586 = vsel %vm1862, %v4522, %v4032
  %v4588 = vsel %vm1862, %v4524, %v4034
  %v4590 = vsel %vm1862, %v4526, %v4036
  %v4592 = vsel %vm1862, %v4528, %v4038
  %v4594 = vsel %vm1862, %v4530, %v4040
  %v4596 = vsel %vm1862, %v4532, %v4042
  %v4598 = vsel %vm1862, %v4534, %v4044
  %v4600 = vsel %vm1862, %v4536, %v4046
  %v4602 = vsel %vm1862, %v4538, %v4048
  %v4604 = vsel %vm1862, %v4540, %v4050
  %v4606 = vsel %vm1862, %v4542, %v4052
  %v4608 = vsel %vm1862, %v4544, %v4054
  %v4610 = vsel %vm1862, %v4546, %v4056
  %v4612 = vsel %vm1862, %v4548, %v4058
  %v4614 = vsel %vm1862, %v4550, %v4060
  %v4616 = vsel %vm1862, %v4552, %v4062
  %v4618 = vsel %vm1862, %v4554, %v4064
  %v4620 = vsel %vm1862, %v4556, %v4066
  %v4622 = vsel %vm1862, %v4558, %v4068
  %v4624 = vsel %vm1862, %v4560, %v4070
  %v4626 = vsel %vm1862, %v4562, %v4072
  %v4628 = vsel %vm1862, %v4564, %v4074
  %v4630 = vsel %vm1862, %v4566, %v4076
  %v4632 = vsel %vm1862, %v4568, %v4078
  %v4634 = vsel %vm1862, %v4570, %v4080
  %v4636 = vsel %vm1862, %v4572, %v4082
  %v4638 = vsel %vm1862, %v4574, %v4084
  %v4640 = vsel %vm1935, %v4576, %v4094
  %v4642 = vsel %vm1935, %v4578, %v4096
  %v4644 = vsel %vm1935, %v4580, %v4098
  %v4646 = vsel %vm1935, %v4582, %v4100
  %v4648 = vsel %vm1935, %v4584, %v4102
  %v4650 = vsel %vm1935, %v4586, %v4104
  %v4652 = vsel %vm1935, %v4588, %v4106
  %v4654 = vsel %vm1935, %v4590, %v4108
  %v4656 = vsel %vm1935, %v4592, %v4110
  %v4658 = vsel %vm1935, %v4594, %v4112
  %v4660 = vsel %vm1935, %v4596, %v4114
  %v4662 = vsel %vm1935, %v4598, %v4116
  %v4664 = vsel %vm1935, %v4600, %v4118
  %v4666 = vsel %vm1935, %v4602, %v4120
  %v4668 = vsel %vm1935, %v4604, %v4122
  %v4670 = vsel %vm1935, %v4606, %v4124
  %v4672 = vsel %vm1935, %v4608, %v4126
  %v4674 = vsel %vm1935, %v4610, %v4128
  %v4676 = vsel %vm1935, %v4612, %v4130
  %v4678 = vsel %vm1935, %v4614, %v4132
  %v4680 = vsel %vm1935, %v4616, %v4134
  %v4682 = vsel %vm1935, %v4618, %v4136
  %v4684 = vsel %vm1935, %v4620, %v4138
  %v4686 = vsel %vm1935, %v4622, %v4140
  %v4688 = vsel %vm1935, %v4624, %v4142
  %v4690 = vsel %vm1935, %v4626, %v4144
  %v4692 = vsel %vm1935, %v4628, %v4146
  %v4694 = vsel %vm1935, %v4630, %v4148
  %v4696 = vsel %vm1935, %v4632, %v4150
  %v4698 = vsel %vm1935, %v4634, %v4152
  %v4700 = vsel %vm1935, %v4636, %v4154
  %v4702 = vsel %vm1935, %v4638, %v4156
  %v4704 = vsel %vm2008, %v4640, %v4160
  %v4706 = vsel %vm2008, %v4642, %v4162
  %v4708 = vsel %vm2008, %v4644, %v4164
  %v4710 = vsel %vm2008, %v4646, %v4166
  %v4712 = vsel %vm2008, %v4648, %v4168
  %v4714 = vsel %vm2008, %v4650, %v4170
  %v4716 = vsel %vm2008, %v4652, %v4172
  %v4718 = vsel %vm2008, %v4654, %v4174
  %v4720 = vsel %vm2008, %v4656, %v4176
  %v4722 = vsel %vm2008, %v4658, %v4178
  %v4724 = vsel %vm2008, %v4660, %v4180
  %v4726 = vsel %vm2008, %v4662, %v4182
  %v4728 = vsel %vm2008, %v4664, %v4184
  %v4730 = vsel %vm2008, %v4666, %v4186
  %v4732 = vsel %vm2008, %v4668, %v4188
  %v4734 = vsel %vm2008, %v4670, %v4190
  %v4736 = vsel %vm2008, %v4672, %v4192
  %v4738 = vsel %vm2008, %v4674, %v4194
  %v4740 = vsel %vm2008, %v4676, %v4196
  %v4742 = vsel %vm2008, %v4678, %v4198
  %v4744 = vsel %vm2008, %v4680, %v4200
  %v4746 = vsel %vm2008, %v4682, %v4202
  %v4748 = vsel %vm2008, %v4684, %v4204
  %v4750 = vsel %vm2008, %v4686, %v4206
  %v4752 = vsel %vm2008, %v4688, %v4208
  %v4754 = vsel %vm2008, %v4690, %v4210
  %v4756 = vsel %vm2008, %v4692, %v4212
  %v4758 = vsel %vm2008, %v4694, %v4214
  %v4760 = vsel %vm2008, %v4696, %v4216
  %v4762 = vsel %vm2008, %v4698, %v4218
  %v4764 = vsel %vm2008, %v4700, %v4220
  %v4766 = vsel %vm2008, %v4702, %v4222
  %v4768 = vsel %vm2081, %v4704, %v4248
  %v4770 = vsel %vm2081, %v4706, %v4250
  %v4772 = vsel %vm2081, %v4708, %v4252
  %v4774 = vsel %vm2081, %v4710, %v4254
  %v4776 = vsel %vm2081, %v4712, %v4256
  %v4778 = vsel %vm2081, %v4714, %v4258
  %v4780 = vsel %vm2081, %v4716, %v4260
  %v4782 = vsel %vm2081, %v4718, %v4262
  %v4784 = vsel %vm2081, %v4720, %v4264
  %v4786 = vsel %vm2081, %v4722, %v4266
  %v4788 = vsel %vm2081, %v4724, %v4268
  %v4790 = vsel %vm2081, %v4726, %v4270
  %v4792 = vsel %vm2081, %v4728, %v4272
  %v4794 = vsel %vm2081, %v4730, %v4274
  %v4796 = vsel %vm2081, %v4732, %v4276
  %v4798 = vsel %vm2081, %v4734, %v4278
  %v4800 = vsel %vm2081, %v4736, %v4280
  %v4802 = vsel %vm2081, %v4738, %v4282
  %v4804 = vsel %vm2081, %v4740, %v4284
  %v4806 = vsel %vm2081, %v4742, %v4286
  %v4808 = vsel %vm2081, %v4744, %v4288
  %v4810 = vsel %vm2081, %v4746, %v4290
  %v4812 = vsel %vm2081, %v4748, %v4292
  %v4814 = vsel %vm2081, %v4750, %v4294
  %v4816 = vsel %vm2081, %v4752, %v4296
  %v4818 = vsel %vm2081, %v4754, %v4298
  %v4820 = vsel %vm2081, %v4756, %v4300
  %v4822 = vsel %vm2081, %v4758, %v4302
  %v4824 = vsel %vm2081, %v4760, %v4304
  %v4826 = vsel %vm2081, %v4762, %v4306
  %v4828 = vsel %vm2081, %v4764, %v4308
  %v4830 = vsel %vm2081, %v4766, %v4310
  %v4832 = vsel %vm2154, %v4768, %v4320
  %v4834 = vsel %vm2154, %v4770, %v4322
  %v4836 = vsel %vm2154, %v4772, %v4324
  %v4838 = vsel %vm2154, %v4774, %v4326
  %v4840 = vsel %vm2154, %v4776, %v4328
  %v4842 = vsel %vm2154, %v4778, %v4330
  %v4844 = vsel %vm2154, %v4780, %v4332
  %v4846 = vsel %vm2154, %v4782, %v4334
  %v4848 = vsel %vm2154, %v4784, %v4336
  %v4850 = vsel %vm2154, %v4786, %v4338
  %v4852 = vsel %vm2154, %v4788, %v4340
  %v4854 = vsel %vm2154, %v4790, %v4342
  %v4856 = vsel %vm2154, %v4792, %v4344
  %v4858 = vsel %vm2154, %v4794, %v4346
  %v4860 = vsel %vm2154, %v4796, %v4348
  %v4862 = vsel %vm2154, %v4798, %v4350
  %v4864 = vsel %vm2154, %v4800, %v4352
  %v4866 = vsel %vm2154, %v4802, %v4354
  %v4868 = vsel %vm2154, %v4804, %v4356
  %v4870 = vsel %vm2154, %v4806, %v4358
  %v4872 = vsel %vm2154, %v4808, %v4360
  %v4874 = vsel %vm2154, %v4810, %v4362
  %v4876 = vsel %vm2154, %v4812, %v4364
  %v4878 = vsel %vm2154, %v4814, %v4366
  %v4880 = vsel %vm2154, %v4816, %v4368
  %v4882 = vsel %vm2154, %v4818, %v4370
  %v4884 = vsel %vm2154, %v4820, %v4372
  %v4886 = vsel %vm2154, %v4822, %v4374
  %v4888 = vsel %vm2154, %v4824, %v4376
  %v4890 = vsel %vm2154, %v4826, %v4378
  %v4892 = vsel %vm2154, %v4828, %v4380
  %v4894 = vsel %vm2154, %v4830, %v4382
  %v4895 = vld [vmem:[%s3] sm:$0xf]
  %v4896 = vld [vmem:[%s3 + $0x4] sm:$0xf]
  %v4897 = vld [vmem:[%s3 + $0x8] sm:$0xf]
  %v4898 = vld [vmem:[%s3 + $0xc] sm:$0xf]
  %v4899 = vld [vmem:[%s3 + $0x10] sm:$0xf]
  %v4900 = vld [vmem:[%s3 + $0x14] sm:$0xf]
  %v4901 = vld [vmem:[%s3 + $0x18] sm:$0xf]
  %v4902 = vld [vmem:[%s3 + $0x1c] sm:$0xf]
  %v4903 = vld [vmem:[%s3 + $0x20] sm:$0xf]
  %v4904 = vld [vmem:[%s4] sm:$0x1]
  %v4906 = vlaneseq
  %v4907 = vshrl.u32 %v4906, 7
  %v4908 = vsub.s32 0, %v4907
  %v4909 = vrot.slane %v4904, %v4908
  %v4920 = vunpack.c.l.b16 %v4895
  %v4921 = vunpack.c.l.b16 %v4896
  %v4922 = vunpack.c.l.b16 %v4897
  %v4923 = vunpack.c.l.b16 %v4898
  %v4924 = vunpack.c.l.b16 %v4899
  %v4925 = vunpack.c.l.b16 %v4900
  %v4926 = vunpack.c.l.b16 %v4901
  %v4927 = vunpack.c.l.b16 %v4902
  %v4928 = vunpack.c.l.b16 %v4903
  %v4929 = vpack.c.b16 %v4921, %v4920
  %v4930 = vpack.c.b16 %v4923, %v4922
  %v4931 = vpack.c.b16 %v4925, %v4924
  %v4932 = vpack.c.b16 %v4927, %v4926
  %v4933 = vpack.c.b16 %v4928, %v4928
  %v4938 = vsel %vm2270, %v4832, 0
  %v4940 = vsel %vm2270, %v4834, 0
  %v4942 = vsel %vm2270, %v4836, 0
  %v4944 = vsel %vm2270, %v4838, 0
  %v4946 = vsel %vm2270, %v4840, 0
  %v4948 = vsel %vm2270, %v4842, 0
  %v4950 = vsel %vm2270, %v4844, 0
  %v4952 = vsel %vm2270, %v4846, 0
  %v4954 = vsel %vm2270, %v4848, 0
  %v4956 = vsel %vm2270, %v4850, 0
  %v4958 = vsel %vm2270, %v4852, 0
  %v4960 = vsel %vm2270, %v4854, 0
  %v4962 = vsel %vm2270, %v4856, 0
  %v4964 = vsel %vm2270, %v4858, 0
  %v4966 = vsel %vm2270, %v4860, 0
  %v4968 = vsel %vm2270, %v4862, 0
  %v4970 = vsel %vm2270, %v4864, 0
  %v4972 = vsel %vm2270, %v4866, 0
  %v4974 = vsel %vm2270, %v4868, 0
  %v4976 = vsel %vm2270, %v4870, 0
  %v4978 = vsel %vm2270, %v4872, 0
  %v4980 = vsel %vm2270, %v4874, 0
  %v4982 = vsel %vm2270, %v4876, 0
  %v4984 = vsel %vm2270, %v4878, 0
  %v4986 = vsel %vm2270, %v4880, 0
  %v4988 = vsel %vm2270, %v4882, 0
  %v4990 = vsel %vm2270, %v4884, 0
  %v4992 = vsel %vm2270, %v4886, 0
  %v4994 = vsel %vm2270, %v4888, 0
  %v4996 = vsel %vm2270, %v4890, 0
  %v4998 = vsel %vm2270, %v4892, 0
  %v5000 = vsel %vm2270, %v4894, 0
  %v5003 = vsel %vm2343, %v4933, 0
  %5005 = vmatprep.subr.bf16.mxu0 0
  %5006 = vmatpush1.bf16.msra.mxu0 %v4929
  %5007 = vmatprep.subr.bf16.mxu0 0
  %5008 = vmatpush1.bf16.msra.mxu0 %v4930
  %5009 = vmatprep.subr.bf16.mxu0 0
  %5010 = vmatpush1.bf16.msra.mxu0 %v4931
  %5011 = vmatprep.subr.bf16.mxu0 0
  %5012 = vmatpush1.bf16.msra.mxu0 %v4932
  %5013 = vmatprep.subr.bf16.mxu0 0
  %5014 = vmatpush1.bf16.msra.mxu0 %v5003
  %5015 = vmatprep.subr.bf16.mxu0 0
  %5016 = vmatpush1.bf16.msra.mxu0 0
  %5017 = vmatprep.subr.bf16.mxu0 0
  %5018 = vmatpush1.bf16.msra.mxu0 0
  %5019 = vmatprep.subr.bf16.mxu0 0
  %5020 = vmatpush1.bf16.msra.mxu0 0
  %5021 = vmatprep.subr.bf16.mxu0 0
  %5022 = vmatpush1.bf16.msra.mxu0 0
  %5023 = vmatprep.subr.bf16.mxu0 0
  %5024 = vmatpush1.bf16.msra.mxu0 0
  %5025 = vmatprep.subr.bf16.mxu0 0
  %5026 = vmatpush1.bf16.msra.mxu0 0
  %5027 = vmatprep.subr.bf16.mxu0 0
  %5028 = vmatpush1.bf16.msra.mxu0 0
  %5029 = vmatprep.subr.bf16.mxu0 0
  %5030 = vmatpush1.bf16.msra.mxu0 0
  %5031 = vmatprep.subr.bf16.mxu0 0
  %5032 = vmatpush1.bf16.msra.mxu0 0
  %5033 = vmatprep.subr.bf16.mxu0 0
  %5034 = vmatpush1.bf16.msra.mxu0 0
  %5035 = vmatprep.subr.bf16.mxu0 0
  %5036 = vmatpush1.bf16.msra.mxu0 0
  %5037 = vmatprep.mubr.bf16.mxu0 0
  %5038 = vmatmul.mubr.bf16.gmra.mrb[0].mxu0 %v4938
  %v5039 = vpop.f32.mrb[0].mxu0
  %v5040 = vadd.f32 %v4909, %v5039
  %v5041 = vpop.f32.mrb[0].mxu0
  %v5042 = vpop.f32.mrb[0].mxu0
  %v5043 = vadd.f32 %v4909, %v5042
  %v5044 = vpop.f32.mrb[0].mxu0
  %5045 = vmatprep.mubr.bf16.mxu0 0
  %5046 = vmatmul.mubr.bf16.gmra.mrb[0].mxu0 %v4940
  %v5047 = vpop.f32.mrb[0].mxu0
  %v5048 = vadd.f32 %v4909, %v5047
  %v5049 = vpop.f32.mrb[0].mxu0
  %v5050 = vpop.f32.mrb[0].mxu0
  %v5051 = vadd.f32 %v4909, %v5050
  %v5052 = vpop.f32.mrb[0].mxu0
  %5053 = vmatprep.mubr.bf16.mxu0 0
  %5054 = vmatmul.mubr.bf16.gmra.mrb[0].mxu0 %v4942
  %v5055 = vpop.f32.mrb[0].mxu0
  %v5056 = vadd.f32 %v4909, %v5055
  %v5057 = vpop.f32.mrb[0].mxu0
  %v5058 = vpop.f32.mrb[0].mxu0
  %v5059 = vadd.f32 %v4909, %v5058
  %v5060 = vpop.f32.mrb[0].mxu0
  %5061 = vmatprep.mubr.bf16.mxu0 0
  %5062 = vmatmul.mubr.bf16.gmra.mrb[0].mxu0 %v4944
  %v5063 = vpop.f32.mrb[0].mxu0
  %v5064 = vadd.f32 %v4909, %v5063
  %v5065 = vpop.f32.mrb[0].mxu0
  %v5066 = vpop.f32.mrb[0].mxu0
  %v5067 = vadd.f32 %v4909, %v5066
  %v5068 = vpop.f32.mrb[0].mxu0
  %5069 = vmatprep.mubr.bf16.mxu0 0
  %5070 = vmatmul.mubr.bf16.gmra.mrb[0].mxu0 %v4946
  %v5071 = vpop.f32.mrb[0].mxu0
  %v5072 = vadd.f32 %v4909, %v5071
  %v5073 = vpop.f32.mrb[0].mxu0
  %v5074 = vpop.f32.mrb[0].mxu0
  %v5075 = vadd.f32 %v4909, %v5074
  %v5076 = vpop.f32.mrb[0].mxu0
  %5077 = vmatprep.mubr.bf16.mxu0 0
  %5078 = vmatmul.mubr.bf16.gmra.mrb[0].mxu0 %v4948
  %v5079 = vpop.f32.mrb[0].mxu0
  %v5080 = vadd.f32 %v4909, %v5079
  %v5081 = vpop.f32.mrb[0].mxu0
  %v5082 = vpop.f32.mrb[0].mxu0
  %v5083 = vadd.f32 %v4909, %v5082
  %v5084 = vpop.f32.mrb[0].mxu0
  %5085 = vmatprep.mubr.bf16.mxu0 0
  %5086 = vmatmul.mubr.bf16.gmra.mrb[0].mxu0 %v4950
  %v5087 = vpop.f32.mrb[0].mxu0
  %v5088 = vadd.f32 %v4909, %v5087
  %v5089 = vpop.f32.mrb[0].mxu0
  %v5090 = vpop.f32.mrb[0].mxu0
  %v5091 = vadd.f32 %v4909, %v5090
  %v5092 = vpop.f32.mrb[0].mxu0
  %5093 = vmatprep.mubr.bf16.mxu0 0
  %5094 = vmatmul.mubr.bf16.gmra.mrb[0].mxu0 %v4952
  %v5095 = vpop.f32.mrb[0].mxu0
  %v5096 = vadd.f32 %v4909, %v5095
  %v5097 = vpop.f32.mrb[0].mxu0
  %v5098 = vpop.f32.mrb[0].mxu0
  %v5099 = vadd.f32 %v4909, %v5098
  %v5100 = vpop.f32.mrb[0].mxu0
  %5101 = vmatprep.mubr.bf16.mxu0 0
  %5102 = vmatmul.mubr.bf16.gmra.mrb[0].mxu0 %v4954
  %v5103 = vpop.f32.mrb[0].mxu0
  %v5104 = vadd.f32 %v4909, %v5103
  %v5105 = vpop.f32.mrb[0].mxu0
  %v5106 = vpop.f32.mrb[0].mxu0
  %v5107 = vadd.f32 %v4909, %v5106
  %v5108 = vpop.f32.mrb[0].mxu0
  %5109 = vmatprep.mubr.bf16.mxu0 0
  %5110 = vmatmul.mubr.bf16.gmra.mrb[0].mxu0 %v4956
  %v5111 = vpop.f32.mrb[0].mxu0
  %v5112 = vadd.f32 %v4909, %v5111
  %v5113 = vpop.f32.mrb[0].mxu0
  %v5114 = vpop.f32.mrb[0].mxu0
  %v5115 = vadd.f32 %v4909, %v5114
  %v5116 = vpop.f32.mrb[0].mxu0
  %5117 = vmatprep.mubr.bf16.mxu0 0
  %5118 = vmatmul.mubr.bf16.gmra.mrb[0].mxu0 %v4958
  %v5119 = vpop.f32.mrb[0].mxu0
  %v5120 = vadd.f32 %v4909, %v5119
  %v5121 = vpop.f32.mrb[0].mxu0
  %v5122 = vpop.f32.mrb[0].mxu0
  %v5123 = vadd.f32 %v4909, %v5122
  %v5124 = vpop.f32.mrb[0].mxu0
  %5125 = vmatprep.mubr.bf16.mxu0 0
  %5126 = vmatmul.mubr.bf16.gmra.mrb[0].mxu0 %v4960
  %v5127 = vpop.f32.mrb[0].mxu0
  %v5128 = vadd.f32 %v4909, %v5127
  %v5129 = vpop.f32.mrb[0].mxu0
  %v5130 = vpop.f32.mrb[0].mxu0
  %v5131 = vadd.f32 %v4909, %v5130
  %v5132 = vpop.f32.mrb[0].mxu0
  %5133 = vmatprep.mubr.bf16.mxu0 0
  %5134 = vmatmul.mubr.bf16.gmra.mrb[0].mxu0 %v4962
  %v5135 = vpop.f32.mrb[0].mxu0
  %v5136 = vadd.f32 %v4909, %v5135
  %v5137 = vpop.f32.mrb[0].mxu0
  %v5138 = vpop.f32.mrb[0].mxu0
  %v5139 = vadd.f32 %v4909, %v5138
  %v5140 = vpop.f32.mrb[0].mxu0
  %5141 = vmatprep.mubr.bf16.mxu0 0
  %5142 = vmatmul.mubr.bf16.gmra.mrb[0].mxu0 %v4964
  %v5143 = vpop.f32.mrb[0].mxu0
  %v5144 = vadd.f32 %v4909, %v5143
  %v5145 = vpop.f32.mrb[0].mxu0
  %v5146 = vpop.f32.mrb[0].mxu0
  %v5147 = vadd.f32 %v4909, %v5146
  %v5148 = vpop.f32.mrb[0].mxu0
  %5149 = vmatprep.mubr.bf16.mxu0 0
  %5150 = vmatmul.mubr.bf16.gmra.mrb[0].mxu0 %v4966
  %v5151 = vpop.f32.mrb[0].mxu0
  %v5152 = vadd.f32 %v4909, %v5151
  %v5153 = vpop.f32.mrb[0].mxu0
  %v5154 = vpop.f32.mrb[0].mxu0
  %v5155 = vadd.f32 %v4909, %v5154
  %v5156 = vpop.f32.mrb[0].mxu0
  %5157 = vmatprep.mubr.bf16.mxu0 0
  %5158 = vmatmul.mubr.bf16.gmra.mrb[0].mxu0 %v4968
  %v5159 = vpop.f32.mrb[0].mxu0
  %v5160 = vadd.f32 %v4909, %v5159
  %v5161 = vpop.f32.mrb[0].mxu0
  %v5162 = vpop.f32.mrb[0].mxu0
  %v5163 = vadd.f32 %v4909, %v5162
  %v5164 = vpop.f32.mrb[0].mxu0
  %5165 = vmatprep.mubr.bf16.mxu0 0
  %5166 = vmatmul.mubr.bf16.gmra.mrb[0].mxu0 %v4970
  %v5167 = vpop.f32.mrb[0].mxu0
  %v5168 = vadd.f32 %v4909, %v5167
  %v5169 = vpop.f32.mrb[0].mxu0
  %v5170 = vpop.f32.mrb[0].mxu0
  %v5171 = vadd.f32 %v4909, %v5170
  %v5172 = vpop.f32.mrb[0].mxu0
  %5173 = vmatprep.mubr.bf16.mxu0 0
  %5174 = vmatmul.mubr.bf16.gmra.mrb[0].mxu0 %v4972
  %v5175 = vpop.f32.mrb[0].mxu0
  %v5176 = vadd.f32 %v4909, %v5175
  %v5177 = vpop.f32.mrb[0].mxu0
  %v5178 = vpop.f32.mrb[0].mxu0
  %v5179 = vadd.f32 %v4909, %v5178
  %v5180 = vpop.f32.mrb[0].mxu0
  %5181 = vmatprep.mubr.bf16.mxu0 0
  %5182 = vmatmul.mubr.bf16.gmra.mrb[0].mxu0 %v4974
  %v5183 = vpop.f32.mrb[0].mxu0
  %v5184 = vadd.f32 %v4909, %v5183
  %v5185 = vpop.f32.mrb[0].mxu0
  %v5186 = vpop.f32.mrb[0].mxu0
  %v5187 = vadd.f32 %v4909, %v5186
  %v5188 = vpop.f32.mrb[0].mxu0
  %5189 = vmatprep.mubr.bf16.mxu0 0
  %5190 = vmatmul.mubr.bf16.gmra.mrb[0].mxu0 %v4976
  %v5191 = vpop.f32.mrb[0].mxu0
  %v5192 = vadd.f32 %v4909, %v5191
  %v5193 = vpop.f32.mrb[0].mxu0
  %v5194 = vpop.f32.mrb[0].mxu0
  %v5195 = vadd.f32 %v4909, %v5194
  %v5196 = vpop.f32.mrb[0].mxu0
  %5197 = vmatprep.mubr.bf16.mxu0 0
  %5198 = vmatmul.mubr.bf16.gmra.mrb[0].mxu0 %v4978
  %v5199 = vpop.f32.mrb[0].mxu0
  %v5200 = vadd.f32 %v4909, %v5199
  %v5201 = vpop.f32.mrb[0].mxu0
  %v5202 = vpop.f32.mrb[0].mxu0
  %v5203 = vadd.f32 %v4909, %v5202
  %v5204 = vpop.f32.mrb[0].mxu0
  %5205 = vmatprep.mubr.bf16.mxu0 0
  %5206 = vmatmul.mubr.bf16.gmra.mrb[0].mxu0 %v4980
  %v5207 = vpop.f32.mrb[0].mxu0
  %v5208 = vadd.f32 %v4909, %v5207
  %v5209 = vpop.f32.mrb[0].mxu0
  %v5210 = vpop.f32.mrb[0].mxu0
  %v5211 = vadd.f32 %v4909, %v5210
  %v5212 = vpop.f32.mrb[0].mxu0
  %5213 = vmatprep.mubr.bf16.mxu0 0
  %5214 = vmatmul.mubr.bf16.gmra.mrb[0].mxu0 %v4982
  %v5215 = vpop.f32.mrb[0].mxu0
  %v5216 = vadd.f32 %v4909, %v5215
  %v5217 = vpop.f32.mrb[0].mxu0
  %v5218 = vpop.f32.mrb[0].mxu0
  %v5219 = vadd.f32 %v4909, %v5218
  %v5220 = vpop.f32.mrb[0].mxu0
  %5221 = vmatprep.mubr.bf16.mxu0 0
  %5222 = vmatmul.mubr.bf16.gmra.mrb[0].mxu0 %v4984
  %v5223 = vpop.f32.mrb[0].mxu0
  %v5224 = vadd.f32 %v4909, %v5223
  %v5225 = vpop.f32.mrb[0].mxu0
  %v5226 = vpop.f32.mrb[0].mxu0
  %v5227 = vadd.f32 %v4909, %v5226
  %v5228 = vpop.f32.mrb[0].mxu0
  %5229 = vmatprep.mubr.bf16.mxu0 0
  %5230 = vmatmul.mubr.bf16.gmra.mrb[0].mxu0 %v4986
  %v5231 = vpop.f32.mrb[0].mxu0
  %v5232 = vadd.f32 %v4909, %v5231
  %v5233 = vpop.f32.mrb[0].mxu0
  %v5234 = vpop.f32.mrb[0].mxu0
  %v5235 = vadd.f32 %v4909, %v5234
  %v5236 = vpop.f32.mrb[0].mxu0
  %5237 = vmatprep.mubr.bf16.mxu0 0
  %5238 = vmatmul.mubr.bf16.gmra.mrb[0].mxu0 %v4988
  %v5239 = vpop.f32.mrb[0].mxu0
  %v5240 = vadd.f32 %v4909, %v5239
  %v5241 = vpop.f32.mrb[0].mxu0
  %v5242 = vpop.f32.mrb[0].mxu0
  %v5243 = vadd.f32 %v4909, %v5242
  %v5244 = vpop.f32.mrb[0].mxu0
  %5245 = vmatprep.mubr.bf16.mxu0 0
  %5246 = vmatmul.mubr.bf16.gmra.mrb[0].mxu0 %v4990
  %v5247 = vpop.f32.mrb[0].mxu0
  %v5248 = vadd.f32 %v4909, %v5247
  %v5249 = vpop.f32.mrb[0].mxu0
  %v5250 = vpop.f32.mrb[0].mxu0
  %v5251 = vadd.f32 %v4909, %v5250
  %v5252 = vpop.f32.mrb[0].mxu0
  %5253 = vmatprep.mubr.bf16.mxu0 0
  %5254 = vmatmul.mubr.bf16.gmra.mrb[0].mxu0 %v4992
  %v5255 = vpop.f32.mrb[0].mxu0
  %v5256 = vadd.f32 %v4909, %v5255
  %v5257 = vpop.f32.mrb[0].mxu0
  %v5258 = vpop.f32.mrb[0].mxu0
  %v5259 = vadd.f32 %v4909, %v5258
  %v5260 = vpop.f32.mrb[0].mxu0
  %5261 = vmatprep.mubr.bf16.mxu0 0
  %5262 = vmatmul.mubr.bf16.gmra.mrb[0].mxu0 %v4994
  %v5263 = vpop.f32.mrb[0].mxu0
  %v5264 = vadd.f32 %v4909, %v5263
  %v5265 = vpop.f32.mrb[0].mxu0
  %v5266 = vpop.f32.mrb[0].mxu0
  %v5267 = vadd.f32 %v4909, %v5266
  %v5268 = vpop.f32.mrb[0].mxu0
  %5269 = vmatprep.mubr.bf16.mxu0 0
  %5270 = vmatmul.mubr.bf16.gmra.mrb[0].mxu0 %v4996
  %v5271 = vpop.f32.mrb[0].mxu0
  %v5272 = vadd.f32 %v4909, %v5271
  %v5273 = vpop.f32.mrb[0].mxu0
  %v5274 = vpop.f32.mrb[0].mxu0
  %v5275 = vadd.f32 %v4909, %v5274
  %v5276 = vpop.f32.mrb[0].mxu0
  %5277 = vmatprep.mubr.bf16.mxu0 0
  %5278 = vmatmul.mubr.bf16.gmra.mrb[0].mxu0 %v4998
  %v5279 = vpop.f32.mrb[0].mxu0
  %v5280 = vadd.f32 %v4909, %v5279
  %v5281 = vpop.f32.mrb[0].mxu0
  %v5282 = vpop.f32.mrb[0].mxu0
  %v5283 = vadd.f32 %v4909, %v5282
  %v5284 = vpop.f32.mrb[0].mxu0
  %5285 = vmatprep.mubr.bf16.mxu0 0
  %5286 = vmatmul.mubr.bf16.gmra.mrb[0].mxu0 %v5000
  %v5287 = vpop.f32.mrb[0].mxu0
  %v5288 = vadd.f32 %v4909, %v5287
  %v5289 = vpop.f32.mrb[0].mxu0
  %v5290 = vpop.f32.mrb[0].mxu0
  %v5291 = vadd.f32 %v4909, %v5290
  %v5292 = vpop.f32.mrb[0].mxu0
  %5293 = vdwg.mxu0
  %v5294 = vmax.f32 %v5040, 0.0
  %v5295 = vmax.f32 %v5043, 0.0
  %v5296 = vmax.f32 %v5048, 0.0
  %v5297 = vmax.f32 %v5051, 0.0
  %v5298 = vmax.f32 %v5056, 0.0
  %v5299 = vmax.f32 %v5059, 0.0
  %v5300 = vmax.f32 %v5064, 0.0
  %v5301 = vmax.f32 %v5067, 0.0
  %v5302 = vmax.f32 %v5072, 0.0
  %v5303 = vmax.f32 %v5075, 0.0
  %v5304 = vmax.f32 %v5080, 0.0
  %v5305 = vmax.f32 %v5083, 0.0
  %v5306 = vmax.f32 %v5088, 0.0
  %v5307 = vmax.f32 %v5091, 0.0
  %v5308 = vmax.f32 %v5096, 0.0
  %v5309 = vmax.f32 %v5099, 0.0
  %v5310 = vmax.f32 %v5104, 0.0
  %v5311 = vmax.f32 %v5107, 0.0
  %v5312 = vmax.f32 %v5112, 0.0
  %v5313 = vmax.f32 %v5115, 0.0
  %v5314 = vmax.f32 %v5120, 0.0
  %v5315 = vmax.f32 %v5123, 0.0
  %v5316 = vmax.f32 %v5128, 0.0
  %v5317 = vmax.f32 %v5131, 0.0
  %v5318 = vmax.f32 %v5136, 0.0
  %v5319 = vmax.f32 %v5139, 0.0
  %v5320 = vmax.f32 %v5144, 0.0
  %v5321 = vmax.f32 %v5147, 0.0
  %v5322 = vmax.f32 %v5152, 0.0
  %v5323 = vmax.f32 %v5155, 0.0
  %v5324 = vmax.f32 %v5160, 0.0
  %v5325 = vmax.f32 %v5163, 0.0
  %v5326 = vmax.f32 %v5168, 0.0
  %v5327 = vmax.f32 %v5171, 0.0
  %v5328 = vmax.f32 %v5176, 0.0
  %v5329 = vmax.f32 %v5179, 0.0
  %v5330 = vmax.f32 %v5184, 0.0
  %v5331 = vmax.f32 %v5187, 0.0
  %v5332 = vmax.f32 %v5192, 0.0
  %v5333 = vmax.f32 %v5195, 0.0
  %v5334 = vmax.f32 %v5200, 0.0
  %v5335 = vmax.f32 %v5203, 0.0
  %v5336 = vmax.f32 %v5208, 0.0
  %v5337 = vmax.f32 %v5211, 0.0
  %v5338 = vmax.f32 %v5216, 0.0
  %v5339 = vmax.f32 %v5219, 0.0
  %v5340 = vmax.f32 %v5224, 0.0
  %v5341 = vmax.f32 %v5227, 0.0
  %v5342 = vmax.f32 %v5232, 0.0
  %v5343 = vmax.f32 %v5235, 0.0
  %v5344 = vmax.f32 %v5240, 0.0
  %v5345 = vmax.f32 %v5243, 0.0
  %v5346 = vmax.f32 %v5248, 0.0
  %v5347 = vmax.f32 %v5251, 0.0
  %v5348 = vmax.f32 %v5256, 0.0
  %v5349 = vmax.f32 %v5259, 0.0
  %v5350 = vmax.f32 %v5264, 0.0
  %v5351 = vmax.f32 %v5267, 0.0
  %v5352 = vmax.f32 %v5272, 0.0
  %v5353 = vmax.f32 %v5275, 0.0
  %v5354 = vmax.f32 %v5280, 0.0
  %v5355 = vmax.f32 %v5283, 0.0
  %v5356 = vmax.f32 %v5288, 0.0
  %v5357 = vmax.f32 %v5291, 0.0
  %v5358 = vsel %vm1643, %v5294, %v2670
  %v5359 = vsel %vm1643, %v5295, %v2671
  %v5360 = vsel %vm1643, %v5296, %v2672
  %v5361 = vsel %vm1643, %v5297, %v2673
  %v5362 = vsel %vm1643, %v5298, %v2674
  %v5363 = vsel %vm1643, %v5299, %v2675
  %v5364 = vsel %vm1643, %v5300, %v2676
  %v5365 = vsel %vm1643, %v5301, %v2677
  %v5366 = vsel %vm1643, %v5302, %v2678
  %v5367 = vsel %vm1643, %v5303, %v2679
  %v5368 = vsel %vm1643, %v5304, %v2680
  %v5369 = vsel %vm1643, %v5305, %v2681
  %v5370 = vsel %vm1643, %v5306, %v2682
  %v5371 = vsel %vm1643, %v5307, %v2683
  %v5372 = vsel %vm1643, %v5308, %v2684
  %v5373 = vsel %vm1643, %v5309, %v2685
  %v5374 = vsel %vm1643, %v5310, %v2686
  %v5375 = vsel %vm1643, %v5311, %v2687
  %v5376 = vsel %vm1643, %v5312, %v2688
  %v5377 = vsel %vm1643, %v5313, %v2689
  %v5378 = vsel %vm1643, %v5314, %v2690
  %v5379 = vsel %vm1643, %v5315, %v2691
  %v5380 = vsel %vm1643, %v5316, %v2692
  %v5381 = vsel %vm1643, %v5317, %v2693
  %v5382 = vsel %vm1643, %v5318, %v2694
  %v5383 = vsel %vm1643, %v5319, %v2695
  %v5384 = vsel %vm1643, %v5320, %v2696
  %v5385 = vsel %vm1643, %v5321, %v2697
  %v5386 = vsel %vm1643, %v5322, %v2698
  %v5387 = vsel %vm1643, %v5323, %v2699
  %v5388 = vsel %vm1643, %v5324, %v2700
  %v5389 = vsel %vm1643, %v5325, %v2701
  %v5390 = vsel %vm1643, %v5326, %v2706
  %v5391 = vsel %vm1643, %v5327, %v2707
  %v5392 = vsel %vm1643, %v5328, %v2708
  %v5393 = vsel %vm1643, %v5329, %v2709
  %v5394 = vsel %vm1643, %v5330, %v2710
  %v5395 = vsel %vm1643, %v5331, %v2711
  %v5396 = vsel %vm1643, %v5332, %v2712
  %v5397 = vsel %vm1643, %v5333, %v2713
  %v5398 = vsel %vm1643, %v5334, %v2714
  %v5399 = vsel %vm1643, %v5335, %v2715
  %v5400 = vsel %vm1643, %v5336, %v2716
  %v5401 = vsel %vm1643, %v5337, %v2717
  %v5402 = vsel %vm1643, %v5338, %v2718
  %v5403 = vsel %vm1643, %v5339, %v2719
  %v5404 = vsel %vm1643, %v5340, %v2720
  %v5405 = vsel %vm1643, %v5341, %v2721
  %v5406 = vsel %vm1643, %v5342, %v2722
  %v5407 = vsel %vm1643, %v5343, %v2723
  %v5408 = vsel %vm1643, %v5344, %v2724
  %v5409 = vsel %vm1643, %v5345, %v2725
  %v5410 = vsel %vm1643, %v5346, %v2726
  %v5411 = vsel %vm1643, %v5347, %v2727
  %v5412 = vsel %vm1643, %v5348, %v2728
  %v5413 = vsel %vm1643, %v5349, %v2729
  %v5414 = vsel %vm1643, %v5350, %v2730
  %v5415 = vsel %vm1643, %v5351, %v2731
  %v5416 = vsel %vm1643, %v5352, %v2732
  %v5417 = vsel %vm1643, %v5353, %v2733
  %v5418 = vsel %vm1643, %v5354, %v2734
  %v5419 = vsel %vm1643, %v5355, %v2735
  %v5420 = vsel %vm1643, %v5356, %v2736
  %v5421 = vsel %vm1643, %v5357, %v2737
  %v5422 = vcombine.low %v5358, %v5362
  %v5423 = vcombine.high %v5358, %v5362
  %v5425 = vunpack.c.l.s4 1983009808
  %v5426 = vunpack.c.0.s8 %v5425
  %v5427 = vlaneseq
  %v5428 = vshrl.u32 %v5427, 7
  %v5429 = vsub.s32 %v5426, %v5428
  %v5430 = vrot.slane %v5422, %v5429
  %v5432 = vunpack.c.l.s4 1983009808
  %v5433 = vunpack.c.0.s8 %v5432
  %v5434 = vlaneseq
  %v5435 = vshrl.u32 %v5434, 7
  %v5436 = vsub.s32 %v5433, %v5435
  %v5437 = vrot.slane %v5423, %v5436
  %v5438 = vcombine.low %v5360, %v5364
  %v5439 = vcombine.high %v5360, %v5364
  %v5441 = vunpack.c.l.s4 1983009808
  %v5442 = vunpack.c.0.s8 %v5441
  %v5443 = vlaneseq
  %v5444 = vshrl.u32 %v5443, 7
  %v5445 = vsub.s32 %v5442, %v5444
  %v5446 = vrot.slane %v5438, %v5445
  %v5448 = vunpack.c.l.s4 1983009808
  %v5449 = vunpack.c.0.s8 %v5448
  %v5450 = vlaneseq
  %v5451 = vshrl.u32 %v5450, 7
  %v5452 = vsub.s32 %v5449, %v5451
  %v5453 = vrot.slane %v5439, %v5452
  %v5454 = vcombine.low %v5366, %v5370
  %v5455 = vcombine.high %v5366, %v5370
  %v5457 = vunpack.c.l.s4 1983009808
  %v5458 = vunpack.c.0.s8 %v5457
  %v5459 = vlaneseq
  %v5460 = vshrl.u32 %v5459, 7
  %v5461 = vsub.s32 %v5458, %v5460
  %v5462 = vrot.slane %v5454, %v5461
  %v5464 = vunpack.c.l.s4 1983009808
  %v5465 = vunpack.c.0.s8 %v5464
  %v5466 = vlaneseq
  %v5467 = vshrl.u32 %v5466, 7
  %v5468 = vsub.s32 %v5465, %v5467
  %v5469 = vrot.slane %v5455, %v5468
  %v5470 = vcombine.low %v5368, %v5372
  %v5471 = vcombine.high %v5368, %v5372
  %v5473 = vunpack.c.l.s4 1983009808
  %v5474 = vunpack.c.0.s8 %v5473
  %v5475 = vlaneseq
  %v5476 = vshrl.u32 %v5475, 7
  %v5477 = vsub.s32 %v5474, %v5476
  %v5478 = vrot.slane %v5470, %v5477
  %v5480 = vunpack.c.l.s4 1983009808
  %v5481 = vunpack.c.0.s8 %v5480
  %v5482 = vlaneseq
  %v5483 = vshrl.u32 %v5482, 7
  %v5484 = vsub.s32 %v5481, %v5483
  %v5485 = vrot.slane %v5471, %v5484
  %v5486 = vcombine.low %v5430, %v5446
  %v5487 = vcombine.high %v5430, %v5446
  %v5489 = vunpack.c.l.s4 1934713408
  %v5490 = vunpack.c.0.s8 %v5489
  %v5491 = vlaneseq
  %v5492 = vshrl.u32 %v5491, 7
  %v5493 = vsub.s32 %v5490, %v5492
  %v5494 = vrot.slane %v5486, %v5493
  %v5496 = vunpack.c.l.s4 1934713408
  %v5497 = vunpack.c.0.s8 %v5496
  %v5498 = vlaneseq
  %v5499 = vshrl.u32 %v5498, 7
  %v5500 = vsub.s32 %v5497, %v5499
  %v5501 = vrot.slane %v5487, %v5500
  %v5502 = vcombine.low %v5437, %v5453
  %v5503 = vcombine.high %v5437, %v5453
  %v5505 = vunpack.c.l.s4 1934713408
  %v5506 = vunpack.c.0.s8 %v5505
  %v5507 = vlaneseq
  %v5508 = vshrl.u32 %v5507, 7
  %v5509 = vsub.s32 %v5506, %v5508
  %v5510 = vrot.slane %v5502, %v5509
  %v5512 = vunpack.c.l.s4 1934713408
  %v5513 = vunpack.c.0.s8 %v5512
  %v5514 = vlaneseq
  %v5515 = vshrl.u32 %v5514, 7
  %v5516 = vsub.s32 %v5513, %v5515
  %v5517 = vrot.slane %v5503, %v5516
  %v5518 = vcombine.low %v5462, %v5478
  %v5519 = vcombine.high %v5462, %v5478
  %v5521 = vunpack.c.l.s4 1934713408
  %v5522 = vunpack.c.0.s8 %v5521
  %v5523 = vlaneseq
  %v5524 = vshrl.u32 %v5523, 7
  %v5525 = vsub.s32 %v5522, %v5524
  %v5526 = vrot.slane %v5518, %v5525
  %v5528 = vunpack.c.l.s4 1934713408
  %v5529 = vunpack.c.0.s8 %v5528
  %v5530 = vlaneseq
  %v5531 = vshrl.u32 %v5530, 7
  %v5532 = vsub.s32 %v5529, %v5531
  %v5533 = vrot.slane %v5519, %v5532
  %v5534 = vcombine.low %v5469, %v5485
  %v5535 = vcombine.high %v5469, %v5485
  %v5537 = vunpack.c.l.s4 1934713408
  %v5538 = vunpack.c.0.s8 %v5537
  %v5539 = vlaneseq
  %v5540 = vshrl.u32 %v5539, 7
  %v5541 = vsub.s32 %v5538, %v5540
  %v5542 = vrot.slane %v5534, %v5541
  %v5544 = vunpack.c.l.s4 1934713408
  %v5545 = vunpack.c.0.s8 %v5544
  %v5546 = vlaneseq
  %v5547 = vshrl.u32 %v5546, 7
  %v5548 = vsub.s32 %v5545, %v5547
  %v5549 = vrot.slane %v5535, %v5548
  %v5550 = vcombine.low %v5494, %v5526
  %v5551 = vcombine.high %v5494, %v5526
  %v5552 = vcombine.low %v5501, %v5533
  %v5553 = vcombine.high %v5501, %v5533
  %v5554 = vcombine.low %v5510, %v5542
  %v5555 = vcombine.high %v5510, %v5542
  %v5556 = vcombine.low %v5517, %v5549
  %v5557 = vcombine.high %v5517, %v5549
  %v5558 = vcombine.low %v5374, %v5378
  %v5559 = vcombine.high %v5374, %v5378
  %v5561 = vunpack.c.l.s4 1983009808
  %v5562 = vunpack.c.0.s8 %v5561
  %v5563 = vlaneseq
  %v5564 = vshrl.u32 %v5563, 7
  %v5565 = vsub.s32 %v5562, %v5564
  %v5566 = vrot.slane %v5558, %v5565
  %v5568 = vunpack.c.l.s4 1983009808
  %v5569 = vunpack.c.0.s8 %v5568
  %v5570 = vlaneseq
  %v5571 = vshrl.u32 %v5570, 7
  %v5572 = vsub.s32 %v5569, %v5571
  %v5573 = vrot.slane %v5559, %v5572
  %v5574 = vcombine.low %v5376, %v5380
  %v5575 = vcombine.high %v5376, %v5380
  %v5577 = vunpack.c.l.s4 1983009808
  %v5578 = vunpack.c.0.s8 %v5577
  %v5579 = vlaneseq
  %v5580 = vshrl.u32 %v5579, 7
  %v5581 = vsub.s32 %v5578, %v5580
  %v5582 = vrot.slane %v5574, %v5581
  %v5584 = vunpack.c.l.s4 1983009808
  %v5585 = vunpack.c.0.s8 %v5584
  %v5586 = vlaneseq
  %v5587 = vshrl.u32 %v5586, 7
  %v5588 = vsub.s32 %v5585, %v5587
  %v5589 = vrot.slane %v5575, %v5588
  %v5590 = vcombine.low %v5382, %v5386
  %v5591 = vcombine.high %v5382, %v5386
  %v5593 = vunpack.c.l.s4 1983009808
  %v5594 = vunpack.c.0.s8 %v5593
  %v5595 = vlaneseq
  %v5596 = vshrl.u32 %v5595, 7
  %v5597 = vsub.s32 %v5594, %v5596
  %v5598 = vrot.slane %v5590, %v5597
  %v5600 = vunpack.c.l.s4 1983009808
  %v5601 = vunpack.c.0.s8 %v5600
  %v5602 = vlaneseq
  %v5603 = vshrl.u32 %v5602, 7
  %v5604 = vsub.s32 %v5601, %v5603
  %v5605 = vrot.slane %v5591, %v5604
  %v5606 = vcombine.low %v5384, %v5388
  %v5607 = vcombine.high %v5384, %v5388
  %v5609 = vunpack.c.l.s4 1983009808
  %v5610 = vunpack.c.0.s8 %v5609
  %v5611 = vlaneseq
  %v5612 = vshrl.u32 %v5611, 7
  %v5613 = vsub.s32 %v5610, %v5612
  %v5614 = vrot.slane %v5606, %v5613
  %v5616 = vunpack.c.l.s4 1983009808
  %v5617 = vunpack.c.0.s8 %v5616
  %v5618 = vlaneseq
  %v5619 = vshrl.u32 %v5618, 7
  %v5620 = vsub.s32 %v5617, %v5619
  %v5621 = vrot.slane %v5607, %v5620
  %v5622 = vcombine.low %v5566, %v5582
  %v5623 = vcombine.high %v5566, %v5582
  %v5625 = vunpack.c.l.s4 1934713408
  %v5626 = vunpack.c.0.s8 %v5625
  %v5627 = vlaneseq
  %v5628 = vshrl.u32 %v5627, 7
  %v5629 = vsub.s32 %v5626, %v5628
  %v5630 = vrot.slane %v5622, %v5629
  %v5632 = vunpack.c.l.s4 1934713408
  %v5633 = vunpack.c.0.s8 %v5632
  %v5634 = vlaneseq
  %v5635 = vshrl.u32 %v5634, 7
  %v5636 = vsub.s32 %v5633, %v5635
  %v5637 = vrot.slane %v5623, %v5636
  %v5638 = vcombine.low %v5573, %v5589
  %v5639 = vcombine.high %v5573, %v5589
  %v5641 = vunpack.c.l.s4 1934713408
  %v5642 = vunpack.c.0.s8 %v5641
  %v5643 = vlaneseq
  %v5644 = vshrl.u32 %v5643, 7
  %v5645 = vsub.s32 %v5642, %v5644
  %v5646 = vrot.slane %v5638, %v5645
  %v5648 = vunpack.c.l.s4 1934713408
  %v5649 = vunpack.c.0.s8 %v5648
  %v5650 = vlaneseq
  %v5651 = vshrl.u32 %v5650, 7
  %v5652 = vsub.s32 %v5649, %v5651
  %v5653 = vrot.slane %v5639, %v5652
  %v5654 = vcombine.low %v5598, %v5614
  %v5655 = vcombine.high %v5598, %v5614
  %v5657 = vunpack.c.l.s4 1934713408
  %v5658 = vunpack.c.0.s8 %v5657
  %v5659 = vlaneseq
  %v5660 = vshrl.u32 %v5659, 7
  %v5661 = vsub.s32 %v5658, %v5660
  %v5662 = vrot.slane %v5654, %v5661
  %v5664 = vunpack.c.l.s4 1934713408
  %v5665 = vunpack.c.0.s8 %v5664
  %v5666 = vlaneseq
  %v5667 = vshrl.u32 %v5666, 7
  %v5668 = vsub.s32 %v5665, %v5667
  %v5669 = vrot.slane %v5655, %v5668
  %v5670 = vcombine.low %v5605, %v5621
  %v5671 = vcombine.high %v5605, %v5621
  %v5673 = vunpack.c.l.s4 1934713408
  %v5674 = vunpack.c.0.s8 %v5673
  %v5675 = vlaneseq
  %v5676 = vshrl.u32 %v5675, 7
  %v5677 = vsub.s32 %v5674, %v5676
  %v5678 = vrot.slane %v5670, %v5677
  %v5680 = vunpack.c.l.s4 1934713408
  %v5681 = vunpack.c.0.s8 %v5680
  %v5682 = vlaneseq
  %v5683 = vshrl.u32 %v5682, 7
  %v5684 = vsub.s32 %v5681, %v5683
  %v5685 = vrot.slane %v5671, %v5684
  %v5686 = vcombine.low %v5630, %v5662
  %v5687 = vcombine.high %v5630, %v5662
  %v5688 = vcombine.low %v5637, %v5669
  %v5689 = vcombine.high %v5637, %v5669
  %v5690 = vcombine.low %v5646, %v5678
  %v5691 = vcombine.high %v5646, %v5678
  %v5692 = vcombine.low %v5653, %v5685
  %v5693 = vcombine.high %v5653, %v5685
  %v5694 = vcombine.low %v5359, %v5363
  %v5695 = vcombine.high %v5359, %v5363
  %v5697 = vunpack.c.l.s4 1983009808
  %v5698 = vunpack.c.0.s8 %v5697
  %v5699 = vlaneseq
  %v5700 = vshrl.u32 %v5699, 7
  %v5701 = vsub.s32 %v5698, %v5700
  %v5702 = vrot.slane %v5694, %v5701
  %v5704 = vunpack.c.l.s4 1983009808
  %v5705 = vunpack.c.0.s8 %v5704
  %v5706 = vlaneseq
  %v5707 = vshrl.u32 %v5706, 7
  %v5708 = vsub.s32 %v5705, %v5707
  %v5709 = vrot.slane %v5695, %v5708
  %v5710 = vcombine.low %v5361, %v5365
  %v5711 = vcombine.high %v5361, %v5365
  %v5713 = vunpack.c.l.s4 1983009808
  %v5714 = vunpack.c.0.s8 %v5713
  %v5715 = vlaneseq
  %v5716 = vshrl.u32 %v5715, 7
  %v5717 = vsub.s32 %v5714, %v5716
  %v5718 = vrot.slane %v5710, %v5717
  %v5720 = vunpack.c.l.s4 1983009808
  %v5721 = vunpack.c.0.s8 %v5720
  %v5722 = vlaneseq
  %v5723 = vshrl.u32 %v5722, 7
  %v5724 = vsub.s32 %v5721, %v5723
  %v5725 = vrot.slane %v5711, %v5724
  %v5726 = vcombine.low %v5367, %v5371
  %v5727 = vcombine.high %v5367, %v5371
  %v5729 = vunpack.c.l.s4 1983009808
  %v5730 = vunpack.c.0.s8 %v5729
  %v5731 = vlaneseq
  %v5732 = vshrl.u32 %v5731, 7
  %v5733 = vsub.s32 %v5730, %v5732
  %v5734 = vrot.slane %v5726, %v5733
  %v5736 = vunpack.c.l.s4 1983009808
  %v5737 = vunpack.c.0.s8 %v5736
  %v5738 = vlaneseq
  %v5739 = vshrl.u32 %v5738, 7
  %v5740 = vsub.s32 %v5737, %v5739
  %v5741 = vrot.slane %v5727, %v5740
  %v5742 = vcombine.low %v5369, %v5373
  %v5743 = vcombine.high %v5369, %v5373
  %v5745 = vunpack.c.l.s4 1983009808
  %v5746 = vunpack.c.0.s8 %v5745
  %v5747 = vlaneseq
  %v5748 = vshrl.u32 %v5747, 7
  %v5749 = vsub.s32 %v5746, %v5748
  %v5750 = vrot.slane %v5742, %v5749
  %v5752 = vunpack.c.l.s4 1983009808
  %v5753 = vunpack.c.0.s8 %v5752
  %v5754 = vlaneseq
  %v5755 = vshrl.u32 %v5754, 7
  %v5756 = vsub.s32 %v5753, %v5755
  %v5757 = vrot.slane %v5743, %v5756
  %v5758 = vcombine.low %v5702, %v5718
  %v5759 = vcombine.high %v5702, %v5718
  %v5761 = vunpack.c.l.s4 1934713408
  %v5762 = vunpack.c.0.s8 %v5761
  %v5763 = vlaneseq
  %v5764 = vshrl.u32 %v5763, 7
  %v5765 = vsub.s32 %v5762, %v5764
  %v5766 = vrot.slane %v5758, %v5765
  %v5768 = vunpack.c.l.s4 1934713408
  %v5769 = vunpack.c.0.s8 %v5768
  %v5770 = vlaneseq
  %v5771 = vshrl.u32 %v5770, 7
  %v5772 = vsub.s32 %v5769, %v5771
  %v5773 = vrot.slane %v5759, %v5772
  %v5774 = vcombine.low %v5709, %v5725
  %v5775 = vcombine.high %v5709, %v5725
  %v5777 = vunpack.c.l.s4 1934713408
  %v5778 = vunpack.c.0.s8 %v5777
  %v5779 = vlaneseq
  %v5780 = vshrl.u32 %v5779, 7
  %v5781 = vsub.s32 %v5778, %v5780
  %v5782 = vrot.slane %v5774, %v5781
  %v5784 = vunpack.c.l.s4 1934713408
  %v5785 = vunpack.c.0.s8 %v5784
  %v5786 = vlaneseq
  %v5787 = vshrl.u32 %v5786, 7
  %v5788 = vsub.s32 %v5785, %v5787
  %v5789 = vrot.slane %v5775, %v5788
  %v5790 = vcombine.low %v5734, %v5750
  %v5791 = vcombine.high %v5734, %v5750
  %v5793 = vunpack.c.l.s4 1934713408
  %v5794 = vunpack.c.0.s8 %v5793
  %v5795 = vlaneseq
  %v5796 = vshrl.u32 %v5795, 7
  %v5797 = vsub.s32 %v5794, %v5796
  %v5798 = vrot.slane %v5790, %v5797
  %v5800 = vunpack.c.l.s4 1934713408
  %v5801 = vunpack.c.0.s8 %v5800
  %v5802 = vlaneseq
  %v5803 = vshrl.u32 %v5802, 7
  %v5804 = vsub.s32 %v5801, %v5803
  %v5805 = vrot.slane %v5791, %v5804
  %v5806 = vcombine.low %v5741, %v5757
  %v5807 = vcombine.high %v5741, %v5757
  %v5809 = vunpack.c.l.s4 1934713408
  %v5810 = vunpack.c.0.s8 %v5809
  %v5811 = vlaneseq
  %v5812 = vshrl.u32 %v5811, 7
  %v5813 = vsub.s32 %v5810, %v5812
  %v5814 = vrot.slane %v5806, %v5813
  %v5816 = vunpack.c.l.s4 1934713408
  %v5817 = vunpack.c.0.s8 %v5816
  %v5818 = vlaneseq
  %v5819 = vshrl.u32 %v5818, 7
  %v5820 = vsub.s32 %v5817, %v5819
  %v5821 = vrot.slane %v5807, %v5820
  %v5822 = vcombine.low %v5766, %v5798
  %v5823 = vcombine.high %v5766, %v5798
  %v5824 = vcombine.low %v5773, %v5805
  %v5825 = vcombine.high %v5773, %v5805
  %v5826 = vcombine.low %v5782, %v5814
  %v5827 = vcombine.high %v5782, %v5814
  %v5828 = vcombine.low %v5789, %v5821
  %v5829 = vcombine.high %v5789, %v5821
  %v5830 = vcombine.low %v5375, %v5379
  %v5831 = vcombine.high %v5375, %v5379
  %v5833 = vunpack.c.l.s4 1983009808
  %v5834 = vunpack.c.0.s8 %v5833
  %v5835 = vlaneseq
  %v5836 = vshrl.u32 %v5835, 7
  %v5837 = vsub.s32 %v5834, %v5836
  %v5838 = vrot.slane %v5830, %v5837
  %v5840 = vunpack.c.l.s4 1983009808
  %v5841 = vunpack.c.0.s8 %v5840
  %v5842 = vlaneseq
  %v5843 = vshrl.u32 %v5842, 7
  %v5844 = vsub.s32 %v5841, %v5843
  %v5845 = vrot.slane %v5831, %v5844
  %v5846 = vcombine.low %v5377, %v5381
  %v5847 = vcombine.high %v5377, %v5381
  %v5849 = vunpack.c.l.s4 1983009808
  %v5850 = vunpack.c.0.s8 %v5849
  %v5851 = vlaneseq
  %v5852 = vshrl.u32 %v5851, 7
  %v5853 = vsub.s32 %v5850, %v5852
  %v5854 = vrot.slane %v5846, %v5853
  %v5856 = vunpack.c.l.s4 1983009808
  %v5857 = vunpack.c.0.s8 %v5856
  %v5858 = vlaneseq
  %v5859 = vshrl.u32 %v5858, 7
  %v5860 = vsub.s32 %v5857, %v5859
  %v5861 = vrot.slane %v5847, %v5860
  %v5862 = vcombine.low %v5383, %v5387
  %v5863 = vcombine.high %v5383, %v5387
  %v5865 = vunpack.c.l.s4 1983009808
  %v5866 = vunpack.c.0.s8 %v5865
  %v5867 = vlaneseq
  %v5868 = vshrl.u32 %v5867, 7
  %v5869 = vsub.s32 %v5866, %v5868
  %v5870 = vrot.slane %v5862, %v5869
  %v5872 = vunpack.c.l.s4 1983009808
  %v5873 = vunpack.c.0.s8 %v5872
  %v5874 = vlaneseq
  %v5875 = vshrl.u32 %v5874, 7
  %v5876 = vsub.s32 %v5873, %v5875
  %v5877 = vrot.slane %v5863, %v5876
  %v5878 = vcombine.low %v5385, %v5389
  %v5879 = vcombine.high %v5385, %v5389
  %v5881 = vunpack.c.l.s4 1983009808
  %v5882 = vunpack.c.0.s8 %v5881
  %v5883 = vlaneseq
  %v5884 = vshrl.u32 %v5883, 7
  %v5885 = vsub.s32 %v5882, %v5884
  %v5886 = vrot.slane %v5878, %v5885
  %v5888 = vunpack.c.l.s4 1983009808
  %v5889 = vunpack.c.0.s8 %v5888
  %v5890 = vlaneseq
  %v5891 = vshrl.u32 %v5890, 7
  %v5892 = vsub.s32 %v5889, %v5891
  %v5893 = vrot.slane %v5879, %v5892
  %v5894 = vcombine.low %v5838, %v5854
  %v5895 = vcombine.high %v5838, %v5854
  %v5897 = vunpack.c.l.s4 1934713408
  %v5898 = vunpack.c.0.s8 %v5897
  %v5899 = vlaneseq
  %v5900 = vshrl.u32 %v5899, 7
  %v5901 = vsub.s32 %v5898, %v5900
  %v5902 = vrot.slane %v5894, %v5901
  %v5904 = vunpack.c.l.s4 1934713408
  %v5905 = vunpack.c.0.s8 %v5904
  %v5906 = vlaneseq
  %v5907 = vshrl.u32 %v5906, 7
  %v5908 = vsub.s32 %v5905, %v5907
  %v5909 = vrot.slane %v5895, %v5908
  %v5910 = vcombine.low %v5845, %v5861
  %v5911 = vcombine.high %v5845, %v5861
  %v5913 = vunpack.c.l.s4 1934713408
  %v5914 = vunpack.c.0.s8 %v5913
  %v5915 = vlaneseq
  %v5916 = vshrl.u32 %v5915, 7
  %v5917 = vsub.s32 %v5914, %v5916
  %v5918 = vrot.slane %v5910, %v5917
  %v5920 = vunpack.c.l.s4 1934713408
  %v5921 = vunpack.c.0.s8 %v5920
  %v5922 = vlaneseq
  %v5923 = vshrl.u32 %v5922, 7
  %v5924 = vsub.s32 %v5921, %v5923
  %v5925 = vrot.slane %v5911, %v5924
  %v5926 = vcombine.low %v5870, %v5886
  %v5927 = vcombine.high %v5870, %v5886
  %v5929 = vunpack.c.l.s4 1934713408
  %v5930 = vunpack.c.0.s8 %v5929
  %v5931 = vlaneseq
  %v5932 = vshrl.u32 %v5931, 7
  %v5933 = vsub.s32 %v5930, %v5932
  %v5934 = vrot.slane %v5926, %v5933
  %v5936 = vunpack.c.l.s4 1934713408
  %v5937 = vunpack.c.0.s8 %v5936
  %v5938 = vlaneseq
  %v5939 = vshrl.u32 %v5938, 7
  %v5940 = vsub.s32 %v5937, %v5939
  %v5941 = vrot.slane %v5927, %v5940
  %v5942 = vcombine.low %v5877, %v5893
  %v5943 = vcombine.high %v5877, %v5893
  %v5945 = vunpack.c.l.s4 1934713408
  %v5946 = vunpack.c.0.s8 %v5945
  %v5947 = vlaneseq
  %v5948 = vshrl.u32 %v5947, 7
  %v5949 = vsub.s32 %v5946, %v5948
  %v5950 = vrot.slane %v5942, %v5949
  %v5952 = vunpack.c.l.s4 1934713408
  %v5953 = vunpack.c.0.s8 %v5952
  %v5954 = vlaneseq
  %v5955 = vshrl.u32 %v5954, 7
  %v5956 = vsub.s32 %v5953, %v5955
  %v5957 = vrot.slane %v5943, %v5956
  %v5958 = vcombine.low %v5902, %v5934
  %v5959 = vcombine.high %v5902, %v5934
  %v5960 = vcombine.low %v5909, %v5941
  %v5961 = vcombine.high %v5909, %v5941
  %v5962 = vcombine.low %v5918, %v5950
  %v5963 = vcombine.high %v5918, %v5950
  %v5964 = vcombine.low %v5925, %v5957
  %v5965 = vcombine.high %v5925, %v5957
  %v5966 = vcombine.low %v5390, %v5394
  %v5967 = vcombine.high %v5390, %v5394
  %v5969 = vunpack.c.l.s4 1983009808
  %v5970 = vunpack.c.0.s8 %v5969
  %v5971 = vlaneseq
  %v5972 = vshrl.u32 %v5971, 7
  %v5973 = vsub.s32 %v5970, %v5972
  %v5974 = vrot.slane %v5966, %v5973
  %v5976 = vunpack.c.l.s4 1983009808
  %v5977 = vunpack.c.0.s8 %v5976
  %v5978 = vlaneseq
  %v5979 = vshrl.u32 %v5978, 7
  %v5980 = vsub.s32 %v5977, %v5979
  %v5981 = vrot.slane %v5967, %v5980
  %v5982 = vcombine.low %v5392, %v5396
  %v5983 = vcombine.high %v5392, %v5396
  %v5985 = vunpack.c.l.s4 1983009808
  %v5986 = vunpack.c.0.s8 %v5985
  %v5987 = vlaneseq
  %v5988 = vshrl.u32 %v5987, 7
  %v5989 = vsub.s32 %v5986, %v5988
  %v5990 = vrot.slane %v5982, %v5989
  %v5992 = vunpack.c.l.s4 1983009808
  %v5993 = vunpack.c.0.s8 %v5992
  %v5994 = vlaneseq
  %v5995 = vshrl.u32 %v5994, 7
  %v5996 = vsub.s32 %v5993, %v5995
  %v5997 = vrot.slane %v5983, %v5996
  %v5998 = vcombine.low %v5398, %v5402
  %v5999 = vcombine.high %v5398, %v5402
  %v6001 = vunpack.c.l.s4 1983009808
  %v6002 = vunpack.c.0.s8 %v6001
  %v6003 = vlaneseq
  %v6004 = vshrl.u32 %v6003, 7
  %v6005 = vsub.s32 %v6002, %v6004
  %v6006 = vrot.slane %v5998, %v6005
  %v6008 = vunpack.c.l.s4 1983009808
  %v6009 = vunpack.c.0.s8 %v6008
  %v6010 = vlaneseq
  %v6011 = vshrl.u32 %v6010, 7
  %v6012 = vsub.s32 %v6009, %v6011
  %v6013 = vrot.slane %v5999, %v6012
  %v6014 = vcombine.low %v5400, %v5404
  %v6015 = vcombine.high %v5400, %v5404
  %v6017 = vunpack.c.l.s4 1983009808
  %v6018 = vunpack.c.0.s8 %v6017
  %v6019 = vlaneseq
  %v6020 = vshrl.u32 %v6019, 7
  %v6021 = vsub.s32 %v6018, %v6020
  %v6022 = vrot.slane %v6014, %v6021
  %v6024 = vunpack.c.l.s4 1983009808
  %v6025 = vunpack.c.0.s8 %v6024
  %v6026 = vlaneseq
  %v6027 = vshrl.u32 %v6026, 7
  %v6028 = vsub.s32 %v6025, %v6027
  %v6029 = vrot.slane %v6015, %v6028
  %v6030 = vcombine.low %v5974, %v5990
  %v6031 = vcombine.high %v5974, %v5990
  %v6033 = vunpack.c.l.s4 1934713408
  %v6034 = vunpack.c.0.s8 %v6033
  %v6035 = vlaneseq
  %v6036 = vshrl.u32 %v6035, 7
  %v6037 = vsub.s32 %v6034, %v6036
  %v6038 = vrot.slane %v6030, %v6037
  %v6040 = vunpack.c.l.s4 1934713408
  %v6041 = vunpack.c.0.s8 %v6040
  %v6042 = vlaneseq
  %v6043 = vshrl.u32 %v6042, 7
  %v6044 = vsub.s32 %v6041, %v6043
  %v6045 = vrot.slane %v6031, %v6044
  %v6046 = vcombine.low %v5981, %v5997
  %v6047 = vcombine.high %v5981, %v5997
  %v6049 = vunpack.c.l.s4 1934713408
  %v6050 = vunpack.c.0.s8 %v6049
  %v6051 = vlaneseq
  %v6052 = vshrl.u32 %v6051, 7
  %v6053 = vsub.s32 %v6050, %v6052
  %v6054 = vrot.slane %v6046, %v6053
  %v6056 = vunpack.c.l.s4 1934713408
  %v6057 = vunpack.c.0.s8 %v6056
  %v6058 = vlaneseq
  %v6059 = vshrl.u32 %v6058, 7
  %v6060 = vsub.s32 %v6057, %v6059
  %v6061 = vrot.slane %v6047, %v6060
  %v6062 = vcombine.low %v6006, %v6022
  %v6063 = vcombine.high %v6006, %v6022
  %v6065 = vunpack.c.l.s4 1934713408
  %v6066 = vunpack.c.0.s8 %v6065
  %v6067 = vlaneseq
  %v6068 = vshrl.u32 %v6067, 7
  %v6069 = vsub.s32 %v6066, %v6068
  %v6070 = vrot.slane %v6062, %v6069
  %v6072 = vunpack.c.l.s4 1934713408
  %v6073 = vunpack.c.0.s8 %v6072
  %v6074 = vlaneseq
  %v6075 = vshrl.u32 %v6074, 7
  %v6076 = vsub.s32 %v6073, %v6075
  %v6077 = vrot.slane %v6063, %v6076
  %v6078 = vcombine.low %v6013, %v6029
  %v6079 = vcombine.high %v6013, %v6029
  %v6081 = vunpack.c.l.s4 1934713408
  %v6082 = vunpack.c.0.s8 %v6081
  %v6083 = vlaneseq
  %v6084 = vshrl.u32 %v6083, 7
  %v6085 = vsub.s32 %v6082, %v6084
  %v6086 = vrot.slane %v6078, %v6085
  %v6088 = vunpack.c.l.s4 1934713408
  %v6089 = vunpack.c.0.s8 %v6088
  %v6090 = vlaneseq
  %v6091 = vshrl.u32 %v6090, 7
  %v6092 = vsub.s32 %v6089, %v6091
  %v6093 = vrot.slane %v6079, %v6092
  %v6094 = vcombine.low %v6038, %v6070
  %v6095 = vcombine.high %v6038, %v6070
  %v6096 = vcombine.low %v6045, %v6077
  %v6097 = vcombine.high %v6045, %v6077
  %v6098 = vcombine.low %v6054, %v6086
  %v6099 = vcombine.high %v6054, %v6086
  %v6100 = vcombine.low %v6061, %v6093
  %v6101 = vcombine.high %v6061, %v6093
  %v6102 = vcombine.low %v5406, %v5410
  %v6103 = vcombine.high %v5406, %v5410
  %v6105 = vunpack.c.l.s4 1983009808
  %v6106 = vunpack.c.0.s8 %v6105
  %v6107 = vlaneseq
  %v6108 = vshrl.u32 %v6107, 7
  %v6109 = vsub.s32 %v6106, %v6108
  %v6110 = vrot.slane %v6102, %v6109
  %v6112 = vunpack.c.l.s4 1983009808
  %v6113 = vunpack.c.0.s8 %v6112
  %v6114 = vlaneseq
  %v6115 = vshrl.u32 %v6114, 7
  %v6116 = vsub.s32 %v6113, %v6115
  %v6117 = vrot.slane %v6103, %v6116
  %v6118 = vcombine.low %v5408, %v5412
  %v6119 = vcombine.high %v5408, %v5412
  %v6121 = vunpack.c.l.s4 1983009808
  %v6122 = vunpack.c.0.s8 %v6121
  %v6123 = vlaneseq
  %v6124 = vshrl.u32 %v6123, 7
  %v6125 = vsub.s32 %v6122, %v6124
  %v6126 = vrot.slane %v6118, %v6125
  %v6128 = vunpack.c.l.s4 1983009808
  %v6129 = vunpack.c.0.s8 %v6128
  %v6130 = vlaneseq
  %v6131 = vshrl.u32 %v6130, 7
  %v6132 = vsub.s32 %v6129, %v6131
  %v6133 = vrot.slane %v6119, %v6132
  %v6134 = vcombine.low %v5414, %v5418
  %v6135 = vcombine.high %v5414, %v5418
  %v6137 = vunpack.c.l.s4 1983009808
  %v6138 = vunpack.c.0.s8 %v6137
  %v6139 = vlaneseq
  %v6140 = vshrl.u32 %v6139, 7
  %v6141 = vsub.s32 %v6138, %v6140
  %v6142 = vrot.slane %v6134, %v6141
  %v6144 = vunpack.c.l.s4 1983009808
  %v6145 = vunpack.c.0.s8 %v6144
  %v6146 = vlaneseq
  %v6147 = vshrl.u32 %v6146, 7
  %v6148 = vsub.s32 %v6145, %v6147
  %v6149 = vrot.slane %v6135, %v6148
  %v6150 = vcombine.low %v5416, %v5420
  %v6151 = vcombine.high %v5416, %v5420
  %v6153 = vunpack.c.l.s4 1983009808
  %v6154 = vunpack.c.0.s8 %v6153
  %v6155 = vlaneseq
  %v6156 = vshrl.u32 %v6155, 7
  %v6157 = vsub.s32 %v6154, %v6156
  %v6158 = vrot.slane %v6150, %v6157
  %v6160 = vunpack.c.l.s4 1983009808
  %v6161 = vunpack.c.0.s8 %v6160
  %v6162 = vlaneseq
  %v6163 = vshrl.u32 %v6162, 7
  %v6164 = vsub.s32 %v6161, %v6163
  %v6165 = vrot.slane %v6151, %v6164
  %v6166 = vcombine.low %v6110, %v6126
  %v6167 = vcombine.high %v6110, %v6126
  %v6169 = vunpack.c.l.s4 1934713408
  %v6170 = vunpack.c.0.s8 %v6169
  %v6171 = vlaneseq
  %v6172 = vshrl.u32 %v6171, 7
  %v6173 = vsub.s32 %v6170, %v6172
  %v6174 = vrot.slane %v6166, %v6173
  %v6176 = vunpack.c.l.s4 1934713408
  %v6177 = vunpack.c.0.s8 %v6176
  %v6178 = vlaneseq
  %v6179 = vshrl.u32 %v6178, 7
  %v6180 = vsub.s32 %v6177, %v6179
  %v6181 = vrot.slane %v6167, %v6180
  %v6182 = vcombine.low %v6117, %v6133
  %v6183 = vcombine.high %v6117, %v6133
  %v6185 = vunpack.c.l.s4 1934713408
  %v6186 = vunpack.c.0.s8 %v6185
  %v6187 = vlaneseq
  %v6188 = vshrl.u32 %v6187, 7
  %v6189 = vsub.s32 %v6186, %v6188
  %v6190 = vrot.slane %v6182, %v6189
  %v6192 = vunpack.c.l.s4 1934713408
  %v6193 = vunpack.c.0.s8 %v6192
  %v6194 = vlaneseq
  %v6195 = vshrl.u32 %v6194, 7
  %v6196 = vsub.s32 %v6193, %v6195
  %v6197 = vrot.slane %v6183, %v6196
  %v6198 = vcombine.low %v6142, %v6158
  %v6199 = vcombine.high %v6142, %v6158
  %v6201 = vunpack.c.l.s4 1934713408
  %v6202 = vunpack.c.0.s8 %v6201
  %v6203 = vlaneseq
  %v6204 = vshrl.u32 %v6203, 7
  %v6205 = vsub.s32 %v6202, %v6204
  %v6206 = vrot.slane %v6198, %v6205
  %v6208 = vunpack.c.l.s4 1934713408
  %v6209 = vunpack.c.0.s8 %v6208
  %v6210 = vlaneseq
  %v6211 = vshrl.u32 %v6210, 7
  %v6212 = vsub.s32 %v6209, %v6211
  %v6213 = vrot.slane %v6199, %v6212
  %v6214 = vcombine.low %v6149, %v6165
  %v6215 = vcombine.high %v6149, %v6165
  %v6217 = vunpack.c.l.s4 1934713408
  %v6218 = vunpack.c.0.s8 %v6217
  %v6219 = vlaneseq
  %v6220 = vshrl.u32 %v6219, 7
  %v6221 = vsub.s32 %v6218, %v6220
  %v6222 = vrot.slane %v6214, %v6221
  %v6224 = vunpack.c.l.s4 1934713408
  %v6225 = vunpack.c.0.s8 %v6224
  %v6226 = vlaneseq
  %v6227 = vshrl.u32 %v6226, 7
  %v6228 = vsub.s32 %v6225, %v6227
  %v6229 = vrot.slane %v6215, %v6228
  %v6230 = vcombine.low %v6174, %v6206
  %v6231 = vcombine.high %v6174, %v6206
  %v6232 = vcombine.low %v6181, %v6213
  %v6233 = vcombine.high %v6181, %v6213
  %v6234 = vcombine.low %v6190, %v6222
  %v6235 = vcombine.high %v6190, %v6222
  %v6236 = vcombine.low %v6197, %v6229
  %v6237 = vcombine.high %v6197, %v6229
  %v6238 = vcombine.low %v5391, %v5395
  %v6239 = vcombine.high %v5391, %v5395
  %v6241 = vunpack.c.l.s4 1983009808
  %v6242 = vunpack.c.0.s8 %v6241
  %v6243 = vlaneseq
  %v6244 = vshrl.u32 %v6243, 7
  %v6245 = vsub.s32 %v6242, %v6244
  %v6246 = vrot.slane %v6238, %v6245
  %v6248 = vunpack.c.l.s4 1983009808
  %v6249 = vunpack.c.0.s8 %v6248
  %v6250 = vlaneseq
  %v6251 = vshrl.u32 %v6250, 7
  %v6252 = vsub.s32 %v6249, %v6251
  %v6253 = vrot.slane %v6239, %v6252
  %v6254 = vcombine.low %v5393, %v5397
  %v6255 = vcombine.high %v5393, %v5397
  %v6257 = vunpack.c.l.s4 1983009808
  %v6258 = vunpack.c.0.s8 %v6257
  %v6259 = vlaneseq
  %v6260 = vshrl.u32 %v6259, 7
  %v6261 = vsub.s32 %v6258, %v6260
  %v6262 = vrot.slane %v6254, %v6261
  %v6264 = vunpack.c.l.s4 1983009808
  %v6265 = vunpack.c.0.s8 %v6264
  %v6266 = vlaneseq
  %v6267 = vshrl.u32 %v6266, 7
  %v6268 = vsub.s32 %v6265, %v6267
  %v6269 = vrot.slane %v6255, %v6268
  %v6270 = vcombine.low %v5399, %v5403
  %v6271 = vcombine.high %v5399, %v5403
  %v6273 = vunpack.c.l.s4 1983009808
  %v6274 = vunpack.c.0.s8 %v6273
  %v6275 = vlaneseq
  %v6276 = vshrl.u32 %v6275, 7
  %v6277 = vsub.s32 %v6274, %v6276
  %v6278 = vrot.slane %v6270, %v6277
  %v6280 = vunpack.c.l.s4 1983009808
  %v6281 = vunpack.c.0.s8 %v6280
  %v6282 = vlaneseq
  %v6283 = vshrl.u32 %v6282, 7
  %v6284 = vsub.s32 %v6281, %v6283
  %v6285 = vrot.slane %v6271, %v6284
  %v6286 = vcombine.low %v5401, %v5405
  %v6287 = vcombine.high %v5401, %v5405
  %v6289 = vunpack.c.l.s4 1983009808
  %v6290 = vunpack.c.0.s8 %v6289
  %v6291 = vlaneseq
  %v6292 = vshrl.u32 %v6291, 7
  %v6293 = vsub.s32 %v6290, %v6292
  %v6294 = vrot.slane %v6286, %v6293
  %v6296 = vunpack.c.l.s4 1983009808
  %v6297 = vunpack.c.0.s8 %v6296
  %v6298 = vlaneseq
  %v6299 = vshrl.u32 %v6298, 7
  %v6300 = vsub.s32 %v6297, %v6299
  %v6301 = vrot.slane %v6287, %v6300
  %v6302 = vcombine.low %v6246, %v6262
  %v6303 = vcombine.high %v6246, %v6262
  %v6305 = vunpack.c.l.s4 1934713408
  %v6306 = vunpack.c.0.s8 %v6305
  %v6307 = vlaneseq
  %v6308 = vshrl.u32 %v6307, 7
  %v6309 = vsub.s32 %v6306, %v6308
  %v6310 = vrot.slane %v6302, %v6309
  %v6312 = vunpack.c.l.s4 1934713408
  %v6313 = vunpack.c.0.s8 %v6312
  %v6314 = vlaneseq
  %v6315 = vshrl.u32 %v6314, 7
  %v6316 = vsub.s32 %v6313, %v6315
  %v6317 = vrot.slane %v6303, %v6316
  %v6318 = vcombine.low %v6253, %v6269
  %v6319 = vcombine.high %v6253, %v6269
  %v6321 = vunpack.c.l.s4 1934713408
  %v6322 = vunpack.c.0.s8 %v6321
  %v6323 = vlaneseq
  %v6324 = vshrl.u32 %v6323, 7
  %v6325 = vsub.s32 %v6322, %v6324
  %v6326 = vrot.slane %v6318, %v6325
  %v6328 = vunpack.c.l.s4 1934713408
  %v6329 = vunpack.c.0.s8 %v6328
  %v6330 = vlaneseq
  %v6331 = vshrl.u32 %v6330, 7
  %v6332 = vsub.s32 %v6329, %v6331
  %v6333 = vrot.slane %v6319, %v6332
  %v6334 = vcombine.low %v6278, %v6294
  %v6335 = vcombine.high %v6278, %v6294
  %v6337 = vunpack.c.l.s4 1934713408
  %v6338 = vunpack.c.0.s8 %v6337
  %v6339 = vlaneseq
  %v6340 = vshrl.u32 %v6339, 7
  %v6341 = vsub.s32 %v6338, %v6340
  %v6342 = vrot.slane %v6334, %v6341
  %v6344 = vunpack.c.l.s4 1934713408
  %v6345 = vunpack.c.0.s8 %v6344
  %v6346 = vlaneseq
  %v6347 = vshrl.u32 %v6346, 7
  %v6348 = vsub.s32 %v6345, %v6347
  %v6349 = vrot.slane %v6335, %v6348
  %v6350 = vcombine.low %v6285, %v6301
  %v6351 = vcombine.high %v6285, %v6301
  %v6353 = vunpack.c.l.s4 1934713408
  %v6354 = vunpack.c.0.s8 %v6353
  %v6355 = vlaneseq
  %v6356 = vshrl.u32 %v6355, 7
  %v6357 = vsub.s32 %v6354, %v6356
  %v6358 = vrot.slane %v6350, %v6357
  %v6360 = vunpack.c.l.s4 1934713408
  %v6361 = vunpack.c.0.s8 %v6360
  %v6362 = vlaneseq
  %v6363 = vshrl.u32 %v6362, 7
  %v6364 = vsub.s32 %v6361, %v6363
  %v6365 = vrot.slane %v6351, %v6364
  %v6366 = vcombine.low %v6310, %v6342
  %v6367 = vcombine.high %v6310, %v6342
  %v6368 = vcombine.low %v6317, %v6349
  %v6369 = vcombine.high %v6317, %v6349
  %v6370 = vcombine.low %v6326, %v6358
  %v6371 = vcombine.high %v6326, %v6358
  %v6372 = vcombine.low %v6333, %v6365
  %v6373 = vcombine.high %v6333, %v6365
  %v6374 = vcombine.low %v5407, %v5411
  %v6375 = vcombine.high %v5407, %v5411
  %v6377 = vunpack.c.l.s4 1983009808
  %v6378 = vunpack.c.0.s8 %v6377
  %v6379 = vlaneseq
  %v6380 = vshrl.u32 %v6379, 7
  %v6381 = vsub.s32 %v6378, %v6380
  %v6382 = vrot.slane %v6374, %v6381
  %v6384 = vunpack.c.l.s4 1983009808
  %v6385 = vunpack.c.0.s8 %v6384
  %v6386 = vlaneseq
  %v6387 = vshrl.u32 %v6386, 7
  %v6388 = vsub.s32 %v6385, %v6387
  %v6389 = vrot.slane %v6375, %v6388
  %v6390 = vcombine.low %v5409, %v5413
  %v6391 = vcombine.high %v5409, %v5413
  %v6393 = vunpack.c.l.s4 1983009808
  %v6394 = vunpack.c.0.s8 %v6393
  %v6395 = vlaneseq
  %v6396 = vshrl.u32 %v6395, 7
  %v6397 = vsub.s32 %v6394, %v6396
  %v6398 = vrot.slane %v6390, %v6397
  %v6400 = vunpack.c.l.s4 1983009808
  %v6401 = vunpack.c.0.s8 %v6400
  %v6402 = vlaneseq
  %v6403 = vshrl.u32 %v6402, 7
  %v6404 = vsub.s32 %v6401, %v6403
  %v6405 = vrot.slane %v6391, %v6404
  %v6406 = vcombine.low %v5415, %v5419
  %v6407 = vcombine.high %v5415, %v5419
  %v6409 = vunpack.c.l.s4 1983009808
  %v6410 = vunpack.c.0.s8 %v6409
  %v6411 = vlaneseq
  %v6412 = vshrl.u32 %v6411, 7
  %v6413 = vsub.s32 %v6410, %v6412
  %v6414 = vrot.slane %v6406, %v6413
  %v6416 = vunpack.c.l.s4 1983009808
  %v6417 = vunpack.c.0.s8 %v6416
  %v6418 = vlaneseq
  %v6419 = vshrl.u32 %v6418, 7
  %v6420 = vsub.s32 %v6417, %v6419
  %v6421 = vrot.slane %v6407, %v6420
  %v6422 = vcombine.low %v5417, %v5421
  %v6423 = vcombine.high %v5417, %v5421
  %v6425 = vunpack.c.l.s4 1983009808
  %v6426 = vunpack.c.0.s8 %v6425
  %v6427 = vlaneseq
  %v6428 = vshrl.u32 %v6427, 7
  %v6429 = vsub.s32 %v6426, %v6428
  %v6430 = vrot.slane %v6422, %v6429
  %v6432 = vunpack.c.l.s4 1983009808
  %v6433 = vunpack.c.0.s8 %v6432
  %v6434 = vlaneseq
  %v6435 = vshrl.u32 %v6434, 7
  %v6436 = vsub.s32 %v6433, %v6435
  %v6437 = vrot.slane %v6423, %v6436
  %v6438 = vcombine.low %v6382, %v6398
  %v6439 = vcombine.high %v6382, %v6398
  %v6441 = vunpack.c.l.s4 1934713408
  %v6442 = vunpack.c.0.s8 %v6441
  %v6443 = vlaneseq
  %v6444 = vshrl.u32 %v6443, 7
  %v6445 = vsub.s32 %v6442, %v6444
  %v6446 = vrot.slane %v6438, %v6445
  %v6448 = vunpack.c.l.s4 1934713408
  %v6449 = vunpack.c.0.s8 %v6448
  %v6450 = vlaneseq
  %v6451 = vshrl.u32 %v6450, 7
  %v6452 = vsub.s32 %v6449, %v6451
  %v6453 = vrot.slane %v6439, %v6452
  %v6454 = vcombine.low %v6389, %v6405
  %v6455 = vcombine.high %v6389, %v6405
  %v6457 = vunpack.c.l.s4 1934713408
  %v6458 = vunpack.c.0.s8 %v6457
  %v6459 = vlaneseq
  %v6460 = vshrl.u32 %v6459, 7
  %v6461 = vsub.s32 %v6458, %v6460
  %v6462 = vrot.slane %v6454, %v6461
  %v6464 = vunpack.c.l.s4 1934713408
  %v6465 = vunpack.c.0.s8 %v6464
  %v6466 = vlaneseq
  %v6467 = vshrl.u32 %v6466, 7
  %v6468 = vsub.s32 %v6465, %v6467
  %v6469 = vrot.slane %v6455, %v6468
  %v6470 = vcombine.low %v6414, %v6430
  %v6471 = vcombine.high %v6414, %v6430
  %v6473 = vunpack.c.l.s4 1934713408
  %v6474 = vunpack.c.0.s8 %v6473
  %v6475 = vlaneseq
  %v6476 = vshrl.u32 %v6475, 7
  %v6477 = vsub.s32 %v6474, %v6476
  %v6478 = vrot.slane %v6470, %v6477
  %v6480 = vunpack.c.l.s4 1934713408
  %v6481 = vunpack.c.0.s8 %v6480
  %v6482 = vlaneseq
  %v6483 = vshrl.u32 %v6482, 7
  %v6484 = vsub.s32 %v6481, %v6483
  %v6485 = vrot.slane %v6471, %v6484
  %v6486 = vcombine.low %v6421, %v6437
  %v6487 = vcombine.high %v6421, %v6437
  %v6489 = vunpack.c.l.s4 1934713408
  %v6490 = vunpack.c.0.s8 %v6489
  %v6491 = vlaneseq
  %v6492 = vshrl.u32 %v6491, 7
  %v6493 = vsub.s32 %v6490, %v6492
  %v6494 = vrot.slane %v6486, %v6493
  %v6496 = vunpack.c.l.s4 1934713408
  %v6497 = vunpack.c.0.s8 %v6496
  %v6498 = vlaneseq
  %v6499 = vshrl.u32 %v6498, 7
  %v6500 = vsub.s32 %v6497, %v6499
  %v6501 = vrot.slane %v6487, %v6500
  %v6502 = vcombine.low %v6446, %v6478
  %v6503 = vcombine.high %v6446, %v6478
  %v6504 = vcombine.low %v6453, %v6485
  %v6505 = vcombine.high %v6453, %v6485
  %v6506 = vcombine.low %v6462, %v6494
  %v6507 = vcombine.high %v6462, %v6494
  %v6508 = vcombine.low %v6469, %v6501
  %v6509 = vcombine.high %v6469, %v6501
  %6514 = vrot.lane.b32.xlu0 %v5551, 16
  %v6515 = vpop.permute.xlu0 %6514
  %6516 = vrot.lane.b32.xlu0 %v5687, 16
  %v6517 = vpop.permute.xlu0 %6516
  %6518 = vrot.lane.b32.xlu0 %v6095, 16
  %v6519 = vpop.permute.xlu0 %6518
  %6520 = vrot.lane.b32.xlu0 %v6231, 16
  %v6521 = vpop.permute.xlu0 %6520
  %6530 = vrot.lane.b32.xlu0 %v5552, 32
  %v6531 = vpop.permute.xlu0 %6530
  %6532 = vrot.lane.b32.xlu0 %v5688, 32
  %v6533 = vpop.permute.xlu0 %6532
  %6534 = vrot.lane.b32.xlu0 %v6096, 32
  %v6535 = vpop.permute.xlu0 %6534
  %6536 = vrot.lane.b32.xlu0 %v6232, 32
  %v6537 = vpop.permute.xlu0 %6536
  %6546 = vrot.lane.b32.xlu0 %v5553, 48
  %v6547 = vpop.permute.xlu0 %6546
  %6548 = vrot.lane.b32.xlu0 %v5689, 48
  %v6549 = vpop.permute.xlu0 %6548
  %6550 = vrot.lane.b32.xlu0 %v6097, 48
  %v6551 = vpop.permute.xlu0 %6550
  %6552 = vrot.lane.b32.xlu0 %v6233, 48
  %v6553 = vpop.permute.xlu0 %6552
  %6562 = vrot.lane.b32.xlu0 %v5554, 64
  %v6563 = vpop.permute.xlu0 %6562
  %6564 = vrot.lane.b32.xlu0 %v5690, 64
  %v6565 = vpop.permute.xlu0 %6564
  %6566 = vrot.lane.b32.xlu0 %v6098, 64
  %v6567 = vpop.permute.xlu0 %6566
  %6568 = vrot.lane.b32.xlu0 %v6234, 64
  %v6569 = vpop.permute.xlu0 %6568
  %6578 = vrot.lane.b32.xlu0 %v5555, 80
  %v6579 = vpop.permute.xlu0 %6578
  %6580 = vrot.lane.b32.xlu0 %v5691, 80
  %v6581 = vpop.permute.xlu0 %6580
  %6582 = vrot.lane.b32.xlu0 %v6099, 80
  %v6583 = vpop.permute.xlu0 %6582
  %6584 = vrot.lane.b32.xlu0 %v6235, 80
  %v6585 = vpop.permute.xlu0 %6584
  %6594 = vrot.lane.b32.xlu0 %v5556, 96
  %v6595 = vpop.permute.xlu0 %6594
  %6596 = vrot.lane.b32.xlu0 %v5692, 96
  %v6597 = vpop.permute.xlu0 %6596
  %6598 = vrot.lane.b32.xlu0 %v6100, 96
  %v6599 = vpop.permute.xlu0 %6598
  %6600 = vrot.lane.b32.xlu0 %v6236, 96
  %v6601 = vpop.permute.xlu0 %6600
  %6610 = vrot.lane.b32.xlu0 %v5557, 112
  %v6611 = vpop.permute.xlu0 %6610
  %6612 = vrot.lane.b32.xlu0 %v5693, 112
  %v6613 = vpop.permute.xlu0 %6612
  %6614 = vrot.lane.b32.xlu0 %v6101, 112
  %v6615 = vpop.permute.xlu0 %6614
  %6616 = vrot.lane.b32.xlu0 %v6237, 112
  %v6617 = vpop.permute.xlu0 %6616
  %6626 = vrot.lane.b32.xlu0 %v5823, 16
  %v6627 = vpop.permute.xlu0 %6626
  %6628 = vrot.lane.b32.xlu0 %v5959, 16
  %v6629 = vpop.permute.xlu0 %6628
  %6630 = vrot.lane.b32.xlu0 %v6367, 16
  %v6631 = vpop.permute.xlu0 %6630
  %6632 = vrot.lane.b32.xlu0 %v6503, 16
  %v6633 = vpop.permute.xlu0 %6632
  %6642 = vrot.lane.b32.xlu0 %v5824, 32
  %v6643 = vpop.permute.xlu0 %6642
  %6644 = vrot.lane.b32.xlu0 %v5960, 32
  %v6645 = vpop.permute.xlu0 %6644
  %6646 = vrot.lane.b32.xlu0 %v6368, 32
  %v6647 = vpop.permute.xlu0 %6646
  %6648 = vrot.lane.b32.xlu0 %v6504, 32
  %v6649 = vpop.permute.xlu0 %6648
  %6658 = vrot.lane.b32.xlu0 %v5825, 48
  %v6659 = vpop.permute.xlu0 %6658
  %6660 = vrot.lane.b32.xlu0 %v5961, 48
  %v6661 = vpop.permute.xlu0 %6660
  %6662 = vrot.lane.b32.xlu0 %v6369, 48
  %v6663 = vpop.permute.xlu0 %6662
  %6664 = vrot.lane.b32.xlu0 %v6505, 48
  %v6665 = vpop.permute.xlu0 %6664
  %6674 = vrot.lane.b32.xlu0 %v5826, 64
  %v6675 = vpop.permute.xlu0 %6674
  %6676 = vrot.lane.b32.xlu0 %v5962, 64
  %v6677 = vpop.permute.xlu0 %6676
  %6678 = vrot.lane.b32.xlu0 %v6370, 64
  %v6679 = vpop.permute.xlu0 %6678
  %6680 = vrot.lane.b32.xlu0 %v6506, 64
  %v6681 = vpop.permute.xlu0 %6680
  %6690 = vrot.lane.b32.xlu0 %v5827, 80
  %v6691 = vpop.permute.xlu0 %6690
  %6692 = vrot.lane.b32.xlu0 %v5963, 80
  %v6693 = vpop.permute.xlu0 %6692
  %6694 = vrot.lane.b32.xlu0 %v6371, 80
  %v6695 = vpop.permute.xlu0 %6694
  %6696 = vrot.lane.b32.xlu0 %v6507, 80
  %v6697 = vpop.permute.xlu0 %6696
  %6706 = vrot.lane.b32.xlu0 %v5828, 96
  %v6707 = vpop.permute.xlu0 %6706
  %6708 = vrot.lane.b32.xlu0 %v5964, 96
  %v6709 = vpop.permute.xlu0 %6708
  %6710 = vrot.lane.b32.xlu0 %v6372, 96
  %v6711 = vpop.permute.xlu0 %6710
  %6712 = vrot.lane.b32.xlu0 %v6508, 96
  %v6713 = vpop.permute.xlu0 %6712
  %6722 = vrot.lane.b32.xlu0 %v5829, 112
  %v6723 = vpop.permute.xlu0 %6722
  %6724 = vrot.lane.b32.xlu0 %v5965, 112
  %v6725 = vpop.permute.xlu0 %6724
  %6726 = vrot.lane.b32.xlu0 %v6373, 112
  %v6727 = vpop.permute.xlu0 %6726
  %6728 = vrot.lane.b32.xlu0 %v6509, 112
  %v6729 = vpop.permute.xlu0 %6728
  %v6734 = vsel %vm1716, %v5550, %v6515
  %v6735 = vsel %vm1716, %v5686, %v6517
  %v6736 = vsel %vm1716, %v6094, %v6519
  %v6737 = vsel %vm1716, %v6230, %v6521
  %v6738 = vsel %vm1862, %v6734, %v6531
  %v6739 = vsel %vm1862, %v6735, %v6533
  %v6740 = vsel %vm1862, %v6736, %v6535
  %v6741 = vsel %vm1862, %v6737, %v6537
  %v6742 = vsel %vm2008, %v6738, %v6547
  %v6743 = vsel %vm2008, %v6739, %v6549
  %v6744 = vsel %vm2008, %v6740, %v6551
  %v6745 = vsel %vm2008, %v6741, %v6553
  %v6746 = vsel %vm2154, %v6742, %v6563
  %v6747 = vsel %vm2154, %v6743, %v6565
  %v6748 = vsel %vm2154, %v6744, %v6567
  %v6749 = vsel %vm2154, %v6745, %v6569
  %vm6750 = vcmask 654336
  %v6751 = vsel %vm6750, %v6746, %v6579
  %v6752 = vsel %vm6750, %v6747, %v6581
  %v6753 = vsel %vm6750, %v6748, %v6583
  %v6754 = vsel %vm6750, %v6749, %v6585
  %vm6755 = vcmask 785408
  %v6756 = vsel %vm6755, %v6751, %v6595
  %v6757 = vsel %vm6755, %v6752, %v6597
  %v6758 = vsel %vm6755, %v6753, %v6599
  %v6759 = vsel %vm6755, %v6754, %v6601
  %vm6760 = vcmask 916480
  %v6761 = vsel %vm6760, %v6756, %v6611
  %v6762 = vsel %vm6760, %v6757, %v6613
  %v6763 = vsel %vm6760, %v6758, %v6615
  %v6764 = vsel %vm6760, %v6759, %v6617
  %v6765 = vsel %vm1716, %v5822, %v6627
  %v6766 = vsel %vm1716, %v5958, %v6629
  %v6767 = vsel %vm1716, %v6366, %v6631
  %v6768 = vsel %vm1716, %v6502, %v6633
  %v6769 = vsel %vm1862, %v6765, %v6643
  %v6770 = vsel %vm1862, %v6766, %v6645
  %v6771 = vsel %vm1862, %v6767, %v6647
  %v6772 = vsel %vm1862, %v6768, %v6649
  %v6773 = vsel %vm2008, %v6769, %v6659
  %v6774 = vsel %vm2008, %v6770, %v6661
  %v6775 = vsel %vm2008, %v6771, %v6663
  %v6776 = vsel %vm2008, %v6772, %v6665
  %v6777 = vsel %vm2154, %v6773, %v6675
  %v6778 = vsel %vm2154, %v6774, %v6677
  %v6779 = vsel %vm2154, %v6775, %v6679
  %v6780 = vsel %vm2154, %v6776, %v6681
  %v6781 = vsel %vm6750, %v6777, %v6691
  %v6782 = vsel %vm6750, %v6778, %v6693
  %v6783 = vsel %vm6750, %v6779, %v6695
  %v6784 = vsel %vm6750, %v6780, %v6697
  %v6785 = vsel %vm6755, %v6781, %v6707
  %v6786 = vsel %vm6755, %v6782, %v6709
  %v6787 = vsel %vm6755, %v6783, %v6711
  %v6788 = vsel %vm6755, %v6784, %v6713
  %v6789 = vsel %vm6760, %v6785, %v6723
  %v6790 = vsel %vm6760, %v6786, %v6725
  %v6791 = vsel %vm6760, %v6787, %v6727
  %v6792 = vsel %vm6760, %v6788, %v6729
  %v6793 = vpack.c.bf16 %v6762, %v6761
  %v6794 = vpack.c.bf16 %v6790, %v6789
  %v6795 = vpack.c.bf16 %v6764, %v6763
  %v6796 = vpack.c.bf16 %v6792, %v6791
  %v6801 = vunpack.c.l.b16 %v6793
  %v6802 = vunpack.c.l.b16 %v6794
  %v6803 = vunpack.c.h.b16 %v6793
  %v6804 = vunpack.c.h.b16 %v6794
  %v6805 = vunpack.c.l.b16 %v6795
  %v6806 = vunpack.c.l.b16 %v6796
  %v6807 = vunpack.c.h.b16 %v6795
  %v6808 = vunpack.c.h.b16 %v6796
  %v6809 = vpack.c.b16 %v6802, %v6801
  %v6810 = vpack.c.b16 %v6804, %v6803
  %v6811 = vpack.c.b16 %v6806, %v6805
  %v6812 = vpack.c.b16 %v6808, %v6807
  %6817 = vst [vmem:[%s5] sm:$0xff] %v6809
  %6818 = vst [vmem:[%s5 + $0x8] sm:$0xff] %v6810
  %6819 = vst [vmem:[%s5 + $0x10] sm:$0xff] %v6811
  %6820 = vst [vmem:[%s5 + $0x18] sm:$0xff] %v6812
  // Predicated region
  $region22: #{residual_block_concat.1} parent=0 // pred_check
    _
  $region23: #{residual_block_concat.1} parent=0 // pred_check_branch
    %6822 = sbr.rel (0) target = $region25
  $region24: #{residual_block_concat.1} parent=0 // pred_region
    _
  $region25: #{residual_block_concat.1} parent=0 // pred_fallthru
    _
  // Predicated region
  $region26: #{residual_block_concat.1} parent=0 // pred_check
    _
  $region27: #{residual_block_concat.1} parent=0 // pred_check_branch
    %6824 = sbr.rel (0) target = $region29
  $region28: #{residual_block_concat.1} parent=0 // pred_region
    _
  $region29: #{residual_block_concat.1} parent=0 // pred_fallthru
    _

</llo_original>
